<compile_context>
chip_gen: v7x
topology: tpu7x:2x2x1
jax: 0.10.0
libtpu: 0.0.40
codegen_flags: <defaults>
</compile_context>

<pallas_src>
import jax
import jax.numpy as jnp
import numpy as np
from jax.experimental import pallas as pl
from jax.experimental.pallas import tpu as pltpu


def _swish(v, alpha, beta):
    z = beta * v
    return alpha * z * (1.0 / (1.0 + jnp.exp(-z)))


def _local_interaction_kernel(
        x_ref, rbf_ref, ang_ref, idx_i_ref, idx_j_ref,
        w01_ref, b01_ref, a4_ref, be4_ref, w2f_ref, b2f_ref,
        wr9_ref, wproj_ref, wfin_ref, bfin_ref, afin_ref, befin_ref,
        out_ref, xx_sc, x9_sc, scat_sc):
    f32 = jnp.float32
    bf16 = jnp.bfloat16
    step = pl.program_id(0)
    last = pl.num_programs(0) - 1
    n_atoms, nf = x_ref.shape

    # ---- step 0: fused 4-branch ResidualMLP; last layer emits the replicated
    #      [xx | xp,xp,xp | xd x5 | xs] layout directly (no per-step slicing).
    @pl.when(step == 0)
    def _init():
        x = x_ref[...]                                            # [N, F]
        x4 = jnp.concatenate([x, x, x, x], axis=-1)               # [N, 4F] (x,s,p,d)
        y = _swish(x4, a4_ref[0], be4_ref[0])
        y = jnp.dot(y, w01_ref[0], preferred_element_type=f32) + b01_ref[0]
        y = _swish(y, a4_ref[1], be4_ref[1])
        y = jnp.dot(y, w01_ref[1], preferred_element_type=f32) + b01_ref[1]
        v = x4 + y
        y = _swish(v, a4_ref[2], be4_ref[2])
        out10 = jnp.dot(y, w2f_ref[...], preferred_element_type=f32) + b2f_ref[...]
        xx_sc[...] = out10[:, :nf]                                # [N, F] f32
        x9_sc[...] = out10[:, nf:].astype(bf16)                   # [N, 9F] bf16 gather source
        scat_sc[...] = jnp.zeros_like(scat_sc)

    # ---- every step: one pair tile -> bf16 gather dot + bf16 scatter dot ----
    tp = rbf_ref.shape[0]
    oh_j = (jax.lax.broadcasted_iota(jnp.int32, (tp, n_atoms), 1)
            == idx_j_ref[...]).astype(bf16)                       # [TP, N] (exact in bf16)
    oh_it = (jax.lax.broadcasted_iota(jnp.int32, (n_atoms, tp), 0)
             == idx_i_ref[...]).astype(bf16)                      # [N, TP]

    cat9 = jnp.dot(oh_j, x9_sc[...], preferred_element_type=f32)  # [TP, 9F] gathered j-features
    g9 = jnp.dot(rbf_ref[...], wr9_ref[...], preferred_element_type=f32)   # [TP, 9F] radial
    msg = (g9 * ang_ref[...] * cat9).astype(bf16)                 # [TP, 9F], no slices/concat

    # single fused scatter-add over idx_i, f32 accumulation
    scat_sc[...] += jnp.dot(oh_it, msg, preferred_element_type=f32)

    # ---- last step: per-component projections, channel sums, final MLP ----
    @pl.when(step == last)
    def _finalize():
        scat = scat_sc[...]                                       # [N, 9F] = [p x3 | d x5 | s]
        contrib = xx_sc[...] + scat[:, 8 * nf:]                   # s = xx + scattered s-messages
        wpa, wpb, wda, wdb = (wproj_ref[0], wproj_ref[1],
                              wproj_ref[2], wproj_ref[3])
        for c in range(3):                                        # (pa*pb).sum(-2)
            pc = scat[:, c * nf:(c + 1) * nf]
            contrib += (jnp.dot(pc, wpa, preferred_element_type=f32)
                        * jnp.dot(pc, wpb, preferred_element_type=f32))
        for c in range(5):                                        # (da*db).sum(-2)
            dc = scat[:, (3 + c) * nf:(4 + c) * nf]
            contrib += (jnp.dot(dc, wda, preferred_element_type=f32)
                        * jnp.dot(dc, wdb, preferred_element_type=f32))

        y = _swish(contrib, afin_ref[0], befin_ref[0])
        y = jnp.dot(y, wfin_ref[0], preferred_element_type=f32) + bfin_ref[0]
        y = _swish(y, afin_ref[1], befin_ref[1])
        y = jnp.dot(y, wfin_ref[1], preferred_element_type=f32) + bfin_ref[1]
        v = contrib + y
        y = _swish(v, afin_ref[2], befin_ref[2])
        out_ref[...] = jnp.dot(y, wfin_ref[2], preferred_element_type=f32) + bfin_ref[2]


def _prepare_params(params):
    """Fuse/stack weights once in the wrapper (block-diag branch MLP etc.)."""
    wres, bres = params["wres"], params["bres"]        # [5,3,F,F], [5,3,1,F]
    alpha, beta = params["alpha"], params["beta"]      # [5,3,1,F]
    wr, wproj = params["wr"], params["wproj"]          # [3,B,F], [2,F,2F]
    nf = wres.shape[-1]
    bd = jax.scipy.linalg.block_diag

    # Fused branch MLP layers 0,1 (branch lane order: x, s, p, d).
    w01 = jnp.stack([bd(*[wres[m, l] for m in range(4)]) for l in range(2)])          # [2,4F,4F]
    b01 = jnp.stack([jnp.concatenate([bres[m, l] for m in range(4)], -1) for l in range(2)])
    a4 = jnp.stack([jnp.concatenate([alpha[m, l] for m in range(4)], -1) for l in range(3)])
    be4 = jnp.stack([jnp.concatenate([beta[m, l] for m in range(4)], -1) for l in range(3)])

    # Layer-2 weight fused with the 9F replication: output layout
    # [xx | xp,xp,xp | xd x5 | xs]  -> [4F, 10F].
    z = jnp.zeros((nf, nf), jnp.float32)
    wx, ws, wp, wd = wres[0, 2], wres[1, 2], wres[2, 2], wres[3, 2]
    row_x = jnp.concatenate([wx] + [z] * 9, axis=-1)
    row_s = jnp.concatenate([z] * 9 + [ws], axis=-1)
    row_p = jnp.concatenate([z, wp, wp, wp] + [z] * 6, axis=-1)
    row_d = jnp.concatenate([z] * 4 + [wd] * 5 + [z], axis=-1)
    w2f = jnp.concatenate([row_x, row_s, row_p, row_d], axis=0)                        # [4F,10F]
    bx, bs, bp, bd_ = bres[0, 2], bres[1, 2], bres[2, 2], bres[3, 2]
    b2f = jnp.concatenate([bx, bp, bp, bp, bd_, bd_, bd_, bd_, bd_, bs], axis=-1)      # [1,10F]

    # Radial weights replicated to the 9F component layout [p x3 | d x5 | s].
    wr9 = jnp.concatenate([wr[1]] * 3 + [wr[2]] * 5 + [wr[0]], axis=-1)                # [B,9F]

    # Projection weights, A/B halves pre-split: (wpa, wpb, wda, wdb) -> [4,F,F]
    wproj4 = jnp.stack([wproj[0, :, :nf], wproj[0, :, nf:],
                        wproj[1, :, :nf], wproj[1, :, nf:]])

    return (w01, b01, a4, be4, w2f, b2f, wr9, wproj4,
            wres[4], bres[4], alpha[4], beta[4])


def local_interaction(x, rbf, pij, dij, idx_i, idx_j, params, *, pair_block=256):
    n_atoms, nf = x.shape
    n_pairs, n_basis = rbf.shape

    w_prep = _prepare_params(params)

    # Pre-broadcast angular factors to the lane-wide 9F layout:
    # [pij components repeated F | dij components repeated F | ones].
    ang9 = jnp.concatenate(
        [jnp.repeat(pij.astype(jnp.float32), nf, axis=-1),
         jnp.repeat(dij.astype(jnp.float32), nf, axis=-1),
         jnp.ones((n_pairs, nf), jnp.float32)], axis=-1)            # [P, 9F]

    # Pair tiling; pad with zero pairs (rbf pad rows are 0 -> messages vanish).
    if n_pairs > pair_block:
        assert pair_block % 128 == 0, "pair_block must be a multiple of 128"
        tp = pair_block
    else:
        tp = max(n_pairs, 1)
    p_pad = -(-n_pairs // tp) * tp
    pad = p_pad - n_pairs
    rbf = rbf.astype(jnp.float32)
    if pad:
        rbf = jnp.pad(rbf, ((0, pad), (0, 0)))
        ang9 = jnp.pad(ang9, ((0, pad), (0, 0)))
        idx_i = jnp.pad(idx_i, (0, pad))
        idx_j = jnp.pad(idx_j, (0, pad))
    num_blocks = p_pad // tp

    idx_i2 = idx_i.astype(jnp.int32).reshape(1, p_pad)   # row vector  -> [N,TP] one-hot
    idx_j2 = idx_j.astype(jnp.int32).reshape(p_pad, 1)   # col vector  -> [TP,N] one-hot

    inputs = (x.astype(jnp.float32), rbf, ang9, idx_i2, idx_j2) + w_prep

    def const_spec(shape):
        nd = len(shape)
        return pl.BlockSpec(shape, lambda i, _nd=nd: (0,) * _nd)

    in_specs = [
        const_spec(x.shape),                                  # atomic features (full)
        pl.BlockSpec((tp, n_basis), lambda i: (i, 0)),        # rbf pair tile
        pl.BlockSpec((tp, 9 * nf), lambda i: (i, 0)),         # pre-broadcast angular tile
        pl.BlockSpec((1, tp), lambda i: (0, i)),              # idx_i tile (lane-dense row)
        pl.BlockSpec((tp, 1), lambda i: (i, 0)),              # idx_j tile
    ] + [const_spec(tuple(w.shape)) for w in w_prep]          # fused weights (full)

    # Derive the VMEM budget from the actual scratch + (double) buffer shapes.
    scratch_bytes = (n_atoms * nf * 4                # xx (f32)
                     + n_atoms * 9 * nf * 2          # x9 gather source (bf16)
                     + n_atoms * 9 * nf * 4)         # scat accumulator (f32)
    pair_buf_bytes = 2 * (tp * n_basis + tp * 9 * nf + 2 * tp) * 4
    weight_bytes = 2 * sum(int(np.prod(w.shape)) for w in w_prep) * 4
    misc_bytes = 2 * (n_atoms * nf * 4) * 2          # x input + output buffers
    vmem_limit = int(1.3 * (scratch_bytes + pair_buf_bytes + weight_bytes + misc_bytes)) + (8 << 20)
    vmem_limit = max(32 << 20, min(vmem_limit, 100 << 20))
    # TODO(synk): cap nearer 48-56 MiB (and re-derive tiling) on v7x's 64 MiB VMEM.

    grid_spec = pltpu.PrefetchScalarGridSpec(
        num_scalar_prefetch=0,
        grid=(num_blocks,),
        in_specs=in_specs,
        out_specs=pl.BlockSpec((n_atoms, nf), lambda i: (0, 0)),
        scratch_shapes=[pltpu.VMEM((n_atoms, nf), jnp.float32),        # xx
                        pltpu.VMEM((n_atoms, 9 * nf), jnp.bfloat16),   # [xp x3|xd x5|xs]
                        pltpu.VMEM((n_atoms, 9 * nf), jnp.float32)],   # scattered messages
    )

    return pl.pallas_call(
        _local_interaction_kernel,
        out_shape=jax.ShapeDtypeStruct((n_atoms, nf), jnp.float32),
        grid_spec=grid_spec,
        compiler_params=pltpu.CompilerParams(
            dimension_semantics=("arbitrary",),     # pair axis is a reduction
            vmem_limit_bytes=vmem_limit),
    )(*inputs)


# ---------------- pure-JAX reference (for correctness check) ----------------
def reference(x, rbf, pij, dij, idx_i, idx_j, params):
    wr, wres, bres = params["wr"], params["wres"], params["bres"]
    alpha, beta, wproj = params["alpha"], params["beta"], params["wproj"]

    def residual_mlp(v, m):
        y = _swish(v, alpha[m, 0], beta[m, 0]) @ wres[m, 0] + bres[m, 0]
        y = _swish(y, alpha[m, 1], beta[m, 1]) @ wres[m, 1] + bres[m, 1]
        v = v + y
        return _swish(v, alpha[m, 2], beta[m, 2]) @ wres[m, 2] + bres[m, 2]

    n_atoms, nf = x.shape
    gs = rbf @ wr[0]
    gp = (rbf @ wr[1])[:, None, :] * pij[:, :, None]
    gd = (rbf @ wr[2])[:, None, :] * dij[:, :, None]
    xx = residual_mlp(x, 0)
    xs = residual_mlp(x, 1)[idx_j]
    xp = residual_mlp(x, 2)[idx_j]
    xd = residual_mlp(x, 3)[idx_j]
    s = xx.at[idx_i].add(gs * xs)
    p = jnp.zeros((n_atoms, 3, nf), jnp.float32).at[idx_i].add(gp * xp[:, None, :])
    d = jnp.zeros((n_atoms, 5, nf), jnp.float32).at[idx_i].add(gd * xd[:, None, :])
    pp = p @ wproj[0]
    dd = d @ wproj[1]
    pa, pb = pp[..., :nf], pp[..., nf:]
    da, db = dd[..., :nf], dd[..., nf:]
    return residual_mlp(s + (pa * pb).sum(-2) + (da * db).sum(-2), 4)


if __name__ == "__main__":
    F, B, N, P = 32, 16, 16, 200   # pair_block=128 below -> P pads to 256 -> 2 pair blocks
    key = jax.random.PRNGKey(0)
    keys = jax.random.split(key, 10)

    params = {
        "wr": jax.random.normal(keys[0], (3, B, F), jnp.float32) / np.sqrt(B),
        "wres": jax.random.normal(keys[1], (5, 3, F, F), jnp.float32) / np.sqrt(F),
        "bres": 0.01 * jax.random.normal(keys[2], (5, 3, 1, F), jnp.float32),
        "alpha": jnp.ones((5, 3, 1, F), jnp.float32),
        "beta": jnp.full((5, 3, 1, F), 1.702, jnp.float32),
        "wproj": jax.random.normal(keys[3], (2, F, 2 * F), jnp.float32) / np.sqrt(F),
    }
    # TODO(synk): original code uses orthogonal / zero_init for some linears;
    # deterministic random init is used here so the test output is non-trivial.

    x = jax.random.normal(keys[4], (N, F), jnp.float32)
    rbf = jax.random.normal(keys[5], (P, B), jnp.float32)
    pij = jax.random.normal(keys[6], (P, 3), jnp.float32)
    dij = jax.random.normal(keys[7], (P, 5), jnp.float32)
    idx_i = jax.random.randint(keys[8], (P,), 0, N, jnp.int32)
    idx_j = jax.random.randint(keys[9], (P,), 0, N, jnp.int32)

    out = jax.block_until_ready(
        local_interaction(x, rbf, pij, dij, idx_i, idx_j, params, pair_block=128))
    ref = reference(x, rbf, pij, dij, idx_i, idx_j, params)

    out_np, ref_np = np.asarray(out), np.asarray(ref)
    scale = float(np.max(np.abs(ref_np)))
    # bf16 MXU operands on the gather/scatter path -> compare at 2% of dynamic range.
    np.testing.assert_allclose(out_np, ref_np, rtol=2e-2, atol=2e-2 * scale)
    print("KERNEL_OK")
</pallas_src>

<mosaic_0001>
module attributes {stable_mosaic.version = 11 : i64} {
  func.func @_local_interaction_kernel(%arg0: i32, %arg1: memref<16x32xf32, #tpu.memory_space<vmem>>, %arg2: memref<128x16xf32, #tpu.memory_space<vmem>>, %arg3: memref<128x288xf32, #tpu.memory_space<vmem>>, %arg4: memref<1x128xi32, #tpu.memory_space<vmem>>, %arg5: memref<128x1xi32, #tpu.memory_space<vmem>>, %arg6: memref<2x128x128xf32, #tpu.memory_space<vmem>>, %arg7: memref<2x1x128xf32, #tpu.memory_space<vmem>>, %arg8: memref<3x1x128xf32, #tpu.memory_space<vmem>>, %arg9: memref<3x1x128xf32, #tpu.memory_space<vmem>>, %arg10: memref<128x320xf32, #tpu.memory_space<vmem>>, %arg11: memref<1x320xf32, #tpu.memory_space<vmem>>, %arg12: memref<16x288xf32, #tpu.memory_space<vmem>>, %arg13: memref<4x32x32xf32, #tpu.memory_space<vmem>>, %arg14: memref<3x32x32xf32, #tpu.memory_space<vmem>>, %arg15: memref<3x1x32xf32, #tpu.memory_space<vmem>>, %arg16: memref<3x1x32xf32, #tpu.memory_space<vmem>>, %arg17: memref<3x1x32xf32, #tpu.memory_space<vmem>>, %arg18: memref<16x32xf32, #tpu.memory_space<vmem>>, %arg19: memref<16x32xf32, #tpu.memory_space<vmem>>, %arg20: memref<16x288xbf16, #tpu.memory_space<vmem>>, %arg21: memref<16x288xf32, #tpu.memory_space<vmem>>) attributes {dimension_semantics = [#tpu.dimension_semantics<arbitrary>], iteration_bounds = array<i64: 2>, scalar_prefetch = 0 : i64, scratch_operands = 3 : i64, tpu.core_type = #tpu.core_type<tc>, window_params = [{pipeline_mode = #tpu.pipeline_mode<synchronous>, transform_indices = @transform_0, window_bounds = array<i64: 16, 32>}, {transform_indices = @transform_1, window_bounds = array<i64: 128, 16>}, {transform_indices = @transform_2, window_bounds = array<i64: 128, 288>}, {transform_indices = @transform_3, window_bounds = array<i64: 1, 128>}, {transform_indices = @transform_4, window_bounds = array<i64: 128, 1>}, {pipeline_mode = #tpu.pipeline_mode<synchronous>, transform_indices = @transform_5, window_bounds = array<i64: 2, 128, 128>}, {pipeline_mode = #tpu.pipeline_mode<synchronous>, transform_indices = @transform_6, window_bounds = array<i64: 2, 1, 128>}, {pipeline_mode = #tpu.pipeline_mode<synchronous>, transform_indices = @transform_7, window_bounds = array<i64: 3, 1, 128>}, {pipeline_mode = #tpu.pipeline_mode<synchronous>, transform_indices = @transform_8, window_bounds = array<i64: 3, 1, 128>}, {pipeline_mode = #tpu.pipeline_mode<synchronous>, transform_indices = @transform_9, window_bounds = array<i64: 128, 320>}, {pipeline_mode = #tpu.pipeline_mode<synchronous>, transform_indices = @transform_10, window_bounds = array<i64: 1, 320>}, {pipeline_mode = #tpu.pipeline_mode<synchronous>, transform_indices = @transform_11, window_bounds = array<i64: 16, 288>}, {pipeline_mode = #tpu.pipeline_mode<synchronous>, transform_indices = @transform_12, window_bounds = array<i64: 4, 32, 32>}, {pipeline_mode = #tpu.pipeline_mode<synchronous>, transform_indices = @transform_13, window_bounds = array<i64: 3, 32, 32>}, {pipeline_mode = #tpu.pipeline_mode<synchronous>, transform_indices = @transform_14, window_bounds = array<i64: 3, 1, 32>}, {pipeline_mode = #tpu.pipeline_mode<synchronous>, transform_indices = @transform_15, window_bounds = array<i64: 3, 1, 32>}, {pipeline_mode = #tpu.pipeline_mode<synchronous>, transform_indices = @transform_16, window_bounds = array<i64: 3, 1, 32>}, {pipeline_mode = #tpu.pipeline_mode<synchronous>, transform_indices = @transform_17, window_bounds = array<i64: 16, 32>}]} {
    %c0_i32 = arith.constant 0 : i32
    %0 = arith.cmpi eq, %arg0, %c0_i32 : i32
    %1 = arith.extui %0 : i1 to i32
    %c0_i32_0 = arith.constant 0 : i32
    %2 = arith.cmpi ne, %1, %c0_i32_0 : i32
    scf.if %2 {
      %c0_19 = arith.constant 0 : index
      %c0_20 = arith.constant 0 : index
      %33 = vector.load %arg1[%c0_19, %c0_20] : memref<16x32xf32, #tpu.memory_space<vmem>>, vector<16x32xf32>
      %34 = tpu.concatenate %33, %33, %33, %33 in 1 : vector<16x32xf32>, vector<16x32xf32>, vector<16x32xf32>, vector<16x32xf32> -> vector<16x128xf32>
      %c0_21 = arith.constant 0 : index
      %c0_22 = arith.constant 0 : index
      %c0_23 = arith.constant 0 : index
      %35 = vector.load %arg8[%c0_21, %c0_22, %c0_23] : memref<3x1x128xf32, #tpu.memory_space<vmem>>, vector<1x1x128xf32>
      %36 = vector.shape_cast %35 : vector<1x1x128xf32> to vector<1x128xf32>
      %c0_24 = arith.constant 0 : index
      %c0_25 = arith.constant 0 : index
      %c0_26 = arith.constant 0 : index
      %37 = vector.load %arg9[%c0_24, %c0_25, %c0_26] : memref<3x1x128xf32, #tpu.memory_space<vmem>>, vector<1x1x128xf32>
      %38 = vector.shape_cast %37 : vector<1x1x128xf32> to vector<1x128xf32>
      %39 = vector.broadcast %38 : vector<1x128xf32> to vector<16x128xf32>
      %40 = arith.mulf %39, %34 : vector<16x128xf32>
      %41 = vector.broadcast %36 : vector<1x128xf32> to vector<16x128xf32>
      %42 = arith.mulf %41, %40 : vector<16x128xf32>
      %cst_27 = arith.constant 0.000000e+00 : f32
      %43 = vector.broadcast %cst_27 : f32 to vector<16x128xf32>
      %44 = arith.subf %43, %40 : vector<16x128xf32>
      %45 = math.exp %44 : vector<16x128xf32>
      %cst_28 = arith.constant 1.000000e+00 : f32
      %46 = vector.broadcast %cst_28 : f32 to vector<16x128xf32>
      %47 = arith.addf %46, %45 : vector<16x128xf32>
      %cst_29 = arith.constant 1.000000e+00 : f32
      %48 = vector.broadcast %cst_29 : f32 to vector<16x128xf32>
      %49 = arith.divf %48, %47 : vector<16x128xf32>
      %50 = arith.mulf %42, %49 : vector<16x128xf32>
      %c0_30 = arith.constant 0 : index
      %c0_31 = arith.constant 0 : index
      %c0_32 = arith.constant 0 : index
      %51 = vector.load %arg6[%c0_30, %c0_31, %c0_32] : memref<2x128x128xf32, #tpu.memory_space<vmem>>, vector<1x128x128xf32>
      %52 = vector.shape_cast %51 : vector<1x128x128xf32> to vector<128x128xf32>
      %cst_33 = arith.constant dense<0.000000e+00> : vector<16x128xf32>
      %53 = tpu.matmul %50, %52, %cst_33 {dimension_numbers = #tpu.dot_dimension_numbers<[1], [0], [0], [1], [0, 0, 1, 1], [], []>} : vector<16x128xf32>, vector<128x128xf32>, vector<16x128xf32> -> vector<16x128xf32>
      %c0_34 = arith.constant 0 : index
      %c0_35 = arith.constant 0 : index
      %c0_36 = arith.constant 0 : index
      %54 = vector.load %arg7[%c0_34, %c0_35, %c0_36] : memref<2x1x128xf32, #tpu.memory_space<vmem>>, vector<1x1x128xf32>
      %55 = vector.shape_cast %54 : vector<1x1x128xf32> to vector<1x128xf32>
      %56 = vector.broadcast %55 : vector<1x128xf32> to vector<16x128xf32>
      %57 = arith.addf %53, %56 : vector<16x128xf32>
      %c1 = arith.constant 1 : index
      %c0_37 = arith.constant 0 : index
      %c0_38 = arith.constant 0 : index
      %58 = vector.load %arg8[%c1, %c0_37, %c0_38] : memref<3x1x128xf32, #tpu.memory_space<vmem>>, vector<1x1x128xf32>
      %59 = vector.shape_cast %58 : vector<1x1x128xf32> to vector<1x128xf32>
      %c1_39 = arith.constant 1 : index
      %c0_40 = arith.constant 0 : index
      %c0_41 = arith.constant 0 : index
      %60 = vector.load %arg9[%c1_39, %c0_40, %c0_41] : memref<3x1x128xf32, #tpu.memory_space<vmem>>, vector<1x1x128xf32>
      %61 = vector.shape_cast %60 : vector<1x1x128xf32> to vector<1x128xf32>
      %62 = vector.broadcast %61 : vector<1x128xf32> to vector<16x128xf32>
      %63 = arith.mulf %62, %57 : vector<16x128xf32>
      %64 = vector.broadcast %59 : vector<1x128xf32> to vector<16x128xf32>
      %65 = arith.mulf %64, %63 : vector<16x128xf32>
      %cst_42 = arith.constant 0.000000e+00 : f32
      %66 = vector.broadcast %cst_42 : f32 to vector<16x128xf32>
      %67 = arith.subf %66, %63 : vector<16x128xf32>
      %68 = math.exp %67 : vector<16x128xf32>
      %cst_43 = arith.constant 1.000000e+00 : f32
      %69 = vector.broadcast %cst_43 : f32 to vector<16x128xf32>
      %70 = arith.addf %69, %68 : vector<16x128xf32>
      %cst_44 = arith.constant 1.000000e+00 : f32
      %71 = vector.broadcast %cst_44 : f32 to vector<16x128xf32>
      %72 = arith.divf %71, %70 : vector<16x128xf32>
      %73 = arith.mulf %65, %72 : vector<16x128xf32>
      %c1_45 = arith.constant 1 : index
      %c0_46 = arith.constant 0 : index
      %c0_47 = arith.constant 0 : index
      %74 = vector.load %arg6[%c1_45, %c0_46, %c0_47] : memref<2x128x128xf32, #tpu.memory_space<vmem>>, vector<1x128x128xf32>
      %75 = vector.shape_cast %74 : vector<1x128x128xf32> to vector<128x128xf32>
      %cst_48 = arith.constant dense<0.000000e+00> : vector<16x128xf32>
      %76 = tpu.matmul %73, %75, %cst_48 {dimension_numbers = #tpu.dot_dimension_numbers<[1], [0], [0], [1], [0, 0, 1, 1], [], []>} : vector<16x128xf32>, vector<128x128xf32>, vector<16x128xf32> -> vector<16x128xf32>
      %c1_49 = arith.constant 1 : index
      %c0_50 = arith.constant 0 : index
      %c0_51 = arith.constant 0 : index
      %77 = vector.load %arg7[%c1_49, %c0_50, %c0_51] : memref<2x1x128xf32, #tpu.memory_space<vmem>>, vector<1x1x128xf32>
      %78 = vector.shape_cast %77 : vector<1x1x128xf32> to vector<1x128xf32>
      %79 = vector.broadcast %78 : vector<1x128xf32> to vector<16x128xf32>
      %80 = arith.addf %76, %79 : vector<16x128xf32>
      %81 = arith.addf %34, %80 : vector<16x128xf32>
      %c2 = arith.constant 2 : index
      %c0_52 = arith.constant 0 : index
      %c0_53 = arith.constant 0 : index
      %82 = vector.load %arg8[%c2, %c0_52, %c0_53] : memref<3x1x128xf32, #tpu.memory_space<vmem>>, vector<1x1x128xf32>
      %83 = vector.shape_cast %82 : vector<1x1x128xf32> to vector<1x128xf32>
      %c2_54 = arith.constant 2 : index
      %c0_55 = arith.constant 0 : index
      %c0_56 = arith.constant 0 : index
      %84 = vector.load %arg9[%c2_54, %c0_55, %c0_56] : memref<3x1x128xf32, #tpu.memory_space<vmem>>, vector<1x1x128xf32>
      %85 = vector.shape_cast %84 : vector<1x1x128xf32> to vector<1x128xf32>
      %86 = vector.broadcast %85 : vector<1x128xf32> to vector<16x128xf32>
      %87 = arith.mulf %86, %81 : vector<16x128xf32>
      %88 = vector.broadcast %83 : vector<1x128xf32> to vector<16x128xf32>
      %89 = arith.mulf %88, %87 : vector<16x128xf32>
      %cst_57 = arith.constant 0.000000e+00 : f32
      %90 = vector.broadcast %cst_57 : f32 to vector<16x128xf32>
      %91 = arith.subf %90, %87 : vector<16x128xf32>
      %92 = math.exp %91 : vector<16x128xf32>
      %cst_58 = arith.constant 1.000000e+00 : f32
      %93 = vector.broadcast %cst_58 : f32 to vector<16x128xf32>
      %94 = arith.addf %93, %92 : vector<16x128xf32>
      %cst_59 = arith.constant 1.000000e+00 : f32
      %95 = vector.broadcast %cst_59 : f32 to vector<16x128xf32>
      %96 = arith.divf %95, %94 : vector<16x128xf32>
      %97 = arith.mulf %89, %96 : vector<16x128xf32>
      %c0_60 = arith.constant 0 : index
      %c0_61 = arith.constant 0 : index
      %98 = vector.load %arg10[%c0_60, %c0_61] : memref<128x320xf32, #tpu.memory_space<vmem>>, vector<128x320xf32>
      %cst_62 = arith.constant dense<0.000000e+00> : vector<16x320xf32>
      %99 = tpu.matmul %97, %98, %cst_62 {dimension_numbers = #tpu.dot_dimension_numbers<[1], [0], [0], [1], [0, 0, 1, 1], [], []>} : vector<16x128xf32>, vector<128x320xf32>, vector<16x320xf32> -> vector<16x320xf32>
      %c0_63 = arith.constant 0 : index
      %c0_64 = arith.constant 0 : index
      %100 = vector.load %arg11[%c0_63, %c0_64] : memref<1x320xf32, #tpu.memory_space<vmem>>, vector<1x320xf32>
      %101 = vector.broadcast %100 : vector<1x320xf32> to vector<16x320xf32>
      %102 = arith.addf %99, %101 : vector<16x320xf32>
      %103 = vector.extract_strided_slice %102 {offsets = [0, 0], sizes = [16, 32], strides = [1, 1]} : vector<16x320xf32> to vector<16x32xf32>
      %c0_65 = arith.constant 0 : index
      %c0_66 = arith.constant 0 : index
      %104 = vector.load %arg19[%c0_65, %c0_66] : memref<16x32xf32, #tpu.memory_space<vmem>>, vector<16x32xf32>
      tpu.vector_store %arg19[%c0_65, %c0_66], %103 {strides = array<i32>} : memref<16x32xf32, #tpu.memory_space<vmem>>, vector<16x32xf32>,
      %105 = vector.extract_strided_slice %102 {offsets = [0, 32], sizes = [16, 288], strides = [1, 1]} : vector<16x320xf32> to vector<16x288xf32>
      %106 = arith.truncf %105 : vector<16x288xf32> to vector<16x288xbf16>
      %c0_67 = arith.constant 0 : index
      %c0_68 = arith.constant 0 : index
      %107 = vector.load %arg20[%c0_67, %c0_68] : memref<16x288xbf16, #tpu.memory_space<vmem>>, vector<16x288xbf16>
      tpu.vector_store %arg20[%c0_67, %c0_68], %106 {strides = array<i32>} : memref<16x288xbf16, #tpu.memory_space<vmem>>, vector<16x288xbf16>,
      %cst_69 = arith.constant 0.000000e+00 : f32
      %108 = vector.broadcast %cst_69 : f32 to vector<16x288xf32>
      %c0_70 = arith.constant 0 : index
      %c0_71 = arith.constant 0 : index
      %109 = vector.load %arg21[%c0_70, %c0_71] : memref<16x288xf32, #tpu.memory_space<vmem>>, vector<16x288xf32>
      tpu.vector_store %arg21[%c0_70, %c0_71], %108 {strides = array<i32>} : memref<16x288xf32, #tpu.memory_space<vmem>>, vector<16x288xf32>,
    } else {
    }
    %3 = tpu.iota {dimensions = array<i32: 1>} : vector<128x16xi32>
    %c0 = arith.constant 0 : index
    %c0_1 = arith.constant 0 : index
    %4 = vector.load %arg5[%c0, %c0_1] : memref<128x1xi32, #tpu.memory_space<vmem>>, vector<128x1xi32>
    %5 = vector.broadcast %4 : vector<128x1xi32> to vector<128x16xi32>
    %6 = arith.cmpi eq, %3, %5 : vector<128x16xi32>
    %7 = arith.extui %6 : vector<128x16xi1> to vector<128x16xi32>
    %8 = arith.sitofp %7 : vector<128x16xi32> to vector<128x16xf32>
    %9 = arith.truncf %8 : vector<128x16xf32> to vector<128x16xbf16>
    %10 = tpu.iota {dimensions = array<i32: 0>} : vector<16x128xi32>
    %c0_2 = arith.constant 0 : index
    %c0_3 = arith.constant 0 : index
    %11 = vector.load %arg4[%c0_2, %c0_3] : memref<1x128xi32, #tpu.memory_space<vmem>>, vector<1x128xi32>
    %12 = vector.broadcast %11 : vector<1x128xi32> to vector<16x128xi32>
    %13 = arith.cmpi eq, %10, %12 : vector<16x128xi32>
    %14 = arith.extui %13 : vector<16x128xi1> to vector<16x128xi32>
    %15 = arith.sitofp %14 : vector<16x128xi32> to vector<16x128xf32>
    %16 = arith.truncf %15 : vector<16x128xf32> to vector<16x128xbf16>
    %c0_4 = arith.constant 0 : index
    %c0_5 = arith.constant 0 : index
    %17 = vector.load %arg20[%c0_4, %c0_5] : memref<16x288xbf16, #tpu.memory_space<vmem>>, vector<16x288xbf16>
    %cst = arith.constant dense<0.000000e+00> : vector<128x288xf32>
    %18 = tpu.matmul %9, %17, %cst {dimension_numbers = #tpu.dot_dimension_numbers<[1], [0], [0], [1], [0, 0, 1, 1], [], []>} : vector<128x16xbf16>, vector<16x288xbf16>, vector<128x288xf32> -> vector<128x288xf32>
    %c0_6 = arith.constant 0 : index
    %c0_7 = arith.constant 0 : index
    %19 = vector.load %arg2[%c0_6, %c0_7] : memref<128x16xf32, #tpu.memory_space<vmem>>, vector<128x16xf32>
    %c0_8 = arith.constant 0 : index
    %c0_9 = arith.constant 0 : index
    %20 = vector.load %arg12[%c0_8, %c0_9] : memref<16x288xf32, #tpu.memory_space<vmem>>, vector<16x288xf32>
    %cst_10 = arith.constant dense<0.000000e+00> : vector<128x288xf32>
    %21 = tpu.matmul %19, %20, %cst_10 {dimension_numbers = #tpu.dot_dimension_numbers<[1], [0], [0], [1], [0, 0, 1, 1], [], []>} : vector<128x16xf32>, vector<16x288xf32>, vector<128x288xf32> -> vector<128x288xf32>
    %c0_11 = arith.constant 0 : index
    %c0_12 = arith.constant 0 : index
    %22 = vector.load %arg3[%c0_11, %c0_12] : memref<128x288xf32, #tpu.memory_space<vmem>>, vector<128x288xf32>
    %23 = arith.mulf %21, %22 : vector<128x288xf32>
    %24 = arith.mulf %23, %18 : vector<128x288xf32>
    %25 = arith.truncf %24 : vector<128x288xf32> to vector<128x288xbf16>
    %c0_13 = arith.constant 0 : index
    %c0_14 = arith.constant 0 : index
    %26 = vector.load %arg21[%c0_13, %c0_14] : memref<16x288xf32, #tpu.memory_space<vmem>>, vector<16x288xf32>
    %cst_15 = arith.constant dense<0.000000e+00> : vector<16x288xf32>
    %27 = tpu.matmul %16, %25, %cst_15 {dimension_numbers = #tpu.dot_dimension_numbers<[1], [0], [0], [1], [0, 0, 1, 1], [], []>} : vector<16x128xbf16>, vector<128x288xbf16>, vector<16x288xf32> -> vector<16x288xf32>
    %28 = arith.addf %26, %27 : vector<16x288xf32>
    %c0_16 = arith.constant 0 : index
    %c0_17 = arith.constant 0 : index
    %29 = vector.load %arg21[%c0_16, %c0_17] : memref<16x288xf32, #tpu.memory_space<vmem>>, vector<16x288xf32>
    tpu.vector_store %arg21[%c0_16, %c0_17], %28 {strides = array<i32>} : memref<16x288xf32, #tpu.memory_space<vmem>>, vector<16x288xf32>,
    %c1_i32 = arith.constant 1 : i32
    %30 = arith.cmpi eq, %arg0, %c1_i32 : i32
    %31 = arith.extui %30 : i1 to i32
    %c0_i32_18 = arith.constant 0 : i32
    %32 = arith.cmpi ne, %31, %c0_i32_18 : i32
    scf.if %32 {
      %c0_19 = arith.constant 0 : index
      %c0_20 = arith.constant 0 : index
      %33 = vector.load %arg21[%c0_19, %c0_20] : memref<16x288xf32, #tpu.memory_space<vmem>>, vector<16x288xf32>
      %c0_21 = arith.constant 0 : index
      %c0_22 = arith.constant 0 : index
      %34 = vector.load %arg19[%c0_21, %c0_22] : memref<16x32xf32, #tpu.memory_space<vmem>>, vector<16x32xf32>
      %35 = vector.extract_strided_slice %33 {offsets = [0, 256], sizes = [16, 32], strides = [1, 1]} : vector<16x288xf32> to vector<16x32xf32>
      %36 = arith.addf %34, %35 : vector<16x32xf32>
      %c0_23 = arith.constant 0 : index
      %c0_24 = arith.constant 0 : index
      %c0_25 = arith.constant 0 : index
      %37 = vector.load %arg13[%c0_23, %c0_24, %c0_25] : memref<4x32x32xf32, #tpu.memory_space<vmem>>, vector<1x32x32xf32>
      %38 = vector.shape_cast %37 : vector<1x32x32xf32> to vector<32x32xf32>
      %c1 = arith.constant 1 : index
      %c0_26 = arith.constant 0 : index
      %c0_27 = arith.constant 0 : index
      %39 = vector.load %arg13[%c1, %c0_26, %c0_27] : memref<4x32x32xf32, #tpu.memory_space<vmem>>, vector<1x32x32xf32>
      %40 = vector.shape_cast %39 : vector<1x32x32xf32> to vector<32x32xf32>
      %c2 = arith.constant 2 : index
      %c0_28 = arith.constant 0 : index
      %c0_29 = arith.constant 0 : index
      %41 = vector.load %arg13[%c2, %c0_28, %c0_29] : memref<4x32x32xf32, #tpu.memory_space<vmem>>, vector<1x32x32xf32>
      %42 = vector.shape_cast %41 : vector<1x32x32xf32> to vector<32x32xf32>
      %c3 = arith.constant 3 : index
      %c0_30 = arith.constant 0 : index
      %c0_31 = arith.constant 0 : index
      %43 = vector.load %arg13[%c3, %c0_30, %c0_31] : memref<4x32x32xf32, #tpu.memory_space<vmem>>, vector<1x32x32xf32>
      %44 = vector.shape_cast %43 : vector<1x32x32xf32> to vector<32x32xf32>
      %45 = vector.extract_strided_slice %33 {offsets = [0, 0], sizes = [16, 32], strides = [1, 1]} : vector<16x288xf32> to vector<16x32xf32>
      %cst_32 = arith.constant dense<0.000000e+00> : vector<16x32xf32>
      %46 = tpu.matmul %45, %38, %cst_32 {dimension_numbers = #tpu.dot_dimension_numbers<[1], [0], [0], [1], [0, 0, 1, 1], [], []>} : vector<16x32xf32>, vector<32x32xf32>, vector<16x32xf32> -> vector<16x32xf32>
      %cst_33 = arith.constant dense<0.000000e+00> : vector<16x32xf32>
      %47 = tpu.matmul %45, %40, %cst_33 {dimension_numbers = #tpu.dot_dimension_numbers<[1], [0], [0], [1], [0, 0, 1, 1], [], []>} : vector<16x32xf32>, vector<32x32xf32>, vector<16x32xf32> -> vector<16x32xf32>
      %48 = arith.mulf %46, %47 : vector<16x32xf32>
      %49 = arith.addf %36, %48 : vector<16x32xf32>
      %50 = vector.extract_strided_slice %33 {offsets = [0, 32], sizes = [16, 32], strides = [1, 1]} : vector<16x288xf32> to vector<16x32xf32>
      %cst_34 = arith.constant dense<0.000000e+00> : vector<16x32xf32>
      %51 = tpu.matmul %50, %38, %cst_34 {dimension_numbers = #tpu.dot_dimension_numbers<[1], [0], [0], [1], [0, 0, 1, 1], [], []>} : vector<16x32xf32>, vector<32x32xf32>, vector<16x32xf32> -> vector<16x32xf32>
      %cst_35 = arith.constant dense<0.000000e+00> : vector<16x32xf32>
      %52 = tpu.matmul %50, %40, %cst_35 {dimension_numbers = #tpu.dot_dimension_numbers<[1], [0], [0], [1], [0, 0, 1, 1], [], []>} : vector<16x32xf32>, vector<32x32xf32>, vector<16x32xf32> -> vector<16x32xf32>
      %53 = arith.mulf %51, %52 : vector<16x32xf32>
      %54 = arith.addf %49, %53 : vector<16x32xf32>
      %55 = vector.extract_strided_slice %33 {offsets = [0, 64], sizes = [16, 32], strides = [1, 1]} : vector<16x288xf32> to vector<16x32xf32>
      %cst_36 = arith.constant dense<0.000000e+00> : vector<16x32xf32>
      %56 = tpu.matmul %55, %38, %cst_36 {dimension_numbers = #tpu.dot_dimension_numbers<[1], [0], [0], [1], [0, 0, 1, 1], [], []>} : vector<16x32xf32>, vector<32x32xf32>, vector<16x32xf32> -> vector<16x32xf32>
      %cst_37 = arith.constant dense<0.000000e+00> : vector<16x32xf32>
      %57 = tpu.matmul %55, %40, %cst_37 {dimension_numbers = #tpu.dot_dimension_numbers<[1], [0], [0], [1], [0, 0, 1, 1], [], []>} : vector<16x32xf32>, vector<32x32xf32>, vector<16x32xf32> -> vector<16x32xf32>
      %58 = arith.mulf %56, %57 : vector<16x32xf32>
      %59 = arith.addf %54, %58 : vector<16x32xf32>
      %60 = vector.extract_strided_slice %33 {offsets = [0, 96], sizes = [16, 32], strides = [1, 1]} : vector<16x288xf32> to vector<16x32xf32>
      %cst_38 = arith.constant dense<0.000000e+00> : vector<16x32xf32>
      %61 = tpu.matmul %60, %42, %cst_38 {dimension_numbers = #tpu.dot_dimension_numbers<[1], [0], [0], [1], [0, 0, 1, 1], [], []>} : vector<16x32xf32>, vector<32x32xf32>, vector<16x32xf32> -> vector<16x32xf32>
      %cst_39 = arith.constant dense<0.000000e+00> : vector<16x32xf32>
      %62 = tpu.matmul %60, %44, %cst_39 {dimension_numbers = #tpu.dot_dimension_numbers<[1], [0], [0], [1], [0, 0, 1, 1], [], []>} : vector<16x32xf32>, vector<32x32xf32>, vector<16x32xf32> -> vector<16x32xf32>
      %63 = arith.mulf %61, %62 : vector<16x32xf32>
      %64 = arith.addf %59, %63 : vector<16x32xf32>
      %65 = vector.extract_strided_slice %33 {offsets = [0, 128], sizes = [16, 32], strides = [1, 1]} : vector<16x288xf32> to vector<16x32xf32>
      %cst_40 = arith.constant dense<0.000000e+00> : vector<16x32xf32>
      %66 = tpu.matmul %65, %42, %cst_40 {dimension_numbers = #tpu.dot_dimension_numbers<[1], [0], [0], [1], [0, 0, 1, 1], [], []>} : vector<16x32xf32>, vector<32x32xf32>, vector<16x32xf32> -> vector<16x32xf32>
      %cst_41 = arith.constant dense<0.000000e+00> : vector<16x32xf32>
      %67 = tpu.matmul %65, %44, %cst_41 {dimension_numbers = #tpu.dot_dimension_numbers<[1], [0], [0], [1], [0, 0, 1, 1], [], []>} : vector<16x32xf32>, vector<32x32xf32>, vector<16x32xf32> -> vector<16x32xf32>
      %68 = arith.mulf %66, %67 : vector<16x32xf32>
      %69 = arith.addf %64, %68 : vector<16x32xf32>
      %70 = vector.extract_strided_slice %33 {offsets = [0, 160], sizes = [16, 32], strides = [1, 1]} : vector<16x288xf32> to vector<16x32xf32>
      %cst_42 = arith.constant dense<0.000000e+00> : vector<16x32xf32>
      %71 = tpu.matmul %70, %42, %cst_42 {dimension_numbers = #tpu.dot_dimension_numbers<[1], [0], [0], [1], [0, 0, 1, 1], [], []>} : vector<16x32xf32>, vector<32x32xf32>, vector<16x32xf32> -> vector<16x32xf32>
      %cst_43 = arith.constant dense<0.000000e+00> : vector<16x32xf32>
      %72 = tpu.matmul %70, %44, %cst_43 {dimension_numbers = #tpu.dot_dimension_numbers<[1], [0], [0], [1], [0, 0, 1, 1], [], []>} : vector<16x32xf32>, vector<32x32xf32>, vector<16x32xf32> -> vector<16x32xf32>
      %73 = arith.mulf %71, %72 : vector<16x32xf32>
      %74 = arith.addf %69, %73 : vector<16x32xf32>
      %75 = vector.extract_strided_slice %33 {offsets = [0, 192], sizes = [16, 32], strides = [1, 1]} : vector<16x288xf32> to vector<16x32xf32>
      %cst_44 = arith.constant dense<0.000000e+00> : vector<16x32xf32>
      %76 = tpu.matmul %75, %42, %cst_44 {dimension_numbers = #tpu.dot_dimension_numbers<[1], [0], [0], [1], [0, 0, 1, 1], [], []>} : vector<16x32xf32>, vector<32x32xf32>, vector<16x32xf32> -> vector<16x32xf32>
      %cst_45 = arith.constant dense<0.000000e+00> : vector<16x32xf32>
      %77 = tpu.matmul %75, %44, %cst_45 {dimension_numbers = #tpu.dot_dimension_numbers<[1], [0], [0], [1], [0, 0, 1, 1], [], []>} : vector<16x32xf32>, vector<32x32xf32>, vector<16x32xf32> -> vector<16x32xf32>
      %78 = arith.mulf %76, %77 : vector<16x32xf32>
      %79 = arith.addf %74, %78 : vector<16x32xf32>
      %80 = vector.extract_strided_slice %33 {offsets = [0, 224], sizes = [16, 32], strides = [1, 1]} : vector<16x288xf32> to vector<16x32xf32>
      %cst_46 = arith.constant dense<0.000000e+00> : vector<16x32xf32>
      %81 = tpu.matmul %80, %42, %cst_46 {dimension_numbers = #tpu.dot_dimension_numbers<[1], [0], [0], [1], [0, 0, 1, 1], [], []>} : vector<16x32xf32>, vector<32x32xf32>, vector<16x32xf32> -> vector<16x32xf32>
      %cst_47 = arith.constant dense<0.000000e+00> : vector<16x32xf32>
      %82 = tpu.matmul %80, %44, %cst_47 {dimension_numbers = #tpu.dot_dimension_numbers<[1], [0], [0], [1], [0, 0, 1, 1], [], []>} : vector<16x32xf32>, vector<32x32xf32>, vector<16x32xf32> -> vector<16x32xf32>
      %83 = arith.mulf %81, %82 : vector<16x32xf32>
      %84 = arith.addf %79, %83 : vector<16x32xf32>
      %c0_48 = arith.constant 0 : index
      %c0_49 = arith.constant 0 : index
      %c0_50 = arith.constant 0 : index
      %85 = vector.load %arg16[%c0_48, %c0_49, %c0_50] : memref<3x1x32xf32, #tpu.memory_space<vmem>>, vector<1x1x32xf32>
      %86 = vector.shape_cast %85 : vector<1x1x32xf32> to vector<1x32xf32>
      %c0_51 = arith.constant 0 : index
      %c0_52 = arith.constant 0 : index
      %c0_53 = arith.constant 0 : index
      %87 = vector.load %arg17[%c0_51, %c0_52, %c0_53] : memref<3x1x32xf32, #tpu.memory_space<vmem>>, vector<1x1x32xf32>
      %88 = vector.shape_cast %87 : vector<1x1x32xf32> to vector<1x32xf32>
      %89 = vector.broadcast %88 : vector<1x32xf32> to vector<16x32xf32>
      %90 = arith.mulf %89, %84 : vector<16x32xf32>
      %91 = vector.broadcast %86 : vector<1x32xf32> to vector<16x32xf32>
      %92 = arith.mulf %91, %90 : vector<16x32xf32>
      %cst_54 = arith.constant 0.000000e+00 : f32
      %93 = vector.broadcast %cst_54 : f32 to vector<16x32xf32>
      %94 = arith.subf %93, %90 : vector<16x32xf32>
      %95 = math.exp %94 : vector<16x32xf32>
      %cst_55 = arith.constant 1.000000e+00 : f32
      %96 = vector.broadcast %cst_55 : f32 to vector<16x32xf32>
      %97 = arith.addf %96, %95 : vector<16x32xf32>
      %cst_56 = arith.constant 1.000000e+00 : f32
      %98 = vector.broadcast %cst_56 : f32 to vector<16x32xf32>
      %99 = arith.divf %98, %97 : vector<16x32xf32>
      %100 = arith.mulf %92, %99 : vector<16x32xf32>
      %c0_57 = arith.constant 0 : index
      %c0_58 = arith.constant 0 : index
      %c0_59 = arith.constant 0 : index
      %101 = vector.load %arg14[%c0_57, %c0_58, %c0_59] : memref<3x32x32xf32, #tpu.memory_space<vmem>>, vector<1x32x32xf32>
      %102 = vector.shape_cast %101 : vector<1x32x32xf32> to vector<32x32xf32>
      %cst_60 = arith.constant dense<0.000000e+00> : vector<16x32xf32>
      %103 = tpu.matmul %100, %102, %cst_60 {dimension_numbers = #tpu.dot_dimension_numbers<[1], [0], [0], [1], [0, 0, 1, 1], [], []>} : vector<16x32xf32>, vector<32x32xf32>, vector<16x32xf32> -> vector<16x32xf32>
      %c0_61 = arith.constant 0 : index
      %c0_62 = arith.constant 0 : index
      %c0_63 = arith.constant 0 : index
      %104 = vector.load %arg15[%c0_61, %c0_62, %c0_63] : memref<3x1x32xf32, #tpu.memory_space<vmem>>, vector<1x1x32xf32>
      %105 = vector.shape_cast %104 : vector<1x1x32xf32> to vector<1x32xf32>
      %106 = vector.broadcast %105 : vector<1x32xf32> to vector<16x32xf32>
      %107 = arith.addf %103, %106 : vector<16x32xf32>
      %c1_64 = arith.constant 1 : index
      %c0_65 = arith.constant 0 : index
      %c0_66 = arith.constant 0 : index
      %108 = vector.load %arg16[%c1_64, %c0_65, %c0_66] : memref<3x1x32xf32, #tpu.memory_space<vmem>>, vector<1x1x32xf32>
      %109 = vector.shape_cast %108 : vector<1x1x32xf32> to vector<1x32xf32>
      %c1_67 = arith.constant 1 : index
      %c0_68 = arith.constant 0 : index
      %c0_69 = arith.constant 0 : index
      %110 = vector.load %arg17[%c1_67, %c0_68, %c0_69] : memref<3x1x32xf32, #tpu.memory_space<vmem>>, vector<1x1x32xf32>
      %111 = vector.shape_cast %110 : vector<1x1x32xf32> to vector<1x32xf32>
      %112 = vector.broadcast %111 : vector<1x32xf32> to vector<16x32xf32>
      %113 = arith.mulf %112, %107 : vector<16x32xf32>
      %114 = vector.broadcast %109 : vector<1x32xf32> to vector<16x32xf32>
      %115 = arith.mulf %114, %113 : vector<16x32xf32>
      %cst_70 = arith.constant 0.000000e+00 : f32
      %116 = vector.broadcast %cst_70 : f32 to vector<16x32xf32>
      %117 = arith.subf %116, %113 : vector<16x32xf32>
      %118 = math.exp %117 : vector<16x32xf32>
      %cst_71 = arith.constant 1.000000e+00 : f32
      %119 = vector.broadcast %cst_71 : f32 to vector<16x32xf32>
      %120 = arith.addf %119, %118 : vector<16x32xf32>
      %cst_72 = arith.constant 1.000000e+00 : f32
      %121 = vector.broadcast %cst_72 : f32 to vector<16x32xf32>
      %122 = arith.divf %121, %120 : vector<16x32xf32>
      %123 = arith.mulf %115, %122 : vector<16x32xf32>
      %c1_73 = arith.constant 1 : index
      %c0_74 = arith.constant 0 : index
      %c0_75 = arith.constant 0 : index
      %124 = vector.load %arg14[%c1_73, %c0_74, %c0_75] : memref<3x32x32xf32, #tpu.memory_space<vmem>>, vector<1x32x32xf32>
      %125 = vector.shape_cast %124 : vector<1x32x32xf32> to vector<32x32xf32>
      %cst_76 = arith.constant dense<0.000000e+00> : vector<16x32xf32>
      %126 = tpu.matmul %123, %125, %cst_76 {dimension_numbers = #tpu.dot_dimension_numbers<[1], [0], [0], [1], [0, 0, 1, 1], [], []>} : vector<16x32xf32>, vector<32x32xf32>, vector<16x32xf32> -> vector<16x32xf32>
      %c1_77 = arith.constant 1 : index
      %c0_78 = arith.constant 0 : index
      %c0_79 = arith.constant 0 : index
      %127 = vector.load %arg15[%c1_77, %c0_78, %c0_79] : memref<3x1x32xf32, #tpu.memory_space<vmem>>, vector<1x1x32xf32>
      %128 = vector.shape_cast %127 : vector<1x1x32xf32> to vector<1x32xf32>
      %129 = vector.broadcast %128 : vector<1x32xf32> to vector<16x32xf32>
      %130 = arith.addf %126, %129 : vector<16x32xf32>
      %131 = arith.addf %84, %130 : vector<16x32xf32>
      %c2_80 = arith.constant 2 : index
      %c0_81 = arith.constant 0 : index
      %c0_82 = arith.constant 0 : index
      %132 = vector.load %arg16[%c2_80, %c0_81, %c0_82] : memref<3x1x32xf32, #tpu.memory_space<vmem>>, vector<1x1x32xf32>
      %133 = vector.shape_cast %132 : vector<1x1x32xf32> to vector<1x32xf32>
      %c2_83 = arith.constant 2 : index
      %c0_84 = arith.constant 0 : index
      %c0_85 = arith.constant 0 : index
      %134 = vector.load %arg17[%c2_83, %c0_84, %c0_85] : memref<3x1x32xf32, #tpu.memory_space<vmem>>, vector<1x1x32xf32>
      %135 = vector.shape_cast %134 : vector<1x1x32xf32> to vector<1x32xf32>
      %136 = vector.broadcast %135 : vector<1x32xf32> to vector<16x32xf32>
      %137 = arith.mulf %136, %131 : vector<16x32xf32>
      %138 = vector.broadcast %133 : vector<1x32xf32> to vector<16x32xf32>
      %139 = arith.mulf %138, %137 : vector<16x32xf32>
      %cst_86 = arith.constant 0.000000e+00 : f32
      %140 = vector.broadcast %cst_86 : f32 to vector<16x32xf32>
      %141 = arith.subf %140, %137 : vector<16x32xf32>
      %142 = math.exp %141 : vector<16x32xf32>
      %cst_87 = arith.constant 1.000000e+00 : f32
      %143 = vector.broadcast %cst_87 : f32 to vector<16x32xf32>
      %144 = arith.addf %143, %142 : vector<16x32xf32>
      %cst_88 = arith.constant 1.000000e+00 : f32
      %145 = vector.broadcast %cst_88 : f32 to vector<16x32xf32>
      %146 = arith.divf %145, %144 : vector<16x32xf32>
      %147 = arith.mulf %139, %146 : vector<16x32xf32>
      %c2_89 = arith.constant 2 : index
      %c0_90 = arith.constant 0 : index
      %c0_91 = arith.constant 0 : index
      %148 = vector.load %arg14[%c2_89, %c0_90, %c0_91] : memref<3x32x32xf32, #tpu.memory_space<vmem>>, vector<1x32x32xf32>
      %149 = vector.shape_cast %148 : vector<1x32x32xf32> to vector<32x32xf32>
      %cst_92 = arith.constant dense<0.000000e+00> : vector<16x32xf32>
      %150 = tpu.matmul %147, %149, %cst_92 {dimension_numbers = #tpu.dot_dimension_numbers<[1], [0], [0], [1], [0, 0, 1, 1], [], []>} : vector<16x32xf32>, vector<32x32xf32>, vector<16x32xf32> -> vector<16x32xf32>
      %c2_93 = arith.constant 2 : index
      %c0_94 = arith.constant 0 : index
      %c0_95 = arith.constant 0 : index
      %151 = vector.load %arg15[%c2_93, %c0_94, %c0_95] : memref<3x1x32xf32, #tpu.memory_space<vmem>>, vector<1x1x32xf32>
      %152 = vector.shape_cast %151 : vector<1x1x32xf32> to vector<1x32xf32>
      %153 = vector.broadcast %152 : vector<1x32xf32> to vector<16x32xf32>
      %154 = arith.addf %150, %153 : vector<16x32xf32>
      %c0_96 = arith.constant 0 : index
      %c0_97 = arith.constant 0 : index
      %155 = vector.load %arg18[%c0_96, %c0_97] : memref<16x32xf32, #tpu.memory_space<vmem>>, vector<16x32xf32>
      tpu.vector_store %arg18[%c0_96, %c0_97], %154 {strides = array<i32>} : memref<16x32xf32, #tpu.memory_space<vmem>>, vector<16x32xf32>,
    } else {
    }
    return
  }
  func.func @transform_0(%arg0: i32) -> (i32, i32) {
    %c0_i32 = arith.constant 0 : i32
    %c0_i32_0 = arith.constant 0 : i32
    %c0_i32_1 = arith.constant 0 : i32
    return %c0_i32, %c0_i32_0 : i32, i32
  }
  func.func @transform_1(%arg0: i32) -> (i32, i32) {
    %c0_i32 = arith.constant 0 : i32
    %c0_i32_0 = arith.constant 0 : i32
    return %arg0, %c0_i32 : i32, i32
  }
  func.func @transform_2(%arg0: i32) -> (i32, i32) {
    %c0_i32 = arith.constant 0 : i32
    %c0_i32_0 = arith.constant 0 : i32
    return %arg0, %c0_i32 : i32, i32
  }
  func.func @transform_3(%arg0: i32) -> (i32, i32) {
    %c0_i32 = arith.constant 0 : i32
    %c0_i32_0 = arith.constant 0 : i32
    return %c0_i32, %arg0 : i32, i32
  }
  func.func @transform_4(%arg0: i32) -> (i32, i32) {
    %c0_i32 = arith.constant 0 : i32
    %c0_i32_0 = arith.constant 0 : i32
    return %arg0, %c0_i32 : i32, i32
  }
  func.func @transform_5(%arg0: i32) -> (i32, i32, i32) {
    %c0_i32 = arith.constant 0 : i32
    %c0_i32_0 = arith.constant 0 : i32
    %c0_i32_1 = arith.constant 0 : i32
    %c0_i32_2 = arith.constant 0 : i32
    return %c0_i32, %c0_i32_0, %c0_i32_1 : i32, i32, i32
  }
  func.func @transform_6(%arg0: i32) -> (i32, i32, i32) {
    %c0_i32 = arith.constant 0 : i32
    %c0_i32_0 = arith.constant 0 : i32
    %c0_i32_1 = arith.constant 0 : i32
    %c0_i32_2 = arith.constant 0 : i32
    return %c0_i32, %c0_i32_0, %c0_i32_1 : i32, i32, i32
  }
  func.func @transform_7(%arg0: i32) -> (i32, i32, i32) {
    %c0_i32 = arith.constant 0 : i32
    %c0_i32_0 = arith.constant 0 : i32
    %c0_i32_1 = arith.constant 0 : i32
    %c0_i32_2 = arith.constant 0 : i32
    return %c0_i32, %c0_i32_0, %c0_i32_1 : i32, i32, i32
  }
  func.func @transform_8(%arg0: i32) -> (i32, i32, i32) {
    %c0_i32 = arith.constant 0 : i32
    %c0_i32_0 = arith.constant 0 : i32
    %c0_i32_1 = arith.constant 0 : i32
    %c0_i32_2 = arith.constant 0 : i32
    return %c0_i32, %c0_i32_0, %c0_i32_1 : i32, i32, i32
  }
  func.func @transform_9(%arg0: i32) -> (i32, i32) {
    %c0_i32 = arith.constant 0 : i32
    %c0_i32_0 = arith.constant 0 : i32
    %c0_i32_1 = arith.constant 0 : i32
    return %c0_i32, %c0_i32_0 : i32, i32
  }
  func.func @transform_10(%arg0: i32) -> (i32, i32) {
    %c0_i32 = arith.constant 0 : i32
    %c0_i32_0 = arith.constant 0 : i32
    %c0_i32_1 = arith.constant 0 : i32
    return %c0_i32, %c0_i32_0 : i32, i32
  }
  func.func @transform_11(%arg0: i32) -> (i32, i32) {
    %c0_i32 = arith.constant 0 : i32
    %c0_i32_0 = arith.constant 0 : i32
    %c0_i32_1 = arith.constant 0 : i32
    return %c0_i32, %c0_i32_0 : i32, i32
  }
  func.func @transform_12(%arg0: i32) -> (i32, i32, i32) {
    %c0_i32 = arith.constant 0 : i32
    %c0_i32_0 = arith.constant 0 : i32
    %c0_i32_1 = arith.constant 0 : i32
    %c0_i32_2 = arith.constant 0 : i32
    return %c0_i32, %c0_i32_0, %c0_i32_1 : i32, i32, i32
  }
  func.func @transform_13(%arg0: i32) -> (i32, i32, i32) {
    %c0_i32 = arith.constant 0 : i32
    %c0_i32_0 = arith.constant 0 : i32
    %c0_i32_1 = arith.constant 0 : i32
    %c0_i32_2 = arith.constant 0 : i32
    return %c0_i32, %c0_i32_0, %c0_i32_1 : i32, i32, i32
  }
  func.func @transform_14(%arg0: i32) -> (i32, i32, i32) {
    %c0_i32 = arith.constant 0 : i32
    %c0_i32_0 = arith.constant 0 : i32
    %c0_i32_1 = arith.constant 0 : i32
    %c0_i32_2 = arith.constant 0 : i32
    return %c0_i32, %c0_i32_0, %c0_i32_1 : i32, i32, i32
  }
  func.func @transform_15(%arg0: i32) -> (i32, i32, i32) {
    %c0_i32 = arith.constant 0 : i32
    %c0_i32_0 = arith.constant 0 : i32
    %c0_i32_1 = arith.constant 0 : i32
    %c0_i32_2 = arith.constant 0 : i32
    return %c0_i32, %c0_i32_0, %c0_i32_1 : i32, i32, i32
  }
  func.func @transform_16(%arg0: i32) -> (i32, i32, i32) {
    %c0_i32 = arith.constant 0 : i32
    %c0_i32_0 = arith.constant 0 : i32
    %c0_i32_1 = arith.constant 0 : i32
    %c0_i32_2 = arith.constant 0 : i32
    return %c0_i32, %c0_i32_0, %c0_i32_1 : i32, i32, i32
  }
  func.func @transform_17(%arg0: i32) -> (i32, i32) {
    %c0_i32 = arith.constant 0 : i32
    %c0_i32_0 = arith.constant 0 : i32
    %c0_i32_1 = arith.constant 0 : i32
    return %c0_i32, %c0_i32_0 : i32, i32
  }
}

</mosaic_0001>

<llo_original>
// kernel: tpu_custom_call.1
$region0: #{tpu_custom_call.1}
  #allocation0 [shape = 'u32[]', space=smem, size = 0x4, offset = 0x4, fixed_abs, tag = 'smem constant byte address 0x4 - core index']
  #allocation1 [shape = 'u32[144,128]{1,0:T(1,128)}', space=vmem, size = 0x12000, scoped, tag = 'internal scratch']
  #allocation2 [shape = 'f32[16,32]{1,0:T(8,128)}', space=vmem, size = 0x2000, scoped, tag = 'scratch operand']
  #allocation3 [shape = 'bf16[16,288]{1,0:T(16,128)(2,1)}', space=vmem, size = 0x3000, scoped, tag = 'scratch operand']
  #allocation4 [shape = 'f32[16,288]{1,0:T(8,128)}', space=vmem, size = 0x6000, scoped, tag = 'scratch operand']
  %s0 = inlined_call_operand.vmem [shape: f32[16,32], index: 0, kind: input, shape index: {}]
  %s1 = inlined_call_operand.vmem [shape: f32[256,16], index: 1, kind: input, shape index: {}]
  %s2 = inlined_call_operand.vmem [shape: f32[256,288], index: 2, kind: input, shape index: {}]
  %s3 = inlined_call_operand.vmem [shape: s32[1,256], index: 3, kind: input, shape index: {}]
  %s4 = inlined_call_operand.vmem [shape: s32[256,1], index: 4, kind: input, shape index: {}]
  %s5 = inlined_call_operand.vmem [shape: f32[2,128,128], index: 5, kind: input, shape index: {}]
  %s6 = inlined_call_operand.vmem [shape: f32[2,1,128], index: 6, kind: input, shape index: {}]
  %s7 = inlined_call_operand.vmem [shape: f32[3,1,128], index: 7, kind: input, shape index: {}]
  %s8 = inlined_call_operand.vmem [shape: f32[3,1,128], index: 8, kind: input, shape index: {}]
  %s9 = inlined_call_operand.vmem [shape: f32[128,320], index: 9, kind: input, shape index: {}]
  %s10 = inlined_call_operand.vmem [shape: f32[1,320], index: 10, kind: input, shape index: {}]
  %s11 = inlined_call_operand.vmem [shape: f32[16,288], index: 11, kind: input, shape index: {}]
  %s12 = inlined_call_operand.vmem [shape: f32[4,32,32], index: 12, kind: input, shape index: {}]
  %s13 = inlined_call_operand.vmem [shape: f32[3,32,32], index: 13, kind: input, shape index: {}]
  %s14 = inlined_call_operand.vmem [shape: f32[3,1,32], index: 14, kind: input, shape index: {}]
  %s15 = inlined_call_operand.vmem [shape: f32[3,1,32], index: 15, kind: input, shape index: {}]
  %s16 = inlined_call_operand.vmem [shape: f32[3,1,32], index: 16, kind: input, shape index: {}]
  %s17 = inlined_call_operand.hbm [shape: f32[16,32], index: 17, kind: output, shape index: {}]
  %s18 = sld [smem:[#allocation0]]
  $region109: #{tpu_custom_call.1} parent=0
    _
  %s20 = ssub.s32 1, %s18
  %s21 = scalar_select 0, %s20, %s18
  $region1: #{tpu_custom_call.1} parent=0
    #allocation5 [shape = 'u8[8192]{0}', space=vmem, size = 0x2000, scoped, tag = 'output window, operand 0, single buffered']
    #allocation6 [shape = 's32[2]{0}', space=sflag, size = 0x8, scoped, tag = 'scoped memory for tpu_custom_call.1']
    %22 = vsyncpa [#allocation6], 0
    loop: start=0, step=1, limit=4
    $region2: #{tpu_custom_call.1} parent=1 // loop_pre_header
      _
    $region3: #{tpu_custom_call.1} parent=1 // loop_header
      %s24 = sphi 0, %s28
      %p25 = scmp.ge.s32.totalorder %s24, 4
      %s32 = sphi 0, %s32
      %s34 = sphi 0, %s32
      %s35 = sphi 0, %s34
      %s49 = sphi 0, %s35
      %s55 = sphi 0, %s57
      %s58 = sphi 0, %s55
      %s59 = sphi 0, %s58
      %s75 = sphi 0, %s59
      %s81 = sphi 0, %s83
      %s84 = sphi 0, %s81
      %s85 = sphi 0, %s84
      %s101 = sphi 0, %s85
      %s107 = sphi 0, %s109
      %s110 = sphi 0, %s107
      %s111 = sphi 0, %s110
      %s127 = sphi 0, %s111
      %s133 = sphi 0, %s135
      %s136 = sphi 0, %s133
      %s137 = sphi 0, %s136
      %s153 = sphi 0, %s137
      %s157 = sphi 0, %s157
      %s159 = sphi 0, %s157
      %s160 = sphi 0, %s159
      %s174 = sphi 0, %s160
      %s178 = sphi 0, %s178
      %s180 = sphi 0, %s178
      %s181 = sphi 0, %s180
      %s195 = sphi 0, %s181
      %s199 = sphi 0, %s199
      %s201 = sphi 0, %s199
      %s202 = sphi 0, %s201
      %s216 = sphi 0, %s202
      %s220 = sphi 0, %s220
      %s222 = sphi 0, %s220
      %s223 = sphi 0, %s222
      %s237 = sphi 0, %s223
      %s241 = sphi 0, %s241
      %s243 = sphi 0, %s241
      %s244 = sphi 0, %s243
      %s258 = sphi 0, %s244
      %s262 = sphi 0, %s262
      %s264 = sphi 0, %s262
      %s265 = sphi 0, %s264
      %s279 = sphi 0, %s265
      %s283 = sphi 0, %s283
      %s285 = sphi 0, %s283
      %s286 = sphi 0, %s285
      %s300 = sphi 0, %s286
      %s304 = sphi 0, %s304
      %s306 = sphi 0, %s304
      %s307 = sphi 0, %s306
      %s321 = sphi 0, %s307
      %s325 = sphi 0, %s325
      %s327 = sphi 0, %s325
      %s328 = sphi 0, %s327
      %s342 = sphi 0, %s328
      %s346 = sphi 0, %s346
      %s348 = sphi 0, %s346
      %s349 = sphi 0, %s348
      %s363 = sphi 0, %s349
      %s367 = sphi 0, %s367
      %s369 = sphi 0, %s367
      %s370 = sphi 0, %s369
      %s384 = sphi 0, %s370
      %s388 = sphi 0, %s388
      %s390 = sphi 0, %s388
      %s391 = sphi 0, %s390
      %s405 = sphi 0, %s391
      %s409 = sphi 0, %s409
      %s411 = sphi 0, %s409
      %s412 = sphi 0, %s411
      %s426 = sphi 0, %s412
    $region4: #{tpu_custom_call.1} parent=1 // loop_header_branch
      %27 = sbr.rel (%p25) target = $region8
    $region5: #{tpu_custom_call.1} parent=1 // loop_body
      %s29 = ssub.s32 %s24, 1
      %s30 = ssub.s32 %s24, 2
      %s31 = sadd.s32 %s24, 1
      %s33 = sadd.s32 %s32, 1
      %p36 = scmp.eq.s32.totalorder %s24, 1
      %p37 = scmp.ne.s32.totalorder %s32, %s34
      %p38 = scmp.eq.s32.totalorder %s24, 0
      %p39 = por %p37, %p38
      %p40 = scmp.ne.s32.totalorder %s32, %s34
      %p41 = scmp.eq.s32.totalorder %s29, 1
      %p42 = por %p40, %p41
      %p43 = scmp.ne.s32.totalorder %s34, %s35
      %p44 = scmp.eq.s32.totalorder %s29, 0
      %p45 = por %p43, %p44
      %p46 = scmp.ne.s32.totalorder %s34, %s35
      %p47 = scmp.eq.s32.totalorder %s30, 1
      %p48 = por %p46, %p47
      %p50 = scmp.ne.s32.totalorder %s35, %s49
      %p51 = scmp.eq.s32.totalorder %s30, 0
      %p52 = por %p50, %p51
      %s53 = ssub.s32 %s24, %s31
      %p54 = scmp.eq.s32.totalorder %s53, 0
      %s56 = sadd.s32 %s55, 1
      %s57 = scalar_select %p54, %s55, %s56
      %p60 = pneg %p54
      %p61 = scmp.eq.s32.totalorder %s24, 1
      %p62 = por %p60, %p61
      %p63 = scmp.ne.s32.totalorder %s55, %s58
      %p64 = scmp.eq.s32.totalorder %s24, 0
      %p65 = por %p63, %p64
      %p66 = scmp.ne.s32.totalorder %s55, %s58
      %p67 = scmp.eq.s32.totalorder %s29, 1
      %p68 = por %p66, %p67
      %p69 = scmp.ne.s32.totalorder %s58, %s59
      %p70 = scmp.eq.s32.totalorder %s29, 0
      %p71 = por %p69, %p70
      %p72 = scmp.ne.s32.totalorder %s58, %s59
      %p73 = scmp.eq.s32.totalorder %s30, 1
      %p74 = por %p72, %p73
      %p76 = scmp.ne.s32.totalorder %s59, %s75
      %p77 = scmp.eq.s32.totalorder %s30, 0
      %p78 = por %p76, %p77
      %s79 = ssub.s32 %s24, %s31
      %p80 = scmp.eq.s32.totalorder %s79, 0
      %s82 = sadd.s32 %s81, 1
      %s83 = scalar_select %p80, %s81, %s82
      %p86 = pneg %p80
      %p87 = scmp.eq.s32.totalorder %s24, 1
      %p88 = por %p86, %p87
      %p89 = scmp.ne.s32.totalorder %s81, %s84
      %p90 = scmp.eq.s32.totalorder %s24, 0
      %p91 = por %p89, %p90
      %p92 = scmp.ne.s32.totalorder %s81, %s84
      %p93 = scmp.eq.s32.totalorder %s29, 1
      %p94 = por %p92, %p93
      %p95 = scmp.ne.s32.totalorder %s84, %s85
      %p96 = scmp.eq.s32.totalorder %s29, 0
      %p97 = por %p95, %p96
      %p98 = scmp.ne.s32.totalorder %s84, %s85
      %p99 = scmp.eq.s32.totalorder %s30, 1
      %p100 = por %p98, %p99
      %p102 = scmp.ne.s32.totalorder %s85, %s101
      %p103 = scmp.eq.s32.totalorder %s30, 0
      %p104 = por %p102, %p103
      %s105 = ssub.s32 %s24, %s31
      %p106 = scmp.eq.s32.totalorder %s105, 0
      %s108 = sadd.s32 %s107, 1
      %s109 = scalar_select %p106, %s107, %s108
      %p112 = pneg %p106
      %p113 = scmp.eq.s32.totalorder %s24, 1
      %p114 = por %p112, %p113
      %p115 = scmp.ne.s32.totalorder %s107, %s110
      %p116 = scmp.eq.s32.totalorder %s24, 0
      %p117 = por %p115, %p116
      %p118 = scmp.ne.s32.totalorder %s107, %s110
      %p119 = scmp.eq.s32.totalorder %s29, 1
      %p120 = por %p118, %p119
      %p121 = scmp.ne.s32.totalorder %s110, %s111
      %p122 = scmp.eq.s32.totalorder %s29, 0
      %p123 = por %p121, %p122
      %p124 = scmp.ne.s32.totalorder %s110, %s111
      %p125 = scmp.eq.s32.totalorder %s30, 1
      %p126 = por %p124, %p125
      %p128 = scmp.ne.s32.totalorder %s111, %s127
      %p129 = scmp.eq.s32.totalorder %s30, 0
      %p130 = por %p128, %p129
      %s131 = ssub.s32 %s24, %s31
      %p132 = scmp.eq.s32.totalorder %s131, 0
      %s134 = sadd.s32 %s133, 1
      %s135 = scalar_select %p132, %s133, %s134
      %p138 = pneg %p132
      %p139 = scmp.eq.s32.totalorder %s24, 1
      %p140 = por %p138, %p139
      %p141 = scmp.ne.s32.totalorder %s133, %s136
      %p142 = scmp.eq.s32.totalorder %s24, 0
      %p143 = por %p141, %p142
      %p144 = scmp.ne.s32.totalorder %s133, %s136
      %p145 = scmp.eq.s32.totalorder %s29, 1
      %p146 = por %p144, %p145
      %p147 = scmp.ne.s32.totalorder %s136, %s137
      %p148 = scmp.eq.s32.totalorder %s29, 0
      %p149 = por %p147, %p148
      %p150 = scmp.ne.s32.totalorder %s136, %s137
      %p151 = scmp.eq.s32.totalorder %s30, 1
      %p152 = por %p150, %p151
      %p154 = scmp.ne.s32.totalorder %s137, %s153
      %p155 = scmp.eq.s32.totalorder %s30, 0
      %p156 = por %p154, %p155
      %s158 = sadd.s32 %s157, 1
      %p161 = scmp.eq.s32.totalorder %s24, 1
      %p162 = scmp.ne.s32.totalorder %s157, %s159
      %p163 = scmp.eq.s32.totalorder %s24, 0
      %p164 = por %p162, %p163
      %p165 = scmp.ne.s32.totalorder %s157, %s159
      %p166 = scmp.eq.s32.totalorder %s29, 1
      %p167 = por %p165, %p166
      %p168 = scmp.ne.s32.totalorder %s159, %s160
      %p169 = scmp.eq.s32.totalorder %s29, 0
      %p170 = por %p168, %p169
      %p171 = scmp.ne.s32.totalorder %s159, %s160
      %p172 = scmp.eq.s32.totalorder %s30, 1
      %p173 = por %p171, %p172
      %p175 = scmp.ne.s32.totalorder %s160, %s174
      %p176 = scmp.eq.s32.totalorder %s30, 0
      %p177 = por %p175, %p176
      %s179 = sadd.s32 %s178, 1
      %p182 = scmp.eq.s32.totalorder %s24, 1
      %p183 = scmp.ne.s32.totalorder %s178, %s180
      %p184 = scmp.eq.s32.totalorder %s24, 0
      %p185 = por %p183, %p184
      %p186 = scmp.ne.s32.totalorder %s178, %s180
      %p187 = scmp.eq.s32.totalorder %s29, 1
      %p188 = por %p186, %p187
      %p189 = scmp.ne.s32.totalorder %s180, %s181
      %p190 = scmp.eq.s32.totalorder %s29, 0
      %p191 = por %p189, %p190
      %p192 = scmp.ne.s32.totalorder %s180, %s181
      %p193 = scmp.eq.s32.totalorder %s30, 1
      %p194 = por %p192, %p193
      %p196 = scmp.ne.s32.totalorder %s181, %s195
      %p197 = scmp.eq.s32.totalorder %s30, 0
      %p198 = por %p196, %p197
      %s200 = sadd.s32 %s199, 1
      %p203 = scmp.eq.s32.totalorder %s24, 1
      %p204 = scmp.ne.s32.totalorder %s199, %s201
      %p205 = scmp.eq.s32.totalorder %s24, 0
      %p206 = por %p204, %p205
      %p207 = scmp.ne.s32.totalorder %s199, %s201
      %p208 = scmp.eq.s32.totalorder %s29, 1
      %p209 = por %p207, %p208
      %p210 = scmp.ne.s32.totalorder %s201, %s202
      %p211 = scmp.eq.s32.totalorder %s29, 0
      %p212 = por %p210, %p211
      %p213 = scmp.ne.s32.totalorder %s201, %s202
      %p214 = scmp.eq.s32.totalorder %s30, 1
      %p215 = por %p213, %p214
      %p217 = scmp.ne.s32.totalorder %s202, %s216
      %p218 = scmp.eq.s32.totalorder %s30, 0
      %p219 = por %p217, %p218
      %s221 = sadd.s32 %s220, 1
      %p224 = scmp.eq.s32.totalorder %s24, 1
      %p225 = scmp.ne.s32.totalorder %s220, %s222
      %p226 = scmp.eq.s32.totalorder %s24, 0
      %p227 = por %p225, %p226
      %p228 = scmp.ne.s32.totalorder %s220, %s222
      %p229 = scmp.eq.s32.totalorder %s29, 1
      %p230 = por %p228, %p229
      %p231 = scmp.ne.s32.totalorder %s222, %s223
      %p232 = scmp.eq.s32.totalorder %s29, 0
      %p233 = por %p231, %p232
      %p234 = scmp.ne.s32.totalorder %s222, %s223
      %p235 = scmp.eq.s32.totalorder %s30, 1
      %p236 = por %p234, %p235
      %p238 = scmp.ne.s32.totalorder %s223, %s237
      %p239 = scmp.eq.s32.totalorder %s30, 0
      %p240 = por %p238, %p239
      %s242 = sadd.s32 %s241, 1
      %p245 = scmp.eq.s32.totalorder %s24, 1
      %p246 = scmp.ne.s32.totalorder %s241, %s243
      %p247 = scmp.eq.s32.totalorder %s24, 0
      %p248 = por %p246, %p247
      %p249 = scmp.ne.s32.totalorder %s241, %s243
      %p250 = scmp.eq.s32.totalorder %s29, 1
      %p251 = por %p249, %p250
      %p252 = scmp.ne.s32.totalorder %s243, %s244
      %p253 = scmp.eq.s32.totalorder %s29, 0
      %p254 = por %p252, %p253
      %p255 = scmp.ne.s32.totalorder %s243, %s244
      %p256 = scmp.eq.s32.totalorder %s30, 1
      %p257 = por %p255, %p256
      %p259 = scmp.ne.s32.totalorder %s244, %s258
      %p260 = scmp.eq.s32.totalorder %s30, 0
      %p261 = por %p259, %p260
      %s263 = sadd.s32 %s262, 1
      %p266 = scmp.eq.s32.totalorder %s24, 1
      %p267 = scmp.ne.s32.totalorder %s262, %s264
      %p268 = scmp.eq.s32.totalorder %s24, 0
      %p269 = por %p267, %p268
      %p270 = scmp.ne.s32.totalorder %s262, %s264
      %p271 = scmp.eq.s32.totalorder %s29, 1
      %p272 = por %p270, %p271
      %p273 = scmp.ne.s32.totalorder %s264, %s265
      %p274 = scmp.eq.s32.totalorder %s29, 0
      %p275 = por %p273, %p274
      %p276 = scmp.ne.s32.totalorder %s264, %s265
      %p277 = scmp.eq.s32.totalorder %s30, 1
      %p278 = por %p276, %p277
      %p280 = scmp.ne.s32.totalorder %s265, %s279
      %p281 = scmp.eq.s32.totalorder %s30, 0
      %p282 = por %p280, %p281
      %s284 = sadd.s32 %s283, 1
      %p287 = scmp.eq.s32.totalorder %s24, 1
      %p288 = scmp.ne.s32.totalorder %s283, %s285
      %p289 = scmp.eq.s32.totalorder %s24, 0
      %p290 = por %p288, %p289
      %p291 = scmp.ne.s32.totalorder %s283, %s285
      %p292 = scmp.eq.s32.totalorder %s29, 1
      %p293 = por %p291, %p292
      %p294 = scmp.ne.s32.totalorder %s285, %s286
      %p295 = scmp.eq.s32.totalorder %s29, 0
      %p296 = por %p294, %p295
      %p297 = scmp.ne.s32.totalorder %s285, %s286
      %p298 = scmp.eq.s32.totalorder %s30, 1
      %p299 = por %p297, %p298
      %p301 = scmp.ne.s32.totalorder %s286, %s300
      %p302 = scmp.eq.s32.totalorder %s30, 0
      %p303 = por %p301, %p302
      %s305 = sadd.s32 %s304, 1
      %p308 = scmp.eq.s32.totalorder %s24, 1
      %p309 = scmp.ne.s32.totalorder %s304, %s306
      %p310 = scmp.eq.s32.totalorder %s24, 0
      %p311 = por %p309, %p310
      %p312 = scmp.ne.s32.totalorder %s304, %s306
      %p313 = scmp.eq.s32.totalorder %s29, 1
      %p314 = por %p312, %p313
      %p315 = scmp.ne.s32.totalorder %s306, %s307
      %p316 = scmp.eq.s32.totalorder %s29, 0
      %p317 = por %p315, %p316
      %p318 = scmp.ne.s32.totalorder %s306, %s307
      %p319 = scmp.eq.s32.totalorder %s30, 1
      %p320 = por %p318, %p319
      %p322 = scmp.ne.s32.totalorder %s307, %s321
      %p323 = scmp.eq.s32.totalorder %s30, 0
      %p324 = por %p322, %p323
      %s326 = sadd.s32 %s325, 1
      %p329 = scmp.eq.s32.totalorder %s24, 1
      %p330 = scmp.ne.s32.totalorder %s325, %s327
      %p331 = scmp.eq.s32.totalorder %s24, 0
      %p332 = por %p330, %p331
      %p333 = scmp.ne.s32.totalorder %s325, %s327
      %p334 = scmp.eq.s32.totalorder %s29, 1
      %p335 = por %p333, %p334
      %p336 = scmp.ne.s32.totalorder %s327, %s328
      %p337 = scmp.eq.s32.totalorder %s29, 0
      %p338 = por %p336, %p337
      %p339 = scmp.ne.s32.totalorder %s327, %s328
      %p340 = scmp.eq.s32.totalorder %s30, 1
      %p341 = por %p339, %p340
      %p343 = scmp.ne.s32.totalorder %s328, %s342
      %p344 = scmp.eq.s32.totalorder %s30, 0
      %p345 = por %p343, %p344
      %s347 = sadd.s32 %s346, 1
      %p350 = scmp.eq.s32.totalorder %s24, 1
      %p351 = scmp.ne.s32.totalorder %s346, %s348
      %p352 = scmp.eq.s32.totalorder %s24, 0
      %p353 = por %p351, %p352
      %p354 = scmp.ne.s32.totalorder %s346, %s348
      %p355 = scmp.eq.s32.totalorder %s29, 1
      %p356 = por %p354, %p355
      %p357 = scmp.ne.s32.totalorder %s348, %s349
      %p358 = scmp.eq.s32.totalorder %s29, 0
      %p359 = por %p357, %p358
      %p360 = scmp.ne.s32.totalorder %s348, %s349
      %p361 = scmp.eq.s32.totalorder %s30, 1
      %p362 = por %p360, %p361
      %p364 = scmp.ne.s32.totalorder %s349, %s363
      %p365 = scmp.eq.s32.totalorder %s30, 0
      %p366 = por %p364, %p365
      %s368 = sadd.s32 %s367, 1
      %p371 = scmp.eq.s32.totalorder %s24, 1
      %p372 = scmp.ne.s32.totalorder %s367, %s369
      %p373 = scmp.eq.s32.totalorder %s24, 0
      %p374 = por %p372, %p373
      %p375 = scmp.ne.s32.totalorder %s367, %s369
      %p376 = scmp.eq.s32.totalorder %s29, 1
      %p377 = por %p375, %p376
      %p378 = scmp.ne.s32.totalorder %s369, %s370
      %p379 = scmp.eq.s32.totalorder %s29, 0
      %p380 = por %p378, %p379
      %p381 = scmp.ne.s32.totalorder %s369, %s370
      %p382 = scmp.eq.s32.totalorder %s30, 1
      %p383 = por %p381, %p382
      %p385 = scmp.ne.s32.totalorder %s370, %s384
      %p386 = scmp.eq.s32.totalorder %s30, 0
      %p387 = por %p385, %p386
      %s389 = sadd.s32 %s388, 1
      %p392 = scmp.eq.s32.totalorder %s24, 1
      %p393 = scmp.ne.s32.totalorder %s388, %s390
      %p394 = scmp.eq.s32.totalorder %s24, 0
      %p395 = por %p393, %p394
      %p396 = scmp.ne.s32.totalorder %s388, %s390
      %p397 = scmp.eq.s32.totalorder %s29, 1
      %p398 = por %p396, %p397
      %p399 = scmp.ne.s32.totalorder %s390, %s391
      %p400 = scmp.eq.s32.totalorder %s29, 0
      %p401 = por %p399, %p400
      %p402 = scmp.ne.s32.totalorder %s390, %s391
      %p403 = scmp.eq.s32.totalorder %s30, 1
      %p404 = por %p402, %p403
      %p406 = scmp.ne.s32.totalorder %s391, %s405
      %p407 = scmp.eq.s32.totalorder %s30, 0
      %p408 = por %p406, %p407
      %s410 = sadd.s32 %s409, 1
      %p413 = scmp.eq.s32.totalorder %s24, 1
      %p414 = scmp.ne.s32.totalorder %s409, %s411
      %p415 = scmp.eq.s32.totalorder %s24, 0
      %p416 = por %p414, %p415
      %p417 = scmp.ne.s32.totalorder %s409, %s411
      %p418 = scmp.eq.s32.totalorder %s29, 1
      %p419 = por %p417, %p418
      %p420 = scmp.ne.s32.totalorder %s411, %s412
      %p421 = scmp.eq.s32.totalorder %s29, 0
      %p422 = por %p420, %p421
      %p423 = scmp.ne.s32.totalorder %s411, %s412
      %p424 = scmp.eq.s32.totalorder %s30, 1
      %p425 = por %p423, %p424
      %p427 = scmp.ne.s32.totalorder %s412, %s426
      %p428 = scmp.eq.s32.totalorder %s30, 0
      %p429 = por %p427, %p428
      %p430 = scmp.le.s32.totalorder 1, %s24
      %p431 = scmp.lt.s32.totalorder %s24, 3
      %p432 = pnand %p430, %p431
      %p433 = pneg %p432
      // Predicated region
      $region9: #{tpu_custom_call.1} parent=5 // pred_check
        _
      $region10: #{tpu_custom_call.1} parent=5 // pred_check_branch
        %435 = sbr.rel (%p432) target = $region12
      $region11: #{tpu_custom_call.1} parent=5 // pred_region
        %s436 = ssub.s32 %s24, 1
        // Predicated region
        $region13: #{tpu_custom_call.1} parent=11 // pred_check
          %p437 = pneg %p45
        $region14: #{tpu_custom_call.1} parent=11 // pred_check_branch
          %439 = sbr.rel (%p437) target = $region16
        $region15: #{tpu_custom_call.1} parent=11 // pred_region
          _
        $region16: #{tpu_custom_call.1} parent=11 // pred_fallthru
          _
        // Predicated region
        $region17: #{tpu_custom_call.1} parent=11 // pred_check
          %p440 = pneg %p170
        $region18: #{tpu_custom_call.1} parent=11 // pred_check_branch
          %442 = sbr.rel (%p440) target = $region20
        $region19: #{tpu_custom_call.1} parent=11 // pred_region
          _
        $region20: #{tpu_custom_call.1} parent=11 // pred_fallthru
          _
        // Predicated region
        $region21: #{tpu_custom_call.1} parent=11 // pred_check
          %p443 = pneg %p191
        $region22: #{tpu_custom_call.1} parent=11 // pred_check_branch
          %445 = sbr.rel (%p443) target = $region24
        $region23: #{tpu_custom_call.1} parent=11 // pred_region
          _
        $region24: #{tpu_custom_call.1} parent=11 // pred_fallthru
          _
        // Predicated region
        $region25: #{tpu_custom_call.1} parent=11 // pred_check
          %p446 = pneg %p212
        $region26: #{tpu_custom_call.1} parent=11 // pred_check_branch
          %448 = sbr.rel (%p446) target = $region28
        $region27: #{tpu_custom_call.1} parent=11 // pred_region
          _
        $region28: #{tpu_custom_call.1} parent=11 // pred_fallthru
          _
        // Predicated region
        $region29: #{tpu_custom_call.1} parent=11 // pred_check
          %p449 = pneg %p233
        $region30: #{tpu_custom_call.1} parent=11 // pred_check_branch
          %451 = sbr.rel (%p449) target = $region32
        $region31: #{tpu_custom_call.1} parent=11 // pred_region
          _
        $region32: #{tpu_custom_call.1} parent=11 // pred_fallthru
          _
        // Predicated region
        $region33: #{tpu_custom_call.1} parent=11 // pred_check
          %p452 = pneg %p254
        $region34: #{tpu_custom_call.1} parent=11 // pred_check_branch
          %454 = sbr.rel (%p452) target = $region36
        $region35: #{tpu_custom_call.1} parent=11 // pred_region
          _
        $region36: #{tpu_custom_call.1} parent=11 // pred_fallthru
          _
        // Predicated region
        $region37: #{tpu_custom_call.1} parent=11 // pred_check
          %p455 = pneg %p275
        $region38: #{tpu_custom_call.1} parent=11 // pred_check_branch
          %457 = sbr.rel (%p455) target = $region40
        $region39: #{tpu_custom_call.1} parent=11 // pred_region
          _
        $region40: #{tpu_custom_call.1} parent=11 // pred_fallthru
          _
        // Predicated region
        $region41: #{tpu_custom_call.1} parent=11 // pred_check
          %p458 = pneg %p296
        $region42: #{tpu_custom_call.1} parent=11 // pred_check_branch
          %460 = sbr.rel (%p458) target = $region44
        $region43: #{tpu_custom_call.1} parent=11 // pred_region
          _
        $region44: #{tpu_custom_call.1} parent=11 // pred_fallthru
          _
        // Predicated region
        $region45: #{tpu_custom_call.1} parent=11 // pred_check
          %p461 = pneg %p317
        $region46: #{tpu_custom_call.1} parent=11 // pred_check_branch
          %463 = sbr.rel (%p461) target = $region48
        $region47: #{tpu_custom_call.1} parent=11 // pred_region
          _
        $region48: #{tpu_custom_call.1} parent=11 // pred_fallthru
          _
        // Predicated region
        $region49: #{tpu_custom_call.1} parent=11 // pred_check
          %p464 = pneg %p338
        $region50: #{tpu_custom_call.1} parent=11 // pred_check_branch
          %466 = sbr.rel (%p464) target = $region52
        $region51: #{tpu_custom_call.1} parent=11 // pred_region
          _
        $region52: #{tpu_custom_call.1} parent=11 // pred_fallthru
          _
        // Predicated region
        $region53: #{tpu_custom_call.1} parent=11 // pred_check
          %p467 = pneg %p359
        $region54: #{tpu_custom_call.1} parent=11 // pred_check_branch
          %469 = sbr.rel (%p467) target = $region56
        $region55: #{tpu_custom_call.1} parent=11 // pred_region
          _
        $region56: #{tpu_custom_call.1} parent=11 // pred_fallthru
          _
        // Predicated region
        $region57: #{tpu_custom_call.1} parent=11 // pred_check
          %p470 = pneg %p380
        $region58: #{tpu_custom_call.1} parent=11 // pred_check_branch
          %472 = sbr.rel (%p470) target = $region60
        $region59: #{tpu_custom_call.1} parent=11 // pred_region
          _
        $region60: #{tpu_custom_call.1} parent=11 // pred_fallthru
          _
        // Predicated region
        $region61: #{tpu_custom_call.1} parent=11 // pred_check
          %p473 = pneg %p401
        $region62: #{tpu_custom_call.1} parent=11 // pred_check_branch
          %475 = sbr.rel (%p473) target = $region64
        $region63: #{tpu_custom_call.1} parent=11 // pred_region
          _
        $region64: #{tpu_custom_call.1} parent=11 // pred_fallthru
          _
      $region12: #{tpu_custom_call.1} parent=5 // pred_fallthru
        _
      %p476 = scmp.lt.s32.totalorder %s24, 2
      // Predicated region
      $region65: #{tpu_custom_call.1} parent=5 // pred_check
        %p477 = pneg %p476
      $region66: #{tpu_custom_call.1} parent=5 // pred_check_branch
        %479 = sbr.rel (%p477) target = $region68
      $region67: #{tpu_custom_call.1} parent=5 // pred_region
        // Predicated region
        $region69: #{tpu_custom_call.1} parent=67 // pred_check
          %p480 = pneg %p65
        $region70: #{tpu_custom_call.1} parent=67 // pred_check_branch
          %482 = sbr.rel (%p480) target = $region72
        $region71: #{tpu_custom_call.1} parent=67 // pred_region
          %s483 = smul.u32 16, %s24
          %p484 = scmp.lt.s32.totalorder %s483, 31
          %s485 = scalar_select %p484, %s483, 31
          %s486 = smul.addr %s485, 8
          %s487 = scalar_lea.vmem %s1, %s486
          %s488 = smul.u32 16, %s24
        $region72: #{tpu_custom_call.1} parent=67 // pred_fallthru
          _
        // Predicated region
        $region73: #{tpu_custom_call.1} parent=67 // pred_check
          %p489 = pneg %p91
        $region74: #{tpu_custom_call.1} parent=67 // pred_check_branch
          %491 = sbr.rel (%p489) target = $region76
        $region75: #{tpu_custom_call.1} parent=67 // pred_region
          %s492 = smul.u32 16, %s24
          %p493 = scmp.lt.s32.totalorder %s492, 31
          %s494 = scalar_select %p493, %s492, 31
          %s495 = smul.addr %s494, 3
          %s496 = smul.addr %s495, 8
          %s497 = scalar_lea.vmem %s2, %s496
          %s498 = smul.u32 16, %s24
        $region76: #{tpu_custom_call.1} parent=67 // pred_fallthru
          _
        // Predicated region
        $region77: #{tpu_custom_call.1} parent=67 // pred_check
          %p499 = pneg %p117
        $region78: #{tpu_custom_call.1} parent=67 // pred_check_branch
          %501 = sbr.rel (%p499) target = $region80
        $region79: #{tpu_custom_call.1} parent=67 // pred_region
          %p502 = scmp.lt.s32.totalorder %s24, 1
          %s503 = scalar_select %p502, %s24, 1
          %s504 = scalar_lea.vmem %s3, %s503
        $region80: #{tpu_custom_call.1} parent=67 // pred_fallthru
          _
        // Predicated region
        $region81: #{tpu_custom_call.1} parent=67 // pred_check
          %p505 = pneg %p143
        $region82: #{tpu_custom_call.1} parent=67 // pred_check_branch
          %507 = sbr.rel (%p505) target = $region84
        $region83: #{tpu_custom_call.1} parent=67 // pred_region
          %s508 = smul.u32 16, %s24
          %p509 = scmp.lt.s32.totalorder %s508, 31
          %s510 = scalar_select %p509, %s508, 31
          %s511 = smul.addr %s510, 8
          %s512 = scalar_lea.vmem %s4, %s511
          %s513 = smul.u32 16, %s24
        $region84: #{tpu_custom_call.1} parent=67 // pred_fallthru
          _
      $region68: #{tpu_custom_call.1} parent=5 // pred_fallthru
        _
      %p514 = scmp.le.s32.totalorder 1, %s24
      %p515 = scmp.lt.s32.totalorder %s24, 3
      %p516 = pnand %p514, %p515
      %p517 = pneg %p516
      // Predicated region
      $region85: #{tpu_custom_call.1} parent=5 // pred_check
        _
      $region86: #{tpu_custom_call.1} parent=5 // pred_check_branch
        %519 = sbr.rel (%p516) target = $region88
      $region87: #{tpu_custom_call.1} parent=5 // pred_region
        %s520 = ssub.s32 %s24, 1
        %p521 = pneg %p45
        %p522 = pneg %p42
        %s523 = smul.u32 16, %s29
        %p524 = scmp.lt.s32.totalorder %s523, 31
        %s525 = scalar_select %p524, %s523, 31
        %s526 = smul.addr %s525, 8
        %s527 = scalar_lea.vmem %s1, %s526
        %p528 = pneg %p71
        %p529 = pneg %p68
        %s530 = smul.u32 16, %s29
        %p531 = scmp.lt.s32.totalorder %s530, 31
        %s532 = scalar_select %p531, %s530, 31
        %s533 = smul.addr %s532, 3
        %s534 = smul.addr %s533, 8
        %s535 = scalar_lea.vmem %s2, %s534
        %p536 = pneg %p97
        %p537 = pneg %p94
        %p538 = scmp.lt.s32.totalorder %s29, 1
        %s539 = scalar_select %p538, %s29, 1
        %s540 = scalar_lea.vmem %s3, %s539
        %p541 = pneg %p123
        %p542 = pneg %p120
        %s543 = smul.u32 16, %s29
        %p544 = scmp.lt.s32.totalorder %s543, 31
        %s545 = scalar_select %p544, %s543, 31
        %s546 = smul.addr %s545, 8
        %s547 = scalar_lea.vmem %s4, %s546
        %p548 = pneg %p149
        %p549 = pneg %p146
        %p550 = pneg %p170
        %p551 = pneg %p167
        %p552 = pneg %p191
        %p553 = pneg %p188
        %p554 = pneg %p212
        %p555 = pneg %p209
        %p556 = pneg %p233
        %p557 = pneg %p230
        %p558 = pneg %p254
        %p559 = pneg %p251
        %p560 = pneg %p275
        %p561 = pneg %p272
        %p562 = pneg %p296
        %p563 = pneg %p293
        %p564 = pneg %p317
        %p565 = pneg %p314
        %p566 = pneg %p338
        %p567 = pneg %p335
        %p568 = pneg %p359
        %p569 = pneg %p356
        %p570 = pneg %p380
        %p571 = pneg %p377
        %p572 = pneg %p401
        %p573 = pneg %p398
        %p574 = pneg %p422
        %p575 = pneg %p419
        %s576 = smul.u32 16, %s29
        %p577 = scmp.lt.s32.totalorder %s576, 31
        %s578 = scalar_select %p577, %s576, 31
        %s579 = smul.addr %s578, 8
        %s580 = scalar_lea.vmem %s1, %s579
        %s581 = smul.u32 16, %s29
        %s582 = smul.u32 16, %s29
        %p583 = scmp.lt.s32.totalorder %s582, 31
        %s584 = scalar_select %p583, %s582, 31
        %s585 = smul.addr %s584, 3
        %s586 = smul.addr %s585, 8
        %s587 = scalar_lea.vmem %s2, %s586
        %s588 = smul.u32 16, %s29
        %p589 = scmp.lt.s32.totalorder %s29, 1
        %s590 = scalar_select %p589, %s29, 1
        %s591 = scalar_lea.vmem %s3, %s590
        %s592 = smul.u32 16, %s29
        %p593 = scmp.lt.s32.totalorder %s592, 31
        %s594 = scalar_select %p593, %s592, 31
        %s595 = smul.addr %s594, 8
        %s596 = scalar_lea.vmem %s4, %s595
        %s597 = smul.u32 16, %s29
        %p599 = scmp.eq.s32.totalorder %s29, 0
        // Predicated region
        $region89: #{tpu_custom_call.1} parent=87 // pred_check
          %p600 = pneg %p599
        $region90: #{tpu_custom_call.1} parent=87 // pred_check_branch
          %602 = sbr.rel (%p600) target = $region92
        $region91: #{tpu_custom_call.1} parent=87 // pred_region
          %v603 = vld [vmem:[%s0] sm:$0xff]
          %v604 = vld [vmem:[%s0 + $0x8] sm:$0xff]
          %607 = vrot.lane.b32.xlu0 %v603, 32
          %v608 = vpop.permute.xlu0 %607
          %609 = vrot.lane.b32.xlu0 %v604, 32
          %v610 = vpop.permute.xlu0 %609
          %613 = vrot.lane.b32.xlu0 %v603, 64
          %v614 = vpop.permute.xlu0 %613
          %615 = vrot.lane.b32.xlu0 %v604, 64
          %v616 = vpop.permute.xlu0 %615
          %619 = vrot.lane.b32.xlu0 %v603, 96
          %v620 = vpop.permute.xlu0 %619
          %621 = vrot.lane.b32.xlu0 %v604, 96
          %v622 = vpop.permute.xlu0 %621
          %vm625 = vcmask 261120
          %v626 = vsel %vm625, %v603, %v608
          %v627 = vsel %vm625, %v604, %v610
          %vm628 = vcmask 523264
          %v629 = vsel %vm628, %v626, %v614
          %v630 = vsel %vm628, %v627, %v616
          %vm631 = vcmask 785408
          %v632 = vsel %vm631, %v629, %v620
          %v633 = vsel %vm631, %v630, %v622
          %v634 = vld [vmem:[%s7] sm:$0x1]
          %v635 = vld [vmem:[%s8] sm:$0x1]
          %v637 = vlaneseq
          %v638 = vshrl.u32 %v637, 7
          %v639 = vsub.s32 0, %v638
          %v640 = vrot.slane %v635, %v639
          %v642 = vmul.f32 %v640, %v632
          %v643 = vmul.f32 %v640, %v633
          %v645 = vlaneseq
          %v646 = vshrl.u32 %v645, 7
          %v647 = vsub.s32 0, %v646
          %v648 = vrot.slane %v634, %v647
          %v650 = vmul.f32 %v648, %v642
          %v651 = vmul.f32 %v648, %v643
          %v652 = vsub.f32 0.0, %v642
          %v653 = vsub.f32 0.0, %v643
          %v654 = vmul.f32 %v652, 1.442695
          %v655 = vpow.pop %v654
          %v656 = vmul.f32 %v653, 1.442695
          %v657 = vpow.pop %v656
          %v658 = vadd.f32 %v655, 1.0
          %v659 = vadd.f32 %v657, 1.0
          %v660 = vrcp.pop %v658
          %v661 = vmul.f32 1.0, %v660
          %v662 = vrcp.pop %v659
          %v663 = vmul.f32 1.0, %v662
          %v664 = vmul.f32 %v650, %v661
          %v665 = vmul.f32 %v651, %v663
          %v666 = vld [vmem:[%s5] sm:$0xff]
          %v667 = vld [vmem:[%s5 + $0x8] sm:$0xff]
          %v668 = vld [vmem:[%s5 + $0x10] sm:$0xff]
          %v669 = vld [vmem:[%s5 + $0x18] sm:$0xff]
          %v670 = vld [vmem:[%s5 + $0x20] sm:$0xff]
          %v671 = vld [vmem:[%s5 + $0x28] sm:$0xff]
          %v672 = vld [vmem:[%s5 + $0x30] sm:$0xff]
          %v673 = vld [vmem:[%s5 + $0x38] sm:$0xff]
          %v674 = vld [vmem:[%s5 + $0x40] sm:$0xff]
          %v675 = vld [vmem:[%s5 + $0x48] sm:$0xff]
          %v676 = vld [vmem:[%s5 + $0x50] sm:$0xff]
          %v677 = vld [vmem:[%s5 + $0x58] sm:$0xff]
          %v678 = vld [vmem:[%s5 + $0x60] sm:$0xff]
          %v679 = vld [vmem:[%s5 + $0x68] sm:$0xff]
          %v680 = vld [vmem:[%s5 + $0x70] sm:$0xff]
          %v681 = vld [vmem:[%s5 + $0x78] sm:$0xff]
          %v682 = vld [vmem:[%s6] sm:$0x1]
          %v684 = vlaneseq
          %v685 = vshrl.u32 %v684, 7
          %v686 = vsub.s32 0, %v685
          %v687 = vrot.slane %v682, %v686
          %689 = vmatprep.subr.mxu0 0.0
          %690 = vmatpush1.msra.mxu0 %v666
          %691 = vmatprep.subr.mxu0 0.0
          %692 = vmatpush1.msra.mxu0 %v667
          %693 = vmatprep.subr.mxu0 0.0
          %694 = vmatpush1.msra.mxu0 %v668
          %695 = vmatprep.subr.mxu0 0.0
          %696 = vmatpush1.msra.mxu0 %v669
          %697 = vmatprep.subr.mxu0 0.0
          %698 = vmatpush1.msra.mxu0 %v670
          %699 = vmatprep.subr.mxu0 0.0
          %700 = vmatpush1.msra.mxu0 %v671
          %701 = vmatprep.subr.mxu0 0.0
          %702 = vmatpush1.msra.mxu0 %v672
          %703 = vmatprep.subr.mxu0 0.0
          %704 = vmatpush1.msra.mxu0 %v673
          %705 = vmatprep.subr.mxu0 0.0
          %706 = vmatpush1.msra.mxu0 %v674
          %707 = vmatprep.subr.mxu0 0.0
          %708 = vmatpush1.msra.mxu0 %v675
          %709 = vmatprep.subr.mxu0 0.0
          %710 = vmatpush1.msra.mxu0 %v676
          %711 = vmatprep.subr.mxu0 0.0
          %712 = vmatpush1.msra.mxu0 %v677
          %713 = vmatprep.subr.mxu0 0.0
          %714 = vmatpush1.msra.mxu0 %v678
          %715 = vmatprep.subr.mxu0 0.0
          %716 = vmatpush1.msra.mxu0 %v679
          %717 = vmatprep.subr.mxu0 0.0
          %718 = vmatpush1.msra.mxu0 %v680
          %719 = vmatprep.subr.mxu0 0.0
          %720 = vmatpush1.msra.mxu0 %v681
          %721 = vmatprep.subr.mxu0 0.0
          %722 = vmatpush1.msra.mxu0 0.0
          %723 = vmatprep.subr.mxu0 0.0
          %724 = vmatpush1.msra.mxu0 0.0
          %725 = vmatprep.subr.mxu0 0.0
          %726 = vmatpush1.msra.mxu0 0.0
          %727 = vmatprep.subr.mxu0 0.0
          %728 = vmatpush1.msra.mxu0 0.0
          %729 = vmatprep.subr.mxu0 0.0
          %730 = vmatpush1.msra.mxu0 0.0
          %731 = vmatprep.subr.mxu0 0.0
          %732 = vmatpush1.msra.mxu0 0.0
          %733 = vmatprep.subr.mxu0 0.0
          %734 = vmatpush1.msra.mxu0 0.0
          %735 = vmatprep.subr.mxu0 0.0
          %736 = vmatpush1.msra.mxu0 0.0
          %737 = vmatprep.subr.mxu0 0.0
          %738 = vmatpush1.msra.mxu0 0.0
          %739 = vmatprep.subr.mxu0 0.0
          %740 = vmatpush1.msra.mxu0 0.0
          %741 = vmatprep.subr.mxu0 0.0
          %742 = vmatpush1.msra.mxu0 0.0
          %743 = vmatprep.subr.mxu0 0.0
          %744 = vmatpush1.msra.mxu0 0.0
          %745 = vmatprep.subr.mxu0 0.0
          %746 = vmatpush1.msra.mxu0 0.0
          %747 = vmatprep.subr.mxu0 0.0
          %748 = vmatpush1.msra.mxu0 0.0
          %749 = vmatprep.subr.mxu0 0.0
          %750 = vmatpush1.msra.mxu0 0.0
          %751 = vmatprep.subr.mxu0 0.0
          %752 = vmatpush1.msra.mxu0 0.0
          %753 = vmatprep.mubr.f32.mxu0 0.0
          %754 = vmatmul.mubr.f32.gmra.mrb[0].mxu0 %v664
          %v755 = vpop.f32.mrb[0].mxu0
          %v756 = vadd.f32 %v687, %v755
          %v757 = vpop.f32.mrb[0].mxu0
          %758 = vmatprep.mubr.f32.mxu0 0.0
          %759 = vmatmul.mubr.f32.gmra.mrb[0].mxu0 %v665
          %v760 = vpop.f32.mrb[0].mxu0
          %v761 = vadd.f32 %v687, %v760
          %v762 = vpop.f32.mrb[0].mxu0
          %763 = vdwg.mxu0
          %s764 = scalar_lea.vmem %s7, 1
          %v765 = vld [vmem:[%s764] sm:$0x1]
          %s766 = scalar_lea.vmem %s8, 1
          %v767 = vld [vmem:[%s766] sm:$0x1]
          %v769 = vlaneseq
          %v770 = vshrl.u32 %v769, 7
          %v771 = vsub.s32 0, %v770
          %v772 = vrot.slane %v767, %v771
          %v774 = vmul.f32 %v772, %v756
          %v775 = vmul.f32 %v772, %v761
          %v777 = vlaneseq
          %v778 = vshrl.u32 %v777, 7
          %v779 = vsub.s32 0, %v778
          %v780 = vrot.slane %v765, %v779
          %v782 = vmul.f32 %v780, %v774
          %v783 = vmul.f32 %v780, %v775
          %v784 = vsub.f32 0.0, %v774
          %v785 = vsub.f32 0.0, %v775
          %v786 = vmul.f32 %v784, 1.442695
          %v787 = vpow.pop %v786
          %v788 = vmul.f32 %v785, 1.442695
          %v789 = vpow.pop %v788
          %v790 = vadd.f32 %v787, 1.0
          %v791 = vadd.f32 %v789, 1.0
          %v792 = vrcp.pop %v790
          %v793 = vmul.f32 1.0, %v792
          %v794 = vrcp.pop %v791
          %v795 = vmul.f32 1.0, %v794
          %v796 = vmul.f32 %v782, %v793
          %v797 = vmul.f32 %v783, %v795
          %s798 = scalar_lea.vmem %s5, 128
          %v799 = vld [vmem:[%s798] sm:$0xff]
          %v800 = vld [vmem:[%s798 + $0x8] sm:$0xff]
          %v801 = vld [vmem:[%s798 + $0x10] sm:$0xff]
          %v802 = vld [vmem:[%s798 + $0x18] sm:$0xff]
          %v803 = vld [vmem:[%s798 + $0x20] sm:$0xff]
          %v804 = vld [vmem:[%s798 + $0x28] sm:$0xff]
          %v805 = vld [vmem:[%s798 + $0x30] sm:$0xff]
          %v806 = vld [vmem:[%s798 + $0x38] sm:$0xff]
          %v807 = vld [vmem:[%s798 + $0x40] sm:$0xff]
          %v808 = vld [vmem:[%s798 + $0x48] sm:$0xff]
          %v809 = vld [vmem:[%s798 + $0x50] sm:$0xff]
          %v810 = vld [vmem:[%s798 + $0x58] sm:$0xff]
          %v811 = vld [vmem:[%s798 + $0x60] sm:$0xff]
          %v812 = vld [vmem:[%s798 + $0x68] sm:$0xff]
          %v813 = vld [vmem:[%s798 + $0x70] sm:$0xff]
          %v814 = vld [vmem:[%s798 + $0x78] sm:$0xff]
          %s815 = scalar_lea.vmem %s6, 1
          %v816 = vld [vmem:[%s815] sm:$0x1]
          %v818 = vlaneseq
          %v819 = vshrl.u32 %v818, 7
          %v820 = vsub.s32 0, %v819
          %v821 = vrot.slane %v816, %v820
          %823 = vmatprep.subr.mxu0 0.0
          %824 = vmatpush1.msra.mxu0 %v799
          %825 = vmatprep.subr.mxu0 0.0
          %826 = vmatpush1.msra.mxu0 %v800
          %827 = vmatprep.subr.mxu0 0.0
          %828 = vmatpush1.msra.mxu0 %v801
          %829 = vmatprep.subr.mxu0 0.0
          %830 = vmatpush1.msra.mxu0 %v802
          %831 = vmatprep.subr.mxu0 0.0
          %832 = vmatpush1.msra.mxu0 %v803
          %833 = vmatprep.subr.mxu0 0.0
          %834 = vmatpush1.msra.mxu0 %v804
          %835 = vmatprep.subr.mxu0 0.0
          %836 = vmatpush1.msra.mxu0 %v805
          %837 = vmatprep.subr.mxu0 0.0
          %838 = vmatpush1.msra.mxu0 %v806
          %839 = vmatprep.subr.mxu0 0.0
          %840 = vmatpush1.msra.mxu0 %v807
          %841 = vmatprep.subr.mxu0 0.0
          %842 = vmatpush1.msra.mxu0 %v808
          %843 = vmatprep.subr.mxu0 0.0
          %844 = vmatpush1.msra.mxu0 %v809
          %845 = vmatprep.subr.mxu0 0.0
          %846 = vmatpush1.msra.mxu0 %v810
          %847 = vmatprep.subr.mxu0 0.0
          %848 = vmatpush1.msra.mxu0 %v811
          %849 = vmatprep.subr.mxu0 0.0
          %850 = vmatpush1.msra.mxu0 %v812
          %851 = vmatprep.subr.mxu0 0.0
          %852 = vmatpush1.msra.mxu0 %v813
          %853 = vmatprep.subr.mxu0 0.0
          %854 = vmatpush1.msra.mxu0 %v814
          %855 = vmatprep.subr.mxu0 0.0
          %856 = vmatpush1.msra.mxu0 0.0
          %857 = vmatprep.subr.mxu0 0.0
          %858 = vmatpush1.msra.mxu0 0.0
          %859 = vmatprep.subr.mxu0 0.0
          %860 = vmatpush1.msra.mxu0 0.0
          %861 = vmatprep.subr.mxu0 0.0
          %862 = vmatpush1.msra.mxu0 0.0
          %863 = vmatprep.subr.mxu0 0.0
          %864 = vmatpush1.msra.mxu0 0.0
          %865 = vmatprep.subr.mxu0 0.0
          %866 = vmatpush1.msra.mxu0 0.0
          %867 = vmatprep.subr.mxu0 0.0
          %868 = vmatpush1.msra.mxu0 0.0
          %869 = vmatprep.subr.mxu0 0.0
          %870 = vmatpush1.msra.mxu0 0.0
          %871 = vmatprep.subr.mxu0 0.0
          %872 = vmatpush1.msra.mxu0 0.0
          %873 = vmatprep.subr.mxu0 0.0
          %874 = vmatpush1.msra.mxu0 0.0
          %875 = vmatprep.subr.mxu0 0.0
          %876 = vmatpush1.msra.mxu0 0.0
          %877 = vmatprep.subr.mxu0 0.0
          %878 = vmatpush1.msra.mxu0 0.0
          %879 = vmatprep.subr.mxu0 0.0
          %880 = vmatpush1.msra.mxu0 0.0
          %881 = vmatprep.subr.mxu0 0.0
          %882 = vmatpush1.msra.mxu0 0.0
          %883 = vmatprep.subr.mxu0 0.0
          %884 = vmatpush1.msra.mxu0 0.0
          %885 = vmatprep.subr.mxu0 0.0
          %886 = vmatpush1.msra.mxu0 0.0
          %887 = vmatprep.mubr.f32.mxu0 0.0
          %888 = vmatmul.mubr.f32.gmra.mrb[0].mxu0 %v796
          %v889 = vpop.f32.mrb[0].mxu0
          %v890 = vadd.f32 %v821, %v889
          %v891 = vpop.f32.mrb[0].mxu0
          %892 = vmatprep.mubr.f32.mxu0 0.0
          %893 = vmatmul.mubr.f32.gmra.mrb[0].mxu0 %v797
          %v894 = vpop.f32.mrb[0].mxu0
          %v895 = vadd.f32 %v821, %v894
          %v896 = vpop.f32.mrb[0].mxu0
          %897 = vdwg.mxu0
          %v898 = vadd.f32 %v632, %v890
          %v899 = vadd.f32 %v633, %v895
          %s900 = scalar_lea.vmem %s7, 2
          %v901 = vld [vmem:[%s900] sm:$0x1]
          %s902 = scalar_lea.vmem %s8, 2
          %v903 = vld [vmem:[%s902] sm:$0x1]
          %v905 = vlaneseq
          %v906 = vshrl.u32 %v905, 7
          %v907 = vsub.s32 0, %v906
          %v908 = vrot.slane %v903, %v907
          %v910 = vmul.f32 %v908, %v898
          %v911 = vmul.f32 %v908, %v899
          %v913 = vlaneseq
          %v914 = vshrl.u32 %v913, 7
          %v915 = vsub.s32 0, %v914
          %v916 = vrot.slane %v901, %v915
          %v918 = vmul.f32 %v916, %v910
          %v919 = vmul.f32 %v916, %v911
          %v920 = vsub.f32 0.0, %v910
          %v921 = vsub.f32 0.0, %v911
          %v922 = vmul.f32 %v920, 1.442695
          %v923 = vpow.pop %v922
          %v924 = vmul.f32 %v921, 1.442695
          %v925 = vpow.pop %v924
          %v926 = vadd.f32 %v923, 1.0
          %v927 = vadd.f32 %v925, 1.0
          %v928 = vrcp.pop %v926
          %v929 = vmul.f32 1.0, %v928
          %v930 = vrcp.pop %v927
          %v931 = vmul.f32 1.0, %v930
          %v932 = vmul.f32 %v918, %v929
          %v933 = vmul.f32 %v919, %v931
          %v934 = vld [vmem:[%s9] sm:$0xff]
          %v935 = vld [vmem:[%s9 + $0x8] sm:$0xff]
          %v936 = vld [vmem:[%s9 + $0x10] sm:$0xff]
          %v937 = vld [vmem:[%s9 + $0x18] sm:$0xff]
          %v938 = vld [vmem:[%s9 + $0x20] sm:$0xff]
          %v939 = vld [vmem:[%s9 + $0x28] sm:$0xff]
          %v940 = vld [vmem:[%s9 + $0x30] sm:$0xff]
          %v941 = vld [vmem:[%s9 + $0x38] sm:$0xff]
          %v942 = vld [vmem:[%s9 + $0x40] sm:$0xff]
          %v943 = vld [vmem:[%s9 + $0x48] sm:$0xff]
          %v944 = vld [vmem:[%s9 + $0x50] sm:$0xff]
          %v945 = vld [vmem:[%s9 + $0x58] sm:$0xff]
          %v946 = vld [vmem:[%s9 + $0x60] sm:$0xff]
          %v947 = vld [vmem:[%s9 + $0x68] sm:$0xff]
          %v948 = vld [vmem:[%s9 + $0x70] sm:$0xff]
          %v949 = vld [vmem:[%s9 + $0x78] sm:$0xff]
          %v950 = vld [vmem:[%s9 + $0x80] sm:$0xff]
          %v951 = vld [vmem:[%s9 + $0x88] sm:$0xff]
          %v952 = vld [vmem:[%s9 + $0x90] sm:$0xff]
          %v953 = vld [vmem:[%s9 + $0x98] sm:$0xff]
          %v954 = vld [vmem:[%s9 + $0xa0] sm:$0xff]
          %v955 = vld [vmem:[%s9 + $0xa8] sm:$0xff]
          %v956 = vld [vmem:[%s9 + $0xb0] sm:$0xff]
          %v957 = vld [vmem:[%s9 + $0xb8] sm:$0xff]
          %v958 = vld [vmem:[%s9 + $0xc0] sm:$0xff]
          %v959 = vld [vmem:[%s9 + $0xc8] sm:$0xff]
          %v960 = vld [vmem:[%s9 + $0xd0] sm:$0xff]
          %v961 = vld [vmem:[%s9 + $0xd8] sm:$0xff]
          %v962 = vld [vmem:[%s9 + $0xe0] sm:$0xff]
          %v963 = vld [vmem:[%s9 + $0xe8] sm:$0xff]
          %v964 = vld [vmem:[%s9 + $0xf0] sm:$0xff]
          %v965 = vld [vmem:[%s9 + $0xf8] sm:$0xff]
          %v966 = vld [vmem:[%s9 + $0x100] sm:$0xff]
          %v967 = vld [vmem:[%s9 + $0x108] sm:$0xff]
          %v968 = vld [vmem:[%s9 + $0x110] sm:$0xff]
          %v969 = vld [vmem:[%s9 + $0x118] sm:$0xff]
          %v970 = vld [vmem:[%s9 + $0x120] sm:$0xff]
          %v971 = vld [vmem:[%s9 + $0x128] sm:$0xff]
          %v972 = vld [vmem:[%s9 + $0x130] sm:$0xff]
          %v973 = vld [vmem:[%s9 + $0x138] sm:$0xff]
          %v974 = vld [vmem:[%s9 + $0x140] sm:$0xff]
          %v975 = vld [vmem:[%s9 + $0x148] sm:$0xff]
          %v976 = vld [vmem:[%s9 + $0x150] sm:$0xff]
          %v977 = vld [vmem:[%s9 + $0x158] sm:$0xff]
          %v978 = vld [vmem:[%s9 + $0x160] sm:$0xff]
          %v979 = vld [vmem:[%s9 + $0x168] sm:$0xff]
          %v980 = vld [vmem:[%s9 + $0x170] sm:$0xff]
          %v981 = vld [vmem:[%s9 + $0x178] sm:$0xff]
          %v982 = vld [vmem:[%s10] sm:$0x7]
          %v984 = vlaneseq
          %v985 = vshrl.u32 %v984, 7
          %v986 = vsub.s32 0, %v985
          %v987 = vrot.slane %v982, %v986
          %v988 = vlaneseq
          %v989 = vshrl.u32 %v988, 7
          %v990 = vsub.s32 1, %v989
          %v991 = vrot.slane %v982, %v990
          %v992 = vlaneseq
          %v993 = vshrl.u32 %v992, 7
          %v994 = vsub.s32 2, %v993
          %v995 = vrot.slane %v982, %v994
          %999 = vmatprep.subr.mxu0 %v935
          %1000 = vmatpush1.msra.mxu0 %v934
          %1001 = vmatprep.subr.mxu0 %v938
          %1002 = vmatpush1.msra.mxu0 %v937
          %1003 = vmatprep.subr.mxu0 %v941
          %1004 = vmatpush1.msra.mxu0 %v940
          %1005 = vmatprep.subr.mxu0 %v944
          %1006 = vmatpush1.msra.mxu0 %v943
          %1007 = vmatprep.subr.mxu0 %v947
          %1008 = vmatpush1.msra.mxu0 %v946
          %1009 = vmatprep.subr.mxu0 %v950
          %1010 = vmatpush1.msra.mxu0 %v949
          %1011 = vmatprep.subr.mxu0 %v953
          %1012 = vmatpush1.msra.mxu0 %v952
          %1013 = vmatprep.subr.mxu0 %v956
          %1014 = vmatpush1.msra.mxu0 %v955
          %1015 = vmatprep.subr.mxu0 %v959
          %1016 = vmatpush1.msra.mxu0 %v958
          %1017 = vmatprep.subr.mxu0 %v962
          %1018 = vmatpush1.msra.mxu0 %v961
          %1019 = vmatprep.subr.mxu0 %v965
          %1020 = vmatpush1.msra.mxu0 %v964
          %1021 = vmatprep.subr.mxu0 %v968
          %1022 = vmatpush1.msra.mxu0 %v967
          %1023 = vmatprep.subr.mxu0 %v971
          %1024 = vmatpush1.msra.mxu0 %v970
          %1025 = vmatprep.subr.mxu0 %v974
          %1026 = vmatpush1.msra.mxu0 %v973
          %1027 = vmatprep.subr.mxu0 %v977
          %1028 = vmatpush1.msra.mxu0 %v976
          %1029 = vmatprep.subr.mxu0 %v980
          %1030 = vmatpush1.msra.mxu0 %v979
          %1031 = vmatprep.subr.mxu0 0.0
          %1032 = vmatpush1.msra.mxu0 0.0
          %1033 = vmatprep.subr.mxu0 0.0
          %1034 = vmatpush1.msra.mxu0 0.0
          %1035 = vmatprep.subr.mxu0 0.0
          %1036 = vmatpush1.msra.mxu0 0.0
          %1037 = vmatprep.subr.mxu0 0.0
          %1038 = vmatpush1.msra.mxu0 0.0
          %1039 = vmatprep.subr.mxu0 0.0
          %1040 = vmatpush1.msra.mxu0 0.0
          %1041 = vmatprep.subr.mxu0 0.0
          %1042 = vmatpush1.msra.mxu0 0.0
          %1043 = vmatprep.subr.mxu0 0.0
          %1044 = vmatpush1.msra.mxu0 0.0
          %1045 = vmatprep.subr.mxu0 0.0
          %1046 = vmatpush1.msra.mxu0 0.0
          %1047 = vmatprep.subr.mxu0 0.0
          %1048 = vmatpush1.msra.mxu0 0.0
          %1049 = vmatprep.subr.mxu0 0.0
          %1050 = vmatpush1.msra.mxu0 0.0
          %1051 = vmatprep.subr.mxu0 0.0
          %1052 = vmatpush1.msra.mxu0 0.0
          %1053 = vmatprep.subr.mxu0 0.0
          %1054 = vmatpush1.msra.mxu0 0.0
          %1055 = vmatprep.subr.mxu0 0.0
          %1056 = vmatpush1.msra.mxu0 0.0
          %1057 = vmatprep.subr.mxu0 0.0
          %1058 = vmatpush1.msra.mxu0 0.0
          %1059 = vmatprep.subr.mxu0 0.0
          %1060 = vmatpush1.msra.mxu0 0.0
          %1061 = vmatprep.subr.mxu0 0.0
          %1062 = vmatpush1.msra.mxu0 0.0
          %1063 = vmatprep.mubr.f32.mxu0 0.0
          %1064 = vmatmul.mubr.f32.gmra.mrb[0].mxu0 %v932
          %v1065 = vpop.f32.mrb[0].mxu0
          %v1066 = vadd.f32 %v987, %v1065
          %v1067 = vpop.f32.mrb[0].mxu0
          %v1068 = vadd.f32 %v991, %v1067
          %1069 = vmatprep.mubr.f32.mxu0 0.0
          %1070 = vmatmul.mubr.f32.gmra.mrb[0].mxu0 %v933
          %v1071 = vpop.f32.mrb[0].mxu0
          %v1072 = vadd.f32 %v987, %v1071
          %v1073 = vpop.f32.mrb[0].mxu0
          %v1074 = vadd.f32 %v991, %v1073
          %1075 = vdwg.mxu0
          %1076 = vmatprep.subr.mxu0 0.0
          %1077 = vmatpush1.msra.mxu0 %v936
          %1078 = vmatprep.subr.mxu0 0.0
          %1079 = vmatpush1.msra.mxu0 %v939
          %1080 = vmatprep.subr.mxu0 0.0
          %1081 = vmatpush1.msra.mxu0 %v942
          %1082 = vmatprep.subr.mxu0 0.0
          %1083 = vmatpush1.msra.mxu0 %v945
          %1084 = vmatprep.subr.mxu0 0.0
          %1085 = vmatpush1.msra.mxu0 %v948
          %1086 = vmatprep.subr.mxu0 0.0
          %1087 = vmatpush1.msra.mxu0 %v951
          %1088 = vmatprep.subr.mxu0 0.0
          %1089 = vmatpush1.msra.mxu0 %v954
          %1090 = vmatprep.subr.mxu0 0.0
          %1091 = vmatpush1.msra.mxu0 %v957
          %1092 = vmatprep.subr.mxu0 0.0
          %1093 = vmatpush1.msra.mxu0 %v960
          %1094 = vmatprep.subr.mxu0 0.0
          %1095 = vmatpush1.msra.mxu0 %v963
          %1096 = vmatprep.subr.mxu0 0.0
          %1097 = vmatpush1.msra.mxu0 %v966
          %1098 = vmatprep.subr.mxu0 0.0
          %1099 = vmatpush1.msra.mxu0 %v969
          %1100 = vmatprep.subr.mxu0 0.0
          %1101 = vmatpush1.msra.mxu0 %v972
          %1102 = vmatprep.subr.mxu0 0.0
          %1103 = vmatpush1.msra.mxu0 %v975
          %1104 = vmatprep.subr.mxu0 0.0
          %1105 = vmatpush1.msra.mxu0 %v978
          %1106 = vmatprep.subr.mxu0 0.0
          %1107 = vmatpush1.msra.mxu0 %v981
          %1108 = vmatprep.subr.mxu0 0.0
          %1109 = vmatpush1.msra.mxu0 0.0
          %1110 = vmatprep.subr.mxu0 0.0
          %1111 = vmatpush1.msra.mxu0 0.0
          %1112 = vmatprep.subr.mxu0 0.0
          %1113 = vmatpush1.msra.mxu0 0.0
          %1114 = vmatprep.subr.mxu0 0.0
          %1115 = vmatpush1.msra.mxu0 0.0
          %1116 = vmatprep.subr.mxu0 0.0
          %1117 = vmatpush1.msra.mxu0 0.0
          %1118 = vmatprep.subr.mxu0 0.0
          %1119 = vmatpush1.msra.mxu0 0.0
          %1120 = vmatprep.subr.mxu0 0.0
          %1121 = vmatpush1.msra.mxu0 0.0
          %1122 = vmatprep.subr.mxu0 0.0
          %1123 = vmatpush1.msra.mxu0 0.0
          %1124 = vmatprep.subr.mxu0 0.0
          %1125 = vmatpush1.msra.mxu0 0.0
          %1126 = vmatprep.subr.mxu0 0.0
          %1127 = vmatpush1.msra.mxu0 0.0
          %1128 = vmatprep.subr.mxu0 0.0
          %1129 = vmatpush1.msra.mxu0 0.0
          %1130 = vmatprep.subr.mxu0 0.0
          %1131 = vmatpush1.msra.mxu0 0.0
          %1132 = vmatprep.subr.mxu0 0.0
          %1133 = vmatpush1.msra.mxu0 0.0
          %1134 = vmatprep.subr.mxu0 0.0
          %1135 = vmatpush1.msra.mxu0 0.0
          %1136 = vmatprep.subr.mxu0 0.0
          %1137 = vmatpush1.msra.mxu0 0.0
          %1138 = vmatprep.subr.mxu0 0.0
          %1139 = vmatpush1.msra.mxu0 0.0
          %1140 = vmatprep.mubr.f32.mxu0 0.0
          %1141 = vmatmul.mubr.f32.gmra.mrb[0].mxu0 %v932
          %v1142 = vpop.f32.mrb[0].mxu0
          %v1143 = vadd.f32 %v995, %v1142
          %v1144 = vpop.f32.mrb[0].mxu0
          %1145 = vmatprep.mubr.f32.mxu0 0.0
          %1146 = vmatmul.mubr.f32.gmra.mrb[0].mxu0 %v933
          %v1147 = vpop.f32.mrb[0].mxu0
          %v1148 = vadd.f32 %v995, %v1147
          %v1149 = vpop.f32.mrb[0].mxu0
          %1150 = vdwg.mxu0
          %1151 = vst.msk [vmem:[#allocation2] sm:$0xff] %vm625, %v1066
          %1152 = vst.msk [vmem:[#allocation2 + $0x8] sm:$0xff] %vm625, %v1072
          %v1153 = vpack.c.bf16 %v1072, %v1066
          %v1154 = vpack.c.bf16 %v1074, %v1068
          %v1155 = vpack.c.bf16 %v1148, %v1143
          %1159 = vrot.lane.b32.xlu0 %v1153, 96
          %v1160 = vpop.permute.xlu0 %1159
          %1161 = vrot.lane.b32.xlu0 %v1154, 96
          %v1162 = vpop.permute.xlu0 %1161
          %1163 = vrot.lane.b32.xlu0 %v1155, 96
          %v1164 = vpop.permute.xlu0 %1163
          %vm1165 = vcmask 785408
          %v1166 = vsel %vm1165, %v1160, %v1162
          %v1167 = vsel %vm1165, %v1162, %v1164
          %1171 = vst [vmem:[#allocation3] sm:$0xff] %v1166
          %1172 = vst [vmem:[#allocation3 + $0x8] sm:$0xff] %v1167
          %1173 = vst.msk [vmem:[#allocation3 + $0x10] sm:$0xff] %vm625, %v1164
          %1174 = vst [vmem:[#allocation4] sm:$0xff] 0.0
          %1175 = vst [vmem:[#allocation4 + $0x8] sm:$0xff] 0.0
          %1176 = vst.msk [vmem:[#allocation4 + $0x10] sm:$0xff] %vm625, 0.0
          %1177 = vst [vmem:[#allocation4 + $0x18] sm:$0xff] 0.0
          %1178 = vst [vmem:[#allocation4 + $0x20] sm:$0xff] 0.0
          %1179 = vst.msk [vmem:[#allocation4 + $0x28] sm:$0xff] %vm625, 0.0
        $region92: #{tpu_custom_call.1} parent=87 // pred_fallthru
          _
        %v1180 = vlaneseq
        %v1181 = vand.u32 %v1180, 127
        %v1182 = vld [vmem:[%s596] sm:$0xff]
        %v1183 = vld [vmem:[%s596 + $0x8] sm:$0xff]
        %v1184 = vld [vmem:[%s596 + $0x10] sm:$0xff]
        %v1185 = vld [vmem:[%s596 + $0x18] sm:$0xff]
        %v1186 = vld [vmem:[%s596 + $0x20] sm:$0xff]
        %v1187 = vld [vmem:[%s596 + $0x28] sm:$0xff]
        %v1188 = vld [vmem:[%s596 + $0x30] sm:$0xff]
        %v1189 = vld [vmem:[%s596 + $0x38] sm:$0xff]
        %v1190 = vld [vmem:[%s596 + $0x40] sm:$0xff]
        %v1191 = vld [vmem:[%s596 + $0x48] sm:$0xff]
        %v1192 = vld [vmem:[%s596 + $0x50] sm:$0xff]
        %v1193 = vld [vmem:[%s596 + $0x58] sm:$0xff]
        %v1194 = vld [vmem:[%s596 + $0x60] sm:$0xff]
        %v1195 = vld [vmem:[%s596 + $0x68] sm:$0xff]
        %v1196 = vld [vmem:[%s596 + $0x70] sm:$0xff]
        %v1197 = vld [vmem:[%s596 + $0x78] sm:$0xff]
        %1198 = vset.pattern.permute.xlu0 0
        %1199 = vperm.xlu0 %1198, %v1182
        %v1200 = vpop.permute.xlu0 %1199
        %1201 = vset.pattern.permute.xlu0 0
        %1202 = vperm.xlu0 %1201, %v1183
        %v1203 = vpop.permute.xlu0 %1202
        %1204 = vset.pattern.permute.xlu0 0
        %1205 = vperm.xlu0 %1204, %v1184
        %v1206 = vpop.permute.xlu0 %1205
        %1207 = vset.pattern.permute.xlu0 0
        %1208 = vperm.xlu0 %1207, %v1185
        %v1209 = vpop.permute.xlu0 %1208
        %1210 = vset.pattern.permute.xlu0 0
        %1211 = vperm.xlu0 %1210, %v1186
        %v1212 = vpop.permute.xlu0 %1211
        %1213 = vset.pattern.permute.xlu0 0
        %1214 = vperm.xlu0 %1213, %v1187
        %v1215 = vpop.permute.xlu0 %1214
        %1216 = vset.pattern.permute.xlu0 0
        %1217 = vperm.xlu0 %1216, %v1188
        %v1218 = vpop.permute.xlu0 %1217
        %1219 = vset.pattern.permute.xlu0 0
        %1220 = vperm.xlu0 %1219, %v1189
        %v1221 = vpop.permute.xlu0 %1220
        %1222 = vset.pattern.permute.xlu0 0
        %1223 = vperm.xlu0 %1222, %v1190
        %v1224 = vpop.permute.xlu0 %1223
        %1225 = vset.pattern.permute.xlu0 0
        %1226 = vperm.xlu0 %1225, %v1191
        %v1227 = vpop.permute.xlu0 %1226
        %1228 = vset.pattern.permute.xlu0 0
        %1229 = vperm.xlu0 %1228, %v1192
        %v1230 = vpop.permute.xlu0 %1229
        %1231 = vset.pattern.permute.xlu0 0
        %1232 = vperm.xlu0 %1231, %v1193
        %v1233 = vpop.permute.xlu0 %1232
        %1234 = vset.pattern.permute.xlu0 0
        %1235 = vperm.xlu0 %1234, %v1194
        %v1236 = vpop.permute.xlu0 %1235
        %1237 = vset.pattern.permute.xlu0 0
        %1238 = vperm.xlu0 %1237, %v1195
        %v1239 = vpop.permute.xlu0 %1238
        %1240 = vset.pattern.permute.xlu0 0
        %1241 = vperm.xlu0 %1240, %v1196
        %v1242 = vpop.permute.xlu0 %1241
        %1243 = vset.pattern.permute.xlu0 0
        %1244 = vperm.xlu0 %1243, %v1197
        %v1245 = vpop.permute.xlu0 %1244
        %vm1246 = vcmp.eq.s32.totalorder %v1181, %v1200
        %vm1247 = vcmp.eq.s32.totalorder %v1181, %v1203
        %vm1248 = vcmp.eq.s32.totalorder %v1181, %v1206
        %vm1249 = vcmp.eq.s32.totalorder %v1181, %v1209
        %vm1250 = vcmp.eq.s32.totalorder %v1181, %v1212
        %vm1251 = vcmp.eq.s32.totalorder %v1181, %v1215
        %vm1252 = vcmp.eq.s32.totalorder %v1181, %v1218
        %vm1253 = vcmp.eq.s32.totalorder %v1181, %v1221
        %vm1254 = vcmp.eq.s32.totalorder %v1181, %v1224
        %vm1255 = vcmp.eq.s32.totalorder %v1181, %v1227
        %vm1256 = vcmp.eq.s32.totalorder %v1181, %v1230
        %vm1257 = vcmp.eq.s32.totalorder %v1181, %v1233
        %vm1258 = vcmp.eq.s32.totalorder %v1181, %v1236
        %vm1259 = vcmp.eq.s32.totalorder %v1181, %v1239
        %vm1260 = vcmp.eq.s32.totalorder %v1181, %v1242
        %vm1261 = vcmp.eq.s32.totalorder %v1181, %v1245
        %v1262 = vsel %vm1246, 1, 0
        %v1263 = vsel %vm1247, 1, 0
        %v1264 = vsel %vm1248, 1, 0
        %v1265 = vsel %vm1249, 1, 0
        %v1266 = vsel %vm1250, 1, 0
        %v1267 = vsel %vm1251, 1, 0
        %v1268 = vsel %vm1252, 1, 0
        %v1269 = vsel %vm1253, 1, 0
        %v1270 = vsel %vm1254, 1, 0
        %v1271 = vsel %vm1255, 1, 0
        %v1272 = vsel %vm1256, 1, 0
        %v1273 = vsel %vm1257, 1, 0
        %v1274 = vsel %vm1258, 1, 0
        %v1275 = vsel %vm1259, 1, 0
        %v1276 = vsel %vm1260, 1, 0
        %v1277 = vsel %vm1261, 1, 0
        %v1278 = vcvt.s32.f32 %v1262
        %v1279 = vcvt.s32.f32 %v1263
        %v1280 = vcvt.s32.f32 %v1264
        %v1281 = vcvt.s32.f32 %v1265
        %v1282 = vcvt.s32.f32 %v1266
        %v1283 = vcvt.s32.f32 %v1267
        %v1284 = vcvt.s32.f32 %v1268
        %v1285 = vcvt.s32.f32 %v1269
        %v1286 = vcvt.s32.f32 %v1270
        %v1287 = vcvt.s32.f32 %v1271
        %v1288 = vcvt.s32.f32 %v1272
        %v1289 = vcvt.s32.f32 %v1273
        %v1290 = vcvt.s32.f32 %v1274
        %v1291 = vcvt.s32.f32 %v1275
        %v1292 = vcvt.s32.f32 %v1276
        %v1293 = vcvt.s32.f32 %v1277
        %v1294 = vpack.c.bf16 %v1279, %v1278
        %v1295 = vpack.c.bf16 %v1281, %v1280
        %v1296 = vpack.c.bf16 %v1283, %v1282
        %v1297 = vpack.c.bf16 %v1285, %v1284
        %v1298 = vpack.c.bf16 %v1287, %v1286
        %v1299 = vpack.c.bf16 %v1289, %v1288
        %v1300 = vpack.c.bf16 %v1291, %v1290
        %v1301 = vpack.c.bf16 %v1293, %v1292
        %v1302 = vlaneseq
        %v1303 = vshrl.u32 %v1302, 7
        %v1304 = vadd.s32 %v1303, 8
        %v1305 = vld [vmem:[%s591] sm:$0x1]
        %v1306 = vlaneseq
        %v1307 = vshrl.u32 %v1306, 7
        %v1308 = vsub.s32 0, %v1307
        %v1309 = vrot.slane %v1305, %v1308
        %vm1310 = vcmp.eq.s32.totalorder %v1303, %v1309
        %vm1311 = vcmp.eq.s32.totalorder %v1304, %v1309
        %v1312 = vsel %vm1310, 1, 0
        %v1313 = vsel %vm1311, 1, 0
        %v1314 = vcvt.s32.f32 %v1312
        %v1315 = vcvt.s32.f32 %v1313
        %v1316 = vpack.c.bf16 %v1315, %v1314
        %v1317 = vld [vmem:[#allocation3] sm:$0xff]
        %v1318 = vld [vmem:[#allocation3 + $0x8] sm:$0xff]
        %v1319 = vld [vmem:[#allocation3 + $0x10] sm:$0xff]
        %vm1320 = vcmask 130048
        %v1322 = vsel %vm1320, %v1294, 0
        %v1325 = vsel %vm1320, %v1295, 0
        %v1328 = vsel %vm1320, %v1296, 0
        %v1331 = vsel %vm1320, %v1297, 0
        %v1334 = vsel %vm1320, %v1298, 0
        %v1337 = vsel %vm1320, %v1299, 0
        %v1340 = vsel %vm1320, %v1300, 0
        %v1343 = vsel %vm1320, %v1301, 0
        %1345 = vmatprep.subr.bf16.mxu0 %v1318
        %1346 = vmatpush1.bf16.msra.mxu0 %v1317
        %1347 = vmatprep.subr.bf16.mxu0 0
        %1348 = vmatpush1.bf16.msra.mxu0 0
        %1349 = vmatprep.subr.bf16.mxu0 0
        %1350 = vmatpush1.bf16.msra.mxu0 0
        %1351 = vmatprep.subr.bf16.mxu0 0
        %1352 = vmatpush1.bf16.msra.mxu0 0
        %1353 = vmatprep.subr.bf16.mxu0 0
        %1354 = vmatpush1.bf16.msra.mxu0 0
        %1355 = vmatprep.subr.bf16.mxu0 0
        %1356 = vmatpush1.bf16.msra.mxu0 0
        %1357 = vmatprep.subr.bf16.mxu0 0
        %1358 = vmatpush1.bf16.msra.mxu0 0
        %1359 = vmatprep.subr.bf16.mxu0 0
        %1360 = vmatpush1.bf16.msra.mxu0 0
        %1361 = vmatprep.subr.bf16.mxu0 0
        %1362 = vmatpush1.bf16.msra.mxu0 0
        %1363 = vmatprep.subr.bf16.mxu0 0
        %1364 = vmatpush1.bf16.msra.mxu0 0
        %1365 = vmatprep.subr.bf16.mxu0 0
        %1366 = vmatpush1.bf16.msra.mxu0 0
        %1367 = vmatprep.subr.bf16.mxu0 0
        %1368 = vmatpush1.bf16.msra.mxu0 0
        %1369 = vmatprep.subr.bf16.mxu0 0
        %1370 = vmatpush1.bf16.msra.mxu0 0
        %1371 = vmatprep.subr.bf16.mxu0 0
        %1372 = vmatpush1.bf16.msra.mxu0 0
        %1373 = vmatprep.subr.bf16.mxu0 0
        %1374 = vmatpush1.bf16.msra.mxu0 0
        %1375 = vmatprep.subr.bf16.mxu0 0
        %1376 = vmatpush1.bf16.msra.mxu0 0
        %1377 = vmatprep.mubr.bf16.mxu0 0
        %1378 = vmatmul.mubr.bf16.gmra.mrb[0].mxu0 %v1322
        %v1379 = vpop.f32.mrb[0].mxu0
        %v1380 = vadd.f32 0.0, %v1379
        %v1381 = vpop.f32.mrb[0].mxu0
        %v1382 = vadd.f32 0.0, %v1381
        %v1383 = vpop.f32.mrb[0].mxu0
        %v1384 = vadd.f32 0.0, %v1383
        %v1385 = vpop.f32.mrb[0].mxu0
        %v1386 = vadd.f32 0.0, %v1385
        %1387 = vmatprep.mubr.bf16.mxu0 0
        %1388 = vmatmul.mubr.bf16.gmra.mrb[0].mxu0 %v1325
        %v1389 = vpop.f32.mrb[0].mxu0
        %v1390 = vadd.f32 0.0, %v1389
        %v1391 = vpop.f32.mrb[0].mxu0
        %v1392 = vadd.f32 0.0, %v1391
        %v1393 = vpop.f32.mrb[0].mxu0
        %v1394 = vadd.f32 0.0, %v1393
        %v1395 = vpop.f32.mrb[0].mxu0
        %v1396 = vadd.f32 0.0, %v1395
        %1397 = vmatprep.mubr.bf16.mxu0 0
        %1398 = vmatmul.mubr.bf16.gmra.mrb[0].mxu0 %v1328
        %v1399 = vpop.f32.mrb[0].mxu0
        %v1400 = vadd.f32 0.0, %v1399
        %v1401 = vpop.f32.mrb[0].mxu0
        %v1402 = vadd.f32 0.0, %v1401
        %v1403 = vpop.f32.mrb[0].mxu0
        %v1404 = vadd.f32 0.0, %v1403
        %v1405 = vpop.f32.mrb[0].mxu0
        %v1406 = vadd.f32 0.0, %v1405
        %1407 = vmatprep.mubr.bf16.mxu0 0
        %1408 = vmatmul.mubr.bf16.gmra.mrb[0].mxu0 %v1331
        %v1409 = vpop.f32.mrb[0].mxu0
        %v1410 = vadd.f32 0.0, %v1409
        %v1411 = vpop.f32.mrb[0].mxu0
        %v1412 = vadd.f32 0.0, %v1411
        %v1413 = vpop.f32.mrb[0].mxu0
        %v1414 = vadd.f32 0.0, %v1413
        %v1415 = vpop.f32.mrb[0].mxu0
        %v1416 = vadd.f32 0.0, %v1415
        %1417 = vmatprep.mubr.bf16.mxu0 0
        %1418 = vmatmul.mubr.bf16.gmra.mrb[0].mxu0 %v1334
        %v1419 = vpop.f32.mrb[0].mxu0
        %v1420 = vadd.f32 0.0, %v1419
        %v1421 = vpop.f32.mrb[0].mxu0
        %v1422 = vadd.f32 0.0, %v1421
        %v1423 = vpop.f32.mrb[0].mxu0
        %v1424 = vadd.f32 0.0, %v1423
        %v1425 = vpop.f32.mrb[0].mxu0
        %v1426 = vadd.f32 0.0, %v1425
        %1427 = vmatprep.mubr.bf16.mxu0 0
        %1428 = vmatmul.mubr.bf16.gmra.mrb[0].mxu0 %v1337
        %v1429 = vpop.f32.mrb[0].mxu0
        %v1430 = vadd.f32 0.0, %v1429
        %v1431 = vpop.f32.mrb[0].mxu0
        %v1432 = vadd.f32 0.0, %v1431
        %v1433 = vpop.f32.mrb[0].mxu0
        %v1434 = vadd.f32 0.0, %v1433
        %v1435 = vpop.f32.mrb[0].mxu0
        %v1436 = vadd.f32 0.0, %v1435
        %1437 = vmatprep.mubr.bf16.mxu0 0
        %1438 = vmatmul.mubr.bf16.gmra.mrb[0].mxu0 %v1340
        %v1439 = vpop.f32.mrb[0].mxu0
        %v1440 = vadd.f32 0.0, %v1439
        %v1441 = vpop.f32.mrb[0].mxu0
        %v1442 = vadd.f32 0.0, %v1441
        %v1443 = vpop.f32.mrb[0].mxu0
        %v1444 = vadd.f32 0.0, %v1443
        %v1445 = vpop.f32.mrb[0].mxu0
        %v1446 = vadd.f32 0.0, %v1445
        %1447 = vmatprep.mubr.bf16.mxu0 0
        %1448 = vmatmul.mubr.bf16.gmra.mrb[0].mxu0 %v1343
        %v1449 = vpop.f32.mrb[0].mxu0
        %v1450 = vadd.f32 0.0, %v1449
        %v1451 = vpop.f32.mrb[0].mxu0
        %v1452 = vadd.f32 0.0, %v1451
        %v1453 = vpop.f32.mrb[0].mxu0
        %v1454 = vadd.f32 0.0, %v1453
        %v1455 = vpop.f32.mrb[0].mxu0
        %v1456 = vadd.f32 0.0, %v1455
        %1457 = vdwg.mxu0
        %1458 = vmatprep.subr.bf16.mxu0 0
        %1459 = vmatpush1.bf16.msra.mxu0 %v1319
        %1460 = vmatprep.subr.bf16.mxu0 0
        %1461 = vmatpush1.bf16.msra.mxu0 0
        %1462 = vmatprep.subr.bf16.mxu0 0
        %1463 = vmatpush1.bf16.msra.mxu0 0
        %1464 = vmatprep.subr.bf16.mxu0 0
        %1465 = vmatpush1.bf16.msra.mxu0 0
        %1466 = vmatprep.subr.bf16.mxu0 0
        %1467 = vmatpush1.bf16.msra.mxu0 0
        %1468 = vmatprep.subr.bf16.mxu0 0
        %1469 = vmatpush1.bf16.msra.mxu0 0
        %1470 = vmatprep.subr.bf16.mxu0 0
        %1471 = vmatpush1.bf16.msra.mxu0 0
        %1472 = vmatprep.subr.bf16.mxu0 0
        %1473 = vmatpush1.bf16.msra.mxu0 0
        %1474 = vmatprep.subr.bf16.mxu0 0
        %1475 = vmatpush1.bf16.msra.mxu0 0
        %1476 = vmatprep.subr.bf16.mxu0 0
        %1477 = vmatpush1.bf16.msra.mxu0 0
        %1478 = vmatprep.subr.bf16.mxu0 0
        %1479 = vmatpush1.bf16.msra.mxu0 0
        %1480 = vmatprep.subr.bf16.mxu0 0
        %1481 = vmatpush1.bf16.msra.mxu0 0
        %1482 = vmatprep.subr.bf16.mxu0 0
        %1483 = vmatpush1.bf16.msra.mxu0 0
        %1484 = vmatprep.subr.bf16.mxu0 0
        %1485 = vmatpush1.bf16.msra.mxu0 0
        %1486 = vmatprep.subr.bf16.mxu0 0
        %1487 = vmatpush1.bf16.msra.mxu0 0
        %1488 = vmatprep.subr.bf16.mxu0 0
        %1489 = vmatpush1.bf16.msra.mxu0 0
        %1490 = vmatprep.mubr.bf16.mxu0 0
        %1491 = vmatmul.mubr.bf16.gmra.mrb[0].mxu0 %v1322
        %v1492 = vpop.f32.mrb[0].mxu0
        %v1493 = vadd.f32 0.0, %v1492
        %v1494 = vpop.f32.mrb[0].mxu0
        %v1495 = vpop.f32.mrb[0].mxu0
        %v1496 = vadd.f32 0.0, %v1495
        %v1497 = vpop.f32.mrb[0].mxu0
        %1498 = vmatprep.mubr.bf16.mxu0 0
        %1499 = vmatmul.mubr.bf16.gmra.mrb[0].mxu0 %v1325
        %v1500 = vpop.f32.mrb[0].mxu0
        %v1501 = vadd.f32 0.0, %v1500
        %v1502 = vpop.f32.mrb[0].mxu0
        %v1503 = vpop.f32.mrb[0].mxu0
        %v1504 = vadd.f32 0.0, %v1503
        %v1505 = vpop.f32.mrb[0].mxu0
        %1506 = vmatprep.mubr.bf16.mxu0 0
        %1507 = vmatmul.mubr.bf16.gmra.mrb[0].mxu0 %v1328
        %v1508 = vpop.f32.mrb[0].mxu0
        %v1509 = vadd.f32 0.0, %v1508
        %v1510 = vpop.f32.mrb[0].mxu0
        %v1511 = vpop.f32.mrb[0].mxu0
        %v1512 = vadd.f32 0.0, %v1511
        %v1513 = vpop.f32.mrb[0].mxu0
        %1514 = vmatprep.mubr.bf16.mxu0 0
        %1515 = vmatmul.mubr.bf16.gmra.mrb[0].mxu0 %v1331
        %v1516 = vpop.f32.mrb[0].mxu0
        %v1517 = vadd.f32 0.0, %v1516
        %v1518 = vpop.f32.mrb[0].mxu0
        %v1519 = vpop.f32.mrb[0].mxu0
        %v1520 = vadd.f32 0.0, %v1519
        %v1521 = vpop.f32.mrb[0].mxu0
        %1522 = vmatprep.mubr.bf16.mxu0 0
        %1523 = vmatmul.mubr.bf16.gmra.mrb[0].mxu0 %v1334
        %v1524 = vpop.f32.mrb[0].mxu0
        %v1525 = vadd.f32 0.0, %v1524
        %v1526 = vpop.f32.mrb[0].mxu0
        %v1527 = vpop.f32.mrb[0].mxu0
        %v1528 = vadd.f32 0.0, %v1527
        %v1529 = vpop.f32.mrb[0].mxu0
        %1530 = vmatprep.mubr.bf16.mxu0 0
        %1531 = vmatmul.mubr.bf16.gmra.mrb[0].mxu0 %v1337
        %v1532 = vpop.f32.mrb[0].mxu0
        %v1533 = vadd.f32 0.0, %v1532
        %v1534 = vpop.f32.mrb[0].mxu0
        %v1535 = vpop.f32.mrb[0].mxu0
        %v1536 = vadd.f32 0.0, %v1535
        %v1537 = vpop.f32.mrb[0].mxu0
        %1538 = vmatprep.mubr.bf16.mxu0 0
        %1539 = vmatmul.mubr.bf16.gmra.mrb[0].mxu0 %v1340
        %v1540 = vpop.f32.mrb[0].mxu0
        %v1541 = vadd.f32 0.0, %v1540
        %v1542 = vpop.f32.mrb[0].mxu0
        %v1543 = vpop.f32.mrb[0].mxu0
        %v1544 = vadd.f32 0.0, %v1543
        %v1545 = vpop.f32.mrb[0].mxu0
        %1546 = vmatprep.mubr.bf16.mxu0 0
        %1547 = vmatmul.mubr.bf16.gmra.mrb[0].mxu0 %v1343
        %v1548 = vpop.f32.mrb[0].mxu0
        %v1549 = vadd.f32 0.0, %v1548
        %v1550 = vpop.f32.mrb[0].mxu0
        %v1551 = vpop.f32.mrb[0].mxu0
        %v1552 = vadd.f32 0.0, %v1551
        %v1553 = vpop.f32.mrb[0].mxu0
        %1554 = vdwg.mxu0
        %v1555 = vld [vmem:[%s580] sm:$0xff]
        %v1556 = vld [vmem:[%s580 + $0x8] sm:$0xff]
        %v1557 = vld [vmem:[%s580 + $0x10] sm:$0xff]
        %v1558 = vld [vmem:[%s580 + $0x18] sm:$0xff]
        %v1559 = vld [vmem:[%s580 + $0x20] sm:$0xff]
        %v1560 = vld [vmem:[%s580 + $0x28] sm:$0xff]
        %v1561 = vld [vmem:[%s580 + $0x30] sm:$0xff]
        %v1562 = vld [vmem:[%s580 + $0x38] sm:$0xff]
        %v1563 = vld [vmem:[%s580 + $0x40] sm:$0xff]
        %v1564 = vld [vmem:[%s580 + $0x48] sm:$0xff]
        %v1565 = vld [vmem:[%s580 + $0x50] sm:$0xff]
        %v1566 = vld [vmem:[%s580 + $0x58] sm:$0xff]
        %v1567 = vld [vmem:[%s580 + $0x60] sm:$0xff]
        %v1568 = vld [vmem:[%s580 + $0x68] sm:$0xff]
        %v1569 = vld [vmem:[%s580 + $0x70] sm:$0xff]
        %v1570 = vld [vmem:[%s580 + $0x78] sm:$0xff]
        %v1571 = vld [vmem:[%s11] sm:$0xff]
        %v1572 = vld [vmem:[%s11 + $0x8] sm:$0xff]
        %v1573 = vld [vmem:[%s11 + $0x10] sm:$0xff]
        %v1574 = vld [vmem:[%s11 + $0x18] sm:$0xff]
        %v1575 = vld [vmem:[%s11 + $0x20] sm:$0xff]
        %v1576 = vld [vmem:[%s11 + $0x28] sm:$0xff]
        %v1578 = vsel %vm1320, %v1555, 0
        %v1581 = vsel %vm1320, %v1556, 0
        %v1584 = vsel %vm1320, %v1557, 0
        %v1587 = vsel %vm1320, %v1558, 0
        %v1590 = vsel %vm1320, %v1559, 0
        %v1593 = vsel %vm1320, %v1560, 0
        %v1596 = vsel %vm1320, %v1561, 0
        %v1599 = vsel %vm1320, %v1562, 0
        %v1602 = vsel %vm1320, %v1563, 0
        %v1605 = vsel %vm1320, %v1564, 0
        %v1608 = vsel %vm1320, %v1565, 0
        %v1611 = vsel %vm1320, %v1566, 0
        %v1614 = vsel %vm1320, %v1567, 0
        %v1617 = vsel %vm1320, %v1568, 0
        %v1620 = vsel %vm1320, %v1569, 0
        %v1623 = vsel %vm1320, %v1570, 0
        %1625 = vmatprep.subr.mxu0 %v1572
        %1626 = vmatpush1.msra.mxu0 %v1571
        %1627 = vmatprep.subr.mxu0 %v1575
        %1628 = vmatpush1.msra.mxu0 %v1574
        %1629 = vmatprep.subr.mxu0 0.0
        %1630 = vmatpush1.msra.mxu0 0.0
        %1631 = vmatprep.subr.mxu0 0.0
        %1632 = vmatpush1.msra.mxu0 0.0
        %1633 = vmatprep.subr.mxu0 0.0
        %1634 = vmatpush1.msra.mxu0 0.0
        %1635 = vmatprep.subr.mxu0 0.0
        %1636 = vmatpush1.msra.mxu0 0.0
        %1637 = vmatprep.subr.mxu0 0.0
        %1638 = vmatpush1.msra.mxu0 0.0
        %1639 = vmatprep.subr.mxu0 0.0
        %1640 = vmatpush1.msra.mxu0 0.0
        %1641 = vmatprep.subr.mxu0 0.0
        %1642 = vmatpush1.msra.mxu0 0.0
        %1643 = vmatprep.subr.mxu0 0.0
        %1644 = vmatpush1.msra.mxu0 0.0
        %1645 = vmatprep.subr.mxu0 0.0
        %1646 = vmatpush1.msra.mxu0 0.0
        %1647 = vmatprep.subr.mxu0 0.0
        %1648 = vmatpush1.msra.mxu0 0.0
        %1649 = vmatprep.subr.mxu0 0.0
        %1650 = vmatpush1.msra.mxu0 0.0
        %1651 = vmatprep.subr.mxu0 0.0
        %1652 = vmatpush1.msra.mxu0 0.0
        %1653 = vmatprep.subr.mxu0 0.0
        %1654 = vmatpush1.msra.mxu0 0.0
        %1655 = vmatprep.subr.mxu0 0.0
        %1656 = vmatpush1.msra.mxu0 0.0
        %1657 = vmatprep.subr.mxu0 0.0
        %1658 = vmatpush1.msra.mxu0 0.0
        %1659 = vmatprep.subr.mxu0 0.0
        %1660 = vmatpush1.msra.mxu0 0.0
        %1661 = vmatprep.subr.mxu0 0.0
        %1662 = vmatpush1.msra.mxu0 0.0
        %1663 = vmatprep.subr.mxu0 0.0
        %1664 = vmatpush1.msra.mxu0 0.0
        %1665 = vmatprep.subr.mxu0 0.0
        %1666 = vmatpush1.msra.mxu0 0.0
        %1667 = vmatprep.subr.mxu0 0.0
        %1668 = vmatpush1.msra.mxu0 0.0
        %1669 = vmatprep.subr.mxu0 0.0
        %1670 = vmatpush1.msra.mxu0 0.0
        %1671 = vmatprep.subr.mxu0 0.0
        %1672 = vmatpush1.msra.mxu0 0.0
        %1673 = vmatprep.subr.mxu0 0.0
        %1674 = vmatpush1.msra.mxu0 0.0
        %1675 = vmatprep.subr.mxu0 0.0
        %1676 = vmatpush1.msra.mxu0 0.0
        %1677 = vmatprep.subr.mxu0 0.0
        %1678 = vmatpush1.msra.mxu0 0.0
        %1679 = vmatprep.subr.mxu0 0.0
        %1680 = vmatpush1.msra.mxu0 0.0
        %1681 = vmatprep.subr.mxu0 0.0
        %1682 = vmatpush1.msra.mxu0 0.0
        %1683 = vmatprep.subr.mxu0 0.0
        %1684 = vmatpush1.msra.mxu0 0.0
        %1685 = vmatprep.subr.mxu0 0.0
        %1686 = vmatpush1.msra.mxu0 0.0
        %1687 = vmatprep.subr.mxu0 0.0
        %1688 = vmatpush1.msra.mxu0 0.0
        %1689 = vmatprep.mubr.f32.mxu0 0.0
        %1690 = vmatmul.mubr.f32.gmra.mrb[0].mxu0 %v1578
        %v1691 = vpop.f32.mrb[0].mxu0
        %v1692 = vadd.f32 0.0, %v1691
        %v1693 = vpop.f32.mrb[0].mxu0
        %v1694 = vadd.f32 0.0, %v1693
        %1695 = vmatprep.mubr.f32.mxu0 0.0
        %1696 = vmatmul.mubr.f32.gmra.mrb[0].mxu0 %v1581
        %v1697 = vpop.f32.mrb[0].mxu0
        %v1698 = vadd.f32 0.0, %v1697
        %v1699 = vpop.f32.mrb[0].mxu0
        %v1700 = vadd.f32 0.0, %v1699
        %1701 = vmatprep.mubr.f32.mxu0 0.0
        %1702 = vmatmul.mubr.f32.gmra.mrb[0].mxu0 %v1584
        %v1703 = vpop.f32.mrb[0].mxu0
        %v1704 = vadd.f32 0.0, %v1703
        %v1705 = vpop.f32.mrb[0].mxu0
        %v1706 = vadd.f32 0.0, %v1705
        %1707 = vmatprep.mubr.f32.mxu0 0.0
        %1708 = vmatmul.mubr.f32.gmra.mrb[0].mxu0 %v1587
        %v1709 = vpop.f32.mrb[0].mxu0
        %v1710 = vadd.f32 0.0, %v1709
        %v1711 = vpop.f32.mrb[0].mxu0
        %v1712 = vadd.f32 0.0, %v1711
        %1713 = vmatprep.mubr.f32.mxu0 0.0
        %1714 = vmatmul.mubr.f32.gmra.mrb[0].mxu0 %v1590
        %v1715 = vpop.f32.mrb[0].mxu0
        %v1716 = vadd.f32 0.0, %v1715
        %v1717 = vpop.f32.mrb[0].mxu0
        %v1718 = vadd.f32 0.0, %v1717
        %1719 = vmatprep.mubr.f32.mxu0 0.0
        %1720 = vmatmul.mubr.f32.gmra.mrb[0].mxu0 %v1593
        %v1721 = vpop.f32.mrb[0].mxu0
        %v1722 = vadd.f32 0.0, %v1721
        %v1723 = vpop.f32.mrb[0].mxu0
        %v1724 = vadd.f32 0.0, %v1723
        %1725 = vmatprep.mubr.f32.mxu0 0.0
        %1726 = vmatmul.mubr.f32.gmra.mrb[0].mxu0 %v1596
        %v1727 = vpop.f32.mrb[0].mxu0
        %v1728 = vadd.f32 0.0, %v1727
        %v1729 = vpop.f32.mrb[0].mxu0
        %v1730 = vadd.f32 0.0, %v1729
        %1731 = vmatprep.mubr.f32.mxu0 0.0
        %1732 = vmatmul.mubr.f32.gmra.mrb[0].mxu0 %v1599
        %v1733 = vpop.f32.mrb[0].mxu0
        %v1734 = vadd.f32 0.0, %v1733
        %v1735 = vpop.f32.mrb[0].mxu0
        %v1736 = vadd.f32 0.0, %v1735
        %1737 = vmatprep.mubr.f32.mxu0 0.0
        %1738 = vmatmul.mubr.f32.gmra.mrb[0].mxu0 %v1602
        %v1739 = vpop.f32.mrb[0].mxu0
        %v1740 = vadd.f32 0.0, %v1739
        %v1741 = vpop.f32.mrb[0].mxu0
        %v1742 = vadd.f32 0.0, %v1741
        %1743 = vmatprep.mubr.f32.mxu0 0.0
        %1744 = vmatmul.mubr.f32.gmra.mrb[0].mxu0 %v1605
        %v1745 = vpop.f32.mrb[0].mxu0
        %v1746 = vadd.f32 0.0, %v1745
        %v1747 = vpop.f32.mrb[0].mxu0
        %v1748 = vadd.f32 0.0, %v1747
        %1749 = vmatprep.mubr.f32.mxu0 0.0
        %1750 = vmatmul.mubr.f32.gmra.mrb[0].mxu0 %v1608
        %v1751 = vpop.f32.mrb[0].mxu0
        %v1752 = vadd.f32 0.0, %v1751
        %v1753 = vpop.f32.mrb[0].mxu0
        %v1754 = vadd.f32 0.0, %v1753
        %1755 = vmatprep.mubr.f32.mxu0 0.0
        %1756 = vmatmul.mubr.f32.gmra.mrb[0].mxu0 %v1611
        %v1757 = vpop.f32.mrb[0].mxu0
        %v1758 = vadd.f32 0.0, %v1757
        %v1759 = vpop.f32.mrb[0].mxu0
        %v1760 = vadd.f32 0.0, %v1759
        %1761 = vmatprep.mubr.f32.mxu0 0.0
        %1762 = vmatmul.mubr.f32.gmra.mrb[0].mxu0 %v1614
        %v1763 = vpop.f32.mrb[0].mxu0
        %v1764 = vadd.f32 0.0, %v1763
        %v1765 = vpop.f32.mrb[0].mxu0
        %v1766 = vadd.f32 0.0, %v1765
        %1767 = vmatprep.mubr.f32.mxu0 0.0
        %1768 = vmatmul.mubr.f32.gmra.mrb[0].mxu0 %v1617
        %v1769 = vpop.f32.mrb[0].mxu0
        %v1770 = vadd.f32 0.0, %v1769
        %v1771 = vpop.f32.mrb[0].mxu0
        %v1772 = vadd.f32 0.0, %v1771
        %1773 = vmatprep.mubr.f32.mxu0 0.0
        %1774 = vmatmul.mubr.f32.gmra.mrb[0].mxu0 %v1620
        %v1775 = vpop.f32.mrb[0].mxu0
        %v1776 = vadd.f32 0.0, %v1775
        %v1777 = vpop.f32.mrb[0].mxu0
        %v1778 = vadd.f32 0.0, %v1777
        %1779 = vmatprep.mubr.f32.mxu0 0.0
        %1780 = vmatmul.mubr.f32.gmra.mrb[0].mxu0 %v1623
        %v1781 = vpop.f32.mrb[0].mxu0
        %v1782 = vadd.f32 0.0, %v1781
        %v1783 = vpop.f32.mrb[0].mxu0
        %v1784 = vadd.f32 0.0, %v1783
        %1785 = vdwg.mxu0
        %1786 = vmatprep.subr.mxu0 0.0
        %1787 = vmatpush1.msra.mxu0 %v1573
        %1788 = vmatprep.subr.mxu0 0.0
        %1789 = vmatpush1.msra.mxu0 %v1576
        %1790 = vmatprep.subr.mxu0 0.0
        %1791 = vmatpush1.msra.mxu0 0.0
        %1792 = vmatprep.subr.mxu0 0.0
        %1793 = vmatpush1.msra.mxu0 0.0
        %1794 = vmatprep.subr.mxu0 0.0
        %1795 = vmatpush1.msra.mxu0 0.0
        %1796 = vmatprep.subr.mxu0 0.0
        %1797 = vmatpush1.msra.mxu0 0.0
        %1798 = vmatprep.subr.mxu0 0.0
        %1799 = vmatpush1.msra.mxu0 0.0
        %1800 = vmatprep.subr.mxu0 0.0
        %1801 = vmatpush1.msra.mxu0 0.0
        %1802 = vmatprep.subr.mxu0 0.0
        %1803 = vmatpush1.msra.mxu0 0.0
        %1804 = vmatprep.subr.mxu0 0.0
        %1805 = vmatpush1.msra.mxu0 0.0
        %1806 = vmatprep.subr.mxu0 0.0
        %1807 = vmatpush1.msra.mxu0 0.0
        %1808 = vmatprep.subr.mxu0 0.0
        %1809 = vmatpush1.msra.mxu0 0.0
        %1810 = vmatprep.subr.mxu0 0.0
        %1811 = vmatpush1.msra.mxu0 0.0
        %1812 = vmatprep.subr.mxu0 0.0
        %1813 = vmatpush1.msra.mxu0 0.0
        %1814 = vmatprep.subr.mxu0 0.0
        %1815 = vmatpush1.msra.mxu0 0.0
        %1816 = vmatprep.subr.mxu0 0.0
        %1817 = vmatpush1.msra.mxu0 0.0
        %1818 = vmatprep.subr.mxu0 0.0
        %1819 = vmatpush1.msra.mxu0 0.0
        %1820 = vmatprep.subr.mxu0 0.0
        %1821 = vmatpush1.msra.mxu0 0.0
        %1822 = vmatprep.subr.mxu0 0.0
        %1823 = vmatpush1.msra.mxu0 0.0
        %1824 = vmatprep.subr.mxu0 0.0
        %1825 = vmatpush1.msra.mxu0 0.0
        %1826 = vmatprep.subr.mxu0 0.0
        %1827 = vmatpush1.msra.mxu0 0.0
        %1828 = vmatprep.subr.mxu0 0.0
        %1829 = vmatpush1.msra.mxu0 0.0
        %1830 = vmatprep.subr.mxu0 0.0
        %1831 = vmatpush1.msra.mxu0 0.0
        %1832 = vmatprep.subr.mxu0 0.0
        %1833 = vmatpush1.msra.mxu0 0.0
        %1834 = vmatprep.subr.mxu0 0.0
        %1835 = vmatpush1.msra.mxu0 0.0
        %1836 = vmatprep.subr.mxu0 0.0
        %1837 = vmatpush1.msra.mxu0 0.0
        %1838 = vmatprep.subr.mxu0 0.0
        %1839 = vmatpush1.msra.mxu0 0.0
        %1840 = vmatprep.subr.mxu0 0.0
        %1841 = vmatpush1.msra.mxu0 0.0
        %1842 = vmatprep.subr.mxu0 0.0
        %1843 = vmatpush1.msra.mxu0 0.0
        %1844 = vmatprep.subr.mxu0 0.0
        %1845 = vmatpush1.msra.mxu0 0.0
        %1846 = vmatprep.subr.mxu0 0.0
        %1847 = vmatpush1.msra.mxu0 0.0
        %1848 = vmatprep.subr.mxu0 0.0
        %1849 = vmatpush1.msra.mxu0 0.0
        %1850 = vmatprep.mubr.f32.mxu0 0.0
        %1851 = vmatmul.mubr.f32.gmra.mrb[0].mxu0 %v1578
        %v1852 = vpop.f32.mrb[0].mxu0
        %v1853 = vadd.f32 0.0, %v1852
        %v1854 = vpop.f32.mrb[0].mxu0
        %1855 = vmatprep.mubr.f32.mxu0 0.0
        %1856 = vmatmul.mubr.f32.gmra.mrb[0].mxu0 %v1581
        %v1857 = vpop.f32.mrb[0].mxu0
        %v1858 = vadd.f32 0.0, %v1857
        %v1859 = vpop.f32.mrb[0].mxu0
        %1860 = vmatprep.mubr.f32.mxu0 0.0
        %1861 = vmatmul.mubr.f32.gmra.mrb[0].mxu0 %v1584
        %v1862 = vpop.f32.mrb[0].mxu0
        %v1863 = vadd.f32 0.0, %v1862
        %v1864 = vpop.f32.mrb[0].mxu0
        %1865 = vmatprep.mubr.f32.mxu0 0.0
        %1866 = vmatmul.mubr.f32.gmra.mrb[0].mxu0 %v1587
        %v1867 = vpop.f32.mrb[0].mxu0
        %v1868 = vadd.f32 0.0, %v1867
        %v1869 = vpop.f32.mrb[0].mxu0
        %1870 = vmatprep.mubr.f32.mxu0 0.0
        %1871 = vmatmul.mubr.f32.gmra.mrb[0].mxu0 %v1590
        %v1872 = vpop.f32.mrb[0].mxu0
        %v1873 = vadd.f32 0.0, %v1872
        %v1874 = vpop.f32.mrb[0].mxu0
        %1875 = vmatprep.mubr.f32.mxu0 0.0
        %1876 = vmatmul.mubr.f32.gmra.mrb[0].mxu0 %v1593
        %v1877 = vpop.f32.mrb[0].mxu0
        %v1878 = vadd.f32 0.0, %v1877
        %v1879 = vpop.f32.mrb[0].mxu0
        %1880 = vmatprep.mubr.f32.mxu0 0.0
        %1881 = vmatmul.mubr.f32.gmra.mrb[0].mxu0 %v1596
        %v1882 = vpop.f32.mrb[0].mxu0
        %v1883 = vadd.f32 0.0, %v1882
        %v1884 = vpop.f32.mrb[0].mxu0
        %1885 = vmatprep.mubr.f32.mxu0 0.0
        %1886 = vmatmul.mubr.f32.gmra.mrb[0].mxu0 %v1599
        %v1887 = vpop.f32.mrb[0].mxu0
        %v1888 = vadd.f32 0.0, %v1887
        %v1889 = vpop.f32.mrb[0].mxu0
        %1890 = vmatprep.mubr.f32.mxu0 0.0
        %1891 = vmatmul.mubr.f32.gmra.mrb[0].mxu0 %v1602
        %v1892 = vpop.f32.mrb[0].mxu0
        %v1893 = vadd.f32 0.0, %v1892
        %v1894 = vpop.f32.mrb[0].mxu0
        %1895 = vmatprep.mubr.f32.mxu0 0.0
        %1896 = vmatmul.mubr.f32.gmra.mrb[0].mxu0 %v1605
        %v1897 = vpop.f32.mrb[0].mxu0
        %v1898 = vadd.f32 0.0, %v1897
        %v1899 = vpop.f32.mrb[0].mxu0
        %1900 = vmatprep.mubr.f32.mxu0 0.0
        %1901 = vmatmul.mubr.f32.gmra.mrb[0].mxu0 %v1608
        %v1902 = vpop.f32.mrb[0].mxu0
        %v1903 = vadd.f32 0.0, %v1902
        %v1904 = vpop.f32.mrb[0].mxu0
        %1905 = vmatprep.mubr.f32.mxu0 0.0
        %1906 = vmatmul.mubr.f32.gmra.mrb[0].mxu0 %v1611
        %v1907 = vpop.f32.mrb[0].mxu0
        %v1908 = vadd.f32 0.0, %v1907
        %v1909 = vpop.f32.mrb[0].mxu0
        %1910 = vmatprep.mubr.f32.mxu0 0.0
        %1911 = vmatmul.mubr.f32.gmra.mrb[0].mxu0 %v1614
        %v1912 = vpop.f32.mrb[0].mxu0
        %v1913 = vadd.f32 0.0, %v1912
        %v1914 = vpop.f32.mrb[0].mxu0
        %1915 = vmatprep.mubr.f32.mxu0 0.0
        %1916 = vmatmul.mubr.f32.gmra.mrb[0].mxu0 %v1617
        %v1917 = vpop.f32.mrb[0].mxu0
        %v1918 = vadd.f32 0.0, %v1917
        %v1919 = vpop.f32.mrb[0].mxu0
        %1920 = vmatprep.mubr.f32.mxu0 0.0
        %1921 = vmatmul.mubr.f32.gmra.mrb[0].mxu0 %v1620
        %v1922 = vpop.f32.mrb[0].mxu0
        %v1923 = vadd.f32 0.0, %v1922
        %v1924 = vpop.f32.mrb[0].mxu0
        %1925 = vmatprep.mubr.f32.mxu0 0.0
        %1926 = vmatmul.mubr.f32.gmra.mrb[0].mxu0 %v1623
        %v1927 = vpop.f32.mrb[0].mxu0
        %v1928 = vadd.f32 0.0, %v1927
        %v1929 = vpop.f32.mrb[0].mxu0
        %1930 = vdwg.mxu0
        %v1931 = vld [vmem:[%s587] sm:$0xff]
        %v1932 = vld [vmem:[%s587 + $0x8] sm:$0xff]
        %v1933 = vld [vmem:[%s587 + $0x10] sm:$0xff]
        %v1934 = vld [vmem:[%s587 + $0x18] sm:$0xff]
        %v1935 = vld [vmem:[%s587 + $0x20] sm:$0xff]
        %v1936 = vld [vmem:[%s587 + $0x28] sm:$0xff]
        %v1937 = vld [vmem:[%s587 + $0x30] sm:$0xff]
        %v1938 = vld [vmem:[%s587 + $0x38] sm:$0xff]
        %v1939 = vld [vmem:[%s587 + $0x40] sm:$0xff]
        %v1940 = vld [vmem:[%s587 + $0x48] sm:$0xff]
        %v1941 = vld [vmem:[%s587 + $0x50] sm:$0xff]
        %v1942 = vld [vmem:[%s587 + $0x58] sm:$0xff]
        %v1943 = vld [vmem:[%s587 + $0x60] sm:$0xff]
        %v1944 = vld [vmem:[%s587 + $0x68] sm:$0xff]
        %v1945 = vld [vmem:[%s587 + $0x70] sm:$0xff]
        %v1946 = vld [vmem:[%s587 + $0x78] sm:$0xff]
        %v1947 = vld [vmem:[%s587 + $0x80] sm:$0xff]
        %v1948 = vld [vmem:[%s587 + $0x88] sm:$0xff]
        %v1949 = vld [vmem:[%s587 + $0x90] sm:$0xff]
        %v1950 = vld [vmem:[%s587 + $0x98] sm:$0xff]
        %v1951 = vld [vmem:[%s587 + $0xa0] sm:$0xff]
        %v1952 = vld [vmem:[%s587 + $0xa8] sm:$0xff]
        %v1953 = vld [vmem:[%s587 + $0xb0] sm:$0xff]
        %v1954 = vld [vmem:[%s587 + $0xb8] sm:$0xff]
        %v1955 = vld [vmem:[%s587 + $0xc0] sm:$0xff]
        %v1956 = vld [vmem:[%s587 + $0xc8] sm:$0xff]
        %v1957 = vld [vmem:[%s587 + $0xd0] sm:$0xff]
        %v1958 = vld [vmem:[%s587 + $0xd8] sm:$0xff]
        %v1959 = vld [vmem:[%s587 + $0xe0] sm:$0xff]
        %v1960 = vld [vmem:[%s587 + $0xe8] sm:$0xff]
        %v1961 = vld [vmem:[%s587 + $0xf0] sm:$0xff]
        %v1962 = vld [vmem:[%s587 + $0xf8] sm:$0xff]
        %v1963 = vld [vmem:[%s587 + $0x100] sm:$0xff]
        %v1964 = vld [vmem:[%s587 + $0x108] sm:$0xff]
        %v1965 = vld [vmem:[%s587 + $0x110] sm:$0xff]
        %v1966 = vld [vmem:[%s587 + $0x118] sm:$0xff]
        %v1967 = vld [vmem:[%s587 + $0x120] sm:$0xff]
        %v1968 = vld [vmem:[%s587 + $0x128] sm:$0xff]
        %v1969 = vld [vmem:[%s587 + $0x130] sm:$0xff]
        %v1970 = vld [vmem:[%s587 + $0x138] sm:$0xff]
        %v1971 = vld [vmem:[%s587 + $0x140] sm:$0xff]
        %v1972 = vld [vmem:[%s587 + $0x148] sm:$0xff]
        %v1973 = vld [vmem:[%s587 + $0x150] sm:$0xff]
        %v1974 = vld [vmem:[%s587 + $0x158] sm:$0xff]
        %v1975 = vld [vmem:[%s587 + $0x160] sm:$0xff]
        %v1976 = vld [vmem:[%s587 + $0x168] sm:$0xff]
        %v1977 = vld [vmem:[%s587 + $0x170] sm:$0xff]
        %v1978 = vld [vmem:[%s587 + $0x178] sm:$0xff]
        %v1979 = vmul.f32 %v1692, %v1931
        %v1980 = vmul.f32 %v1694, %v1932
        %v1981 = vmul.f32 %v1853, %v1933
        %v1982 = vmul.f32 %v1698, %v1934
        %v1983 = vmul.f32 %v1700, %v1935
        %v1984 = vmul.f32 %v1858, %v1936
        %v1985 = vmul.f32 %v1704, %v1937
        %v1986 = vmul.f32 %v1706, %v1938
        %v1987 = vmul.f32 %v1863, %v1939
        %v1988 = vmul.f32 %v1710, %v1940
        %v1989 = vmul.f32 %v1712, %v1941
        %v1990 = vmul.f32 %v1868, %v1942
        %v1991 = vmul.f32 %v1716, %v1943
        %v1992 = vmul.f32 %v1718, %v1944
        %v1993 = vmul.f32 %v1873, %v1945
        %v1994 = vmul.f32 %v1722, %v1946
        %v1995 = vmul.f32 %v1724, %v1947
        %v1996 = vmul.f32 %v1878, %v1948
        %v1997 = vmul.f32 %v1728, %v1949
        %v1998 = vmul.f32 %v1730, %v1950
        %v1999 = vmul.f32 %v1883, %v1951
        %v2000 = vmul.f32 %v1734, %v1952
        %v2001 = vmul.f32 %v1736, %v1953
        %v2002 = vmul.f32 %v1888, %v1954
        %v2003 = vmul.f32 %v1740, %v1955
        %v2004 = vmul.f32 %v1742, %v1956
        %v2005 = vmul.f32 %v1893, %v1957
        %v2006 = vmul.f32 %v1746, %v1958
        %v2007 = vmul.f32 %v1748, %v1959
        %v2008 = vmul.f32 %v1898, %v1960
        %v2009 = vmul.f32 %v1752, %v1961
        %v2010 = vmul.f32 %v1754, %v1962
        %v2011 = vmul.f32 %v1903, %v1963
        %v2012 = vmul.f32 %v1758, %v1964
        %v2013 = vmul.f32 %v1760, %v1965
        %v2014 = vmul.f32 %v1908, %v1966
        %v2015 = vmul.f32 %v1764, %v1967
        %v2016 = vmul.f32 %v1766, %v1968
        %v2017 = vmul.f32 %v1913, %v1969
        %v2018 = vmul.f32 %v1770, %v1970
        %v2019 = vmul.f32 %v1772, %v1971
        %v2020 = vmul.f32 %v1918, %v1972
        %v2021 = vmul.f32 %v1776, %v1973
        %v2022 = vmul.f32 %v1778, %v1974
        %v2023 = vmul.f32 %v1923, %v1975
        %v2024 = vmul.f32 %v1782, %v1976
        %v2025 = vmul.f32 %v1784, %v1977
        %v2026 = vmul.f32 %v1928, %v1978
        %v2027 = vmul.f32 %v1979, %v1380
        %v2028 = vmul.f32 %v1980, %v1382
        %v2029 = vmul.f32 %v1981, %v1493
        %v2030 = vmul.f32 %v1982, %v1384
        %v2031 = vmul.f32 %v1983, %v1386
        %v2032 = vmul.f32 %v1984, %v1496
        %v2033 = vmul.f32 %v1985, %v1390
        %v2034 = vmul.f32 %v1986, %v1392
        %v2035 = vmul.f32 %v1987, %v1501
        %v2036 = vmul.f32 %v1988, %v1394
        %v2037 = vmul.f32 %v1989, %v1396
        %v2038 = vmul.f32 %v1990, %v1504
        %v2039 = vmul.f32 %v1991, %v1400
        %v2040 = vmul.f32 %v1992, %v1402
        %v2041 = vmul.f32 %v1993, %v1509
        %v2042 = vmul.f32 %v1994, %v1404
        %v2043 = vmul.f32 %v1995, %v1406
        %v2044 = vmul.f32 %v1996, %v1512
        %v2045 = vmul.f32 %v1997, %v1410
        %v2046 = vmul.f32 %v1998, %v1412
        %v2047 = vmul.f32 %v1999, %v1517
        %v2048 = vmul.f32 %v2000, %v1414
        %v2049 = vmul.f32 %v2001, %v1416
        %v2050 = vmul.f32 %v2002, %v1520
        %v2051 = vmul.f32 %v2003, %v1420
        %v2052 = vmul.f32 %v2004, %v1422
        %v2053 = vmul.f32 %v2005, %v1525
        %v2054 = vmul.f32 %v2006, %v1424
        %v2055 = vmul.f32 %v2007, %v1426
        %v2056 = vmul.f32 %v2008, %v1528
        %v2057 = vmul.f32 %v2009, %v1430
        %v2058 = vmul.f32 %v2010, %v1432
        %v2059 = vmul.f32 %v2011, %v1533
        %v2060 = vmul.f32 %v2012, %v1434
        %v2061 = vmul.f32 %v2013, %v1436
        %v2062 = vmul.f32 %v2014, %v1536
        %v2063 = vmul.f32 %v2015, %v1440
        %v2064 = vmul.f32 %v2016, %v1442
        %v2065 = vmul.f32 %v2017, %v1541
        %v2066 = vmul.f32 %v2018, %v1444
        %v2067 = vmul.f32 %v2019, %v1446
        %v2068 = vmul.f32 %v2020, %v1544
        %v2069 = vmul.f32 %v2021, %v1450
        %v2070 = vmul.f32 %v2022, %v1452
        %v2071 = vmul.f32 %v2023, %v1549
        %v2072 = vmul.f32 %v2024, %v1454
        %v2073 = vmul.f32 %v2025, %v1456
        %v2074 = vmul.f32 %v2026, %v1552
        %v2075 = vpack.c.bf16 %v2030, %v2027
        %v2076 = vpack.c.bf16 %v2031, %v2028
        %v2077 = vpack.c.bf16 %v2032, %v2029
        %v2078 = vpack.c.bf16 %v2036, %v2033
        %v2079 = vpack.c.bf16 %v2037, %v2034
        %v2080 = vpack.c.bf16 %v2038, %v2035
        %v2081 = vpack.c.bf16 %v2042, %v2039
        %v2082 = vpack.c.bf16 %v2043, %v2040
        %v2083 = vpack.c.bf16 %v2044, %v2041
        %v2084 = vpack.c.bf16 %v2048, %v2045
        %v2085 = vpack.c.bf16 %v2049, %v2046
        %v2086 = vpack.c.bf16 %v2050, %v2047
        %v2087 = vpack.c.bf16 %v2054, %v2051
        %v2088 = vpack.c.bf16 %v2055, %v2052
        %v2089 = vpack.c.bf16 %v2056, %v2053
        %v2090 = vpack.c.bf16 %v2060, %v2057
        %v2091 = vpack.c.bf16 %v2061, %v2058
        %v2092 = vpack.c.bf16 %v2062, %v2059
        %v2093 = vpack.c.bf16 %v2066, %v2063
        %v2094 = vpack.c.bf16 %v2067, %v2064
        %v2095 = vpack.c.bf16 %v2068, %v2065
        %v2096 = vpack.c.bf16 %v2072, %v2069
        %v2097 = vpack.c.bf16 %v2073, %v2070
        %v2098 = vpack.c.bf16 %v2074, %v2071
        %v2099 = vld [vmem:[#allocation4] sm:$0xff]
        %v2100 = vld [vmem:[#allocation4 + $0x8] sm:$0xff]
        %v2101 = vld [vmem:[#allocation4 + $0x10] sm:$0xff]
        %v2102 = vld [vmem:[#allocation4 + $0x18] sm:$0xff]
        %v2103 = vld [vmem:[#allocation4 + $0x20] sm:$0xff]
        %v2104 = vld [vmem:[#allocation4 + $0x28] sm:$0xff]
        %2105 = vmatprep.subr.bf16.mxu0 %v2076
        %2106 = vmatpush1.bf16.msra.mxu0 %v2075
        %2107 = vmatprep.subr.bf16.mxu0 %v2079
        %2108 = vmatpush1.bf16.msra.mxu0 %v2078
        %2109 = vmatprep.subr.bf16.mxu0 %v2082
        %2110 = vmatpush1.bf16.msra.mxu0 %v2081
        %2111 = vmatprep.subr.bf16.mxu0 %v2085
        %2112 = vmatpush1.bf16.msra.mxu0 %v2084
        %2113 = vmatprep.subr.bf16.mxu0 %v2088
        %2114 = vmatpush1.bf16.msra.mxu0 %v2087
        %2115 = vmatprep.subr.bf16.mxu0 %v2091
        %2116 = vmatpush1.bf16.msra.mxu0 %v2090
        %2117 = vmatprep.subr.bf16.mxu0 %v2094
        %2118 = vmatpush1.bf16.msra.mxu0 %v2093
        %2119 = vmatprep.subr.bf16.mxu0 %v2097
        %2120 = vmatpush1.bf16.msra.mxu0 %v2096
        %2121 = vmatprep.subr.bf16.mxu0 0
        %2122 = vmatpush1.bf16.msra.mxu0 0
        %2123 = vmatprep.subr.bf16.mxu0 0
        %2124 = vmatpush1.bf16.msra.mxu0 0
        %2125 = vmatprep.subr.bf16.mxu0 0
        %2126 = vmatpush1.bf16.msra.mxu0 0
        %2127 = vmatprep.subr.bf16.mxu0 0
        %2128 = vmatpush1.bf16.msra.mxu0 0
        %2129 = vmatprep.subr.bf16.mxu0 0
        %2130 = vmatpush1.bf16.msra.mxu0 0
        %2131 = vmatprep.subr.bf16.mxu0 0
        %2132 = vmatpush1.bf16.msra.mxu0 0
        %2133 = vmatprep.subr.bf16.mxu0 0
        %2134 = vmatpush1.bf16.msra.mxu0 0
        %2135 = vmatprep.subr.bf16.mxu0 0
        %2136 = vmatpush1.bf16.msra.mxu0 0
        %2137 = vmatprep.mubr.bf16.mxu0 0
        %2138 = vmatmul.mubr.bf16.gmra.mrb[0].mxu0 %v1316
        %v2139 = vpop.f32.mrb[0].mxu0
        %v2140 = vadd.f32 0.0, %v2139
        %v2141 = vpop.f32.mrb[0].mxu0
        %v2142 = vadd.f32 0.0, %v2141
        %v2143 = vpop.f32.mrb[0].mxu0
        %v2144 = vadd.f32 0.0, %v2143
        %v2145 = vpop.f32.mrb[0].mxu0
        %v2146 = vadd.f32 0.0, %v2145
        %2147 = vdwg.mxu0
        %2148 = vmatprep.subr.bf16.mxu0 0
        %2149 = vmatpush1.bf16.msra.mxu0 %v2077
        %2150 = vmatprep.subr.bf16.mxu0 0
        %2151 = vmatpush1.bf16.msra.mxu0 %v2080
        %2152 = vmatprep.subr.bf16.mxu0 0
        %2153 = vmatpush1.bf16.msra.mxu0 %v2083
        %2154 = vmatprep.subr.bf16.mxu0 0
        %2155 = vmatpush1.bf16.msra.mxu0 %v2086
        %2156 = vmatprep.subr.bf16.mxu0 0
        %2157 = vmatpush1.bf16.msra.mxu0 %v2089
        %2158 = vmatprep.subr.bf16.mxu0 0
        %2159 = vmatpush1.bf16.msra.mxu0 %v2092
        %2160 = vmatprep.subr.bf16.mxu0 0
        %2161 = vmatpush1.bf16.msra.mxu0 %v2095
        %2162 = vmatprep.subr.bf16.mxu0 0
        %2163 = vmatpush1.bf16.msra.mxu0 %v2098
        %2164 = vmatprep.subr.bf16.mxu0 0
        %2165 = vmatpush1.bf16.msra.mxu0 0
        %2166 = vmatprep.subr.bf16.mxu0 0
        %2167 = vmatpush1.bf16.msra.mxu0 0
        %2168 = vmatprep.subr.bf16.mxu0 0
        %2169 = vmatpush1.bf16.msra.mxu0 0
        %2170 = vmatprep.subr.bf16.mxu0 0
        %2171 = vmatpush1.bf16.msra.mxu0 0
        %2172 = vmatprep.subr.bf16.mxu0 0
        %2173 = vmatpush1.bf16.msra.mxu0 0
        %2174 = vmatprep.subr.bf16.mxu0 0
        %2175 = vmatpush1.bf16.msra.mxu0 0
        %2176 = vmatprep.subr.bf16.mxu0 0
        %2177 = vmatpush1.bf16.msra.mxu0 0
        %2178 = vmatprep.subr.bf16.mxu0 0
        %2179 = vmatpush1.bf16.msra.mxu0 0
        %2180 = vmatprep.mubr.bf16.mxu0 0
        %2181 = vmatmul.mubr.bf16.gmra.mrb[0].mxu0 %v1316
        %v2182 = vpop.f32.mrb[0].mxu0
        %v2183 = vadd.f32 0.0, %v2182
        %v2184 = vpop.f32.mrb[0].mxu0
        %v2185 = vpop.f32.mrb[0].mxu0
        %v2186 = vadd.f32 0.0, %v2185
        %v2187 = vpop.f32.mrb[0].mxu0
        %2188 = vdwg.mxu0
        %v2189 = vadd.f32 %v2099, %v2140
        %v2190 = vadd.f32 %v2100, %v2142
        %v2191 = vadd.f32 %v2101, %v2183
        %v2192 = vadd.f32 %v2102, %v2144
        %v2193 = vadd.f32 %v2103, %v2146
        %v2194 = vadd.f32 %v2104, %v2186
        %2195 = vst [vmem:[#allocation4] sm:$0xff] %v2189
        %2196 = vst [vmem:[#allocation4 + $0x8] sm:$0xff] %v2190
        %vm2197 = vcmask 261120
        %2198 = vst.msk [vmem:[#allocation4 + $0x10] sm:$0xff] %vm2197, %v2191
        %2199 = vst [vmem:[#allocation4 + $0x18] sm:$0xff] %v2192
        %2200 = vst [vmem:[#allocation4 + $0x20] sm:$0xff] %v2193
        %2201 = vst.msk [vmem:[#allocation4 + $0x28] sm:$0xff] %vm2197, %v2194
        %p2202 = scmp.eq.s32.totalorder %s29, 1
        // Predicated region
        $region93: #{tpu_custom_call.1} parent=87 // pred_check
          %p2203 = pneg %p2202
        $region94: #{tpu_custom_call.1} parent=87 // pred_check_branch
          %2205 = sbr.rel (%p2203) target = $region96
        $region95: #{tpu_custom_call.1} parent=87 // pred_region
          %v2206 = vld [vmem:[#allocation4] sm:$0xff]
          %v2207 = vld [vmem:[#allocation4 + $0x8] sm:$0xff]
          %v2208 = vld [vmem:[#allocation4 + $0x10] sm:$0xff]
          %v2209 = vld [vmem:[#allocation4 + $0x18] sm:$0xff]
          %v2210 = vld [vmem:[#allocation4 + $0x20] sm:$0xff]
          %v2211 = vld [vmem:[#allocation4 + $0x28] sm:$0xff]
          %v2212 = vld [vmem:[#allocation2] sm:$0xff]
          %v2213 = vld [vmem:[#allocation2 + $0x8] sm:$0xff]
          %v2214 = vadd.f32 %v2212, %v2208
          %v2215 = vadd.f32 %v2213, %v2211
          %v2216 = vld [vmem:[%s12] sm:$0xff]
          %v2217 = vld [vmem:[%s12 + $0x8] sm:$0xff]
          %v2218 = vld [vmem:[%s12 + $0x10] sm:$0xff]
          %v2219 = vld [vmem:[%s12 + $0x18] sm:$0xff]
          %s2220 = scalar_lea.vmem %s12, 32
          %v2221 = vld [vmem:[%s2220] sm:$0xff]
          %v2222 = vld [vmem:[%s2220 + $0x8] sm:$0xff]
          %v2223 = vld [vmem:[%s2220 + $0x10] sm:$0xff]
          %v2224 = vld [vmem:[%s2220 + $0x18] sm:$0xff]
          %s2225 = scalar_lea.vmem %s12, 64
          %v2226 = vld [vmem:[%s2225] sm:$0xff]
          %v2227 = vld [vmem:[%s2225 + $0x8] sm:$0xff]
          %v2228 = vld [vmem:[%s2225 + $0x10] sm:$0xff]
          %v2229 = vld [vmem:[%s2225 + $0x18] sm:$0xff]
          %s2230 = scalar_lea.vmem %s12, 96
          %v2231 = vld [vmem:[%s2230] sm:$0xff]
          %v2232 = vld [vmem:[%s2230 + $0x8] sm:$0xff]
          %v2233 = vld [vmem:[%s2230 + $0x10] sm:$0xff]
          %v2234 = vld [vmem:[%s2230 + $0x18] sm:$0xff]
          %v2236 = vsel %vm2197, %v2206, 0
          %v2239 = vsel %vm2197, %v2209, 0
          %2241 = vmatprep.subr.mxu0 0.0
          %2242 = vmatpush1.msra.mxu0 %v2216
          %2243 = vmatprep.subr.mxu0 0.0
          %2244 = vmatpush1.msra.mxu0 %v2217
          %2245 = vmatprep.subr.mxu0 0.0
          %2246 = vmatpush1.msra.mxu0 %v2218
          %2247 = vmatprep.subr.mxu0 0.0
          %2248 = vmatpush1.msra.mxu0 %v2219
          %2249 = vmatprep.subr.mxu0 0.0
          %2250 = vmatpush1.msra.mxu0 0.0
          %2251 = vmatprep.subr.mxu0 0.0
          %2252 = vmatpush1.msra.mxu0 0.0
          %2253 = vmatprep.subr.mxu0 0.0
          %2254 = vmatpush1.msra.mxu0 0.0
          %2255 = vmatprep.subr.mxu0 0.0
          %2256 = vmatpush1.msra.mxu0 0.0
          %2257 = vmatprep.subr.mxu0 0.0
          %2258 = vmatpush1.msra.mxu0 0.0
          %2259 = vmatprep.subr.mxu0 0.0
          %2260 = vmatpush1.msra.mxu0 0.0
          %2261 = vmatprep.subr.mxu0 0.0
          %2262 = vmatpush1.msra.mxu0 0.0
          %2263 = vmatprep.subr.mxu0 0.0
          %2264 = vmatpush1.msra.mxu0 0.0
          %2265 = vmatprep.subr.mxu0 0.0
          %2266 = vmatpush1.msra.mxu0 0.0
          %2267 = vmatprep.subr.mxu0 0.0
          %2268 = vmatpush1.msra.mxu0 0.0
          %2269 = vmatprep.subr.mxu0 0.0
          %2270 = vmatpush1.msra.mxu0 0.0
          %2271 = vmatprep.subr.mxu0 0.0
          %2272 = vmatpush1.msra.mxu0 0.0
          %2273 = vmatprep.subr.mxu0 0.0
          %2274 = vmatpush1.msra.mxu0 0.0
          %2275 = vmatprep.subr.mxu0 0.0
          %2276 = vmatpush1.msra.mxu0 0.0
          %2277 = vmatprep.subr.mxu0 0.0
          %2278 = vmatpush1.msra.mxu0 0.0
          %2279 = vmatprep.subr.mxu0 0.0
          %2280 = vmatpush1.msra.mxu0 0.0
          %2281 = vmatprep.subr.mxu0 0.0
          %2282 = vmatpush1.msra.mxu0 0.0
          %2283 = vmatprep.subr.mxu0 0.0
          %2284 = vmatpush1.msra.mxu0 0.0
          %2285 = vmatprep.subr.mxu0 0.0
          %2286 = vmatpush1.msra.mxu0 0.0
          %2287 = vmatprep.subr.mxu0 0.0
          %2288 = vmatpush1.msra.mxu0 0.0
          %2289 = vmatprep.subr.mxu0 0.0
          %2290 = vmatpush1.msra.mxu0 0.0
          %2291 = vmatprep.subr.mxu0 0.0
          %2292 = vmatpush1.msra.mxu0 0.0
          %2293 = vmatprep.subr.mxu0 0.0
          %2294 = vmatpush1.msra.mxu0 0.0
          %2295 = vmatprep.subr.mxu0 0.0
          %2296 = vmatpush1.msra.mxu0 0.0
          %2297 = vmatprep.subr.mxu0 0.0
          %2298 = vmatpush1.msra.mxu0 0.0
          %2299 = vmatprep.subr.mxu0 0.0
          %2300 = vmatpush1.msra.mxu0 0.0
          %2301 = vmatprep.subr.mxu0 0.0
          %2302 = vmatpush1.msra.mxu0 0.0
          %2303 = vmatprep.subr.mxu0 0.0
          %2304 = vmatpush1.msra.mxu0 0.0
          %2305 = vmatprep.mubr.f32.mxu0 0.0
          %2306 = vmatmul.mubr.f32.gmra.mrb[0].mxu0 %v2236
          %v2307 = vpop.f32.mrb[0].mxu0
          %v2308 = vadd.f32 0.0, %v2307
          %v2309 = vpop.f32.mrb[0].mxu0
          %2310 = vmatprep.mubr.f32.mxu0 0.0
          %2311 = vmatmul.mubr.f32.gmra.mrb[0].mxu0 %v2239
          %v2312 = vpop.f32.mrb[0].mxu0
          %v2313 = vadd.f32 0.0, %v2312
          %v2314 = vpop.f32.mrb[0].mxu0
          %2315 = vdwg.mxu0
          %2316 = vmatprep.subr.mxu0 0.0
          %2317 = vmatpush1.msra.mxu0 %v2221
          %2318 = vmatprep.subr.mxu0 0.0
          %2319 = vmatpush1.msra.mxu0 %v2222
          %2320 = vmatprep.subr.mxu0 0.0
          %2321 = vmatpush1.msra.mxu0 %v2223
          %2322 = vmatprep.subr.mxu0 0.0
          %2323 = vmatpush1.msra.mxu0 %v2224
          %2324 = vmatprep.subr.mxu0 0.0
          %2325 = vmatpush1.msra.mxu0 0.0
          %2326 = vmatprep.subr.mxu0 0.0
          %2327 = vmatpush1.msra.mxu0 0.0
          %2328 = vmatprep.subr.mxu0 0.0
          %2329 = vmatpush1.msra.mxu0 0.0
          %2330 = vmatprep.subr.mxu0 0.0
          %2331 = vmatpush1.msra.mxu0 0.0
          %2332 = vmatprep.subr.mxu0 0.0
          %2333 = vmatpush1.msra.mxu0 0.0
          %2334 = vmatprep.subr.mxu0 0.0
          %2335 = vmatpush1.msra.mxu0 0.0
          %2336 = vmatprep.subr.mxu0 0.0
          %2337 = vmatpush1.msra.mxu0 0.0
          %2338 = vmatprep.subr.mxu0 0.0
          %2339 = vmatpush1.msra.mxu0 0.0
          %2340 = vmatprep.subr.mxu0 0.0
          %2341 = vmatpush1.msra.mxu0 0.0
          %2342 = vmatprep.subr.mxu0 0.0
          %2343 = vmatpush1.msra.mxu0 0.0
          %2344 = vmatprep.subr.mxu0 0.0
          %2345 = vmatpush1.msra.mxu0 0.0
          %2346 = vmatprep.subr.mxu0 0.0
          %2347 = vmatpush1.msra.mxu0 0.0
          %2348 = vmatprep.subr.mxu0 0.0
          %2349 = vmatpush1.msra.mxu0 0.0
          %2350 = vmatprep.subr.mxu0 0.0
          %2351 = vmatpush1.msra.mxu0 0.0
          %2352 = vmatprep.subr.mxu0 0.0
          %2353 = vmatpush1.msra.mxu0 0.0
          %2354 = vmatprep.subr.mxu0 0.0
          %2355 = vmatpush1.msra.mxu0 0.0
          %2356 = vmatprep.subr.mxu0 0.0
          %2357 = vmatpush1.msra.mxu0 0.0
          %2358 = vmatprep.subr.mxu0 0.0
          %2359 = vmatpush1.msra.mxu0 0.0
          %2360 = vmatprep.subr.mxu0 0.0
          %2361 = vmatpush1.msra.mxu0 0.0
          %2362 = vmatprep.subr.mxu0 0.0
          %2363 = vmatpush1.msra.mxu0 0.0
          %2364 = vmatprep.subr.mxu0 0.0
          %2365 = vmatpush1.msra.mxu0 0.0
          %2366 = vmatprep.subr.mxu0 0.0
          %2367 = vmatpush1.msra.mxu0 0.0
          %2368 = vmatprep.subr.mxu0 0.0
          %2369 = vmatpush1.msra.mxu0 0.0
          %2370 = vmatprep.subr.mxu0 0.0
          %2371 = vmatpush1.msra.mxu0 0.0
          %2372 = vmatprep.subr.mxu0 0.0
          %2373 = vmatpush1.msra.mxu0 0.0
          %2374 = vmatprep.subr.mxu0 0.0
          %2375 = vmatpush1.msra.mxu0 0.0
          %2376 = vmatprep.subr.mxu0 0.0
          %2377 = vmatpush1.msra.mxu0 0.0
          %2378 = vmatprep.subr.mxu0 0.0
          %2379 = vmatpush1.msra.mxu0 0.0
          %2380 = vmatprep.mubr.f32.mxu0 0.0
          %2381 = vmatmul.mubr.f32.gmra.mrb[0].mxu0 %v2236
          %v2382 = vpop.f32.mrb[0].mxu0
          %v2383 = vadd.f32 0.0, %v2382
          %v2384 = vpop.f32.mrb[0].mxu0
          %2385 = vmatprep.mubr.f32.mxu0 0.0
          %2386 = vmatmul.mubr.f32.gmra.mrb[0].mxu0 %v2239
          %v2387 = vpop.f32.mrb[0].mxu0
          %v2388 = vadd.f32 0.0, %v2387
          %v2389 = vpop.f32.mrb[0].mxu0
          %2390 = vdwg.mxu0
          %v2391 = vmul.f32 %v2308, %v2383
          %v2392 = vmul.f32 %v2313, %v2388
          %v2393 = vadd.f32 %v2214, %v2391
          %v2394 = vadd.f32 %v2215, %v2392
          %2395 = vrot.lane.b32.xlu0 %v2206, 96
          %v2396 = vpop.permute.xlu0 %2395
          %2397 = vrot.lane.b32.xlu0 %v2209, 96
          %v2398 = vpop.permute.xlu0 %2397
          %v2399 = vsel %vm2197, %v2396, 0
          %v2401 = vsel %vm2197, %v2398, 0
          %2403 = vmatprep.subr.mxu0 0.0
          %2404 = vmatpush1.msra.mxu0 %v2216
          %2405 = vmatprep.subr.mxu0 0.0
          %2406 = vmatpush1.msra.mxu0 %v2217
          %2407 = vmatprep.subr.mxu0 0.0
          %2408 = vmatpush1.msra.mxu0 %v2218
          %2409 = vmatprep.subr.mxu0 0.0
          %2410 = vmatpush1.msra.mxu0 %v2219
          %2411 = vmatprep.subr.mxu0 0.0
          %2412 = vmatpush1.msra.mxu0 0.0
          %2413 = vmatprep.subr.mxu0 0.0
          %2414 = vmatpush1.msra.mxu0 0.0
          %2415 = vmatprep.subr.mxu0 0.0
          %2416 = vmatpush1.msra.mxu0 0.0
          %2417 = vmatprep.subr.mxu0 0.0
          %2418 = vmatpush1.msra.mxu0 0.0
          %2419 = vmatprep.subr.mxu0 0.0
          %2420 = vmatpush1.msra.mxu0 0.0
          %2421 = vmatprep.subr.mxu0 0.0
          %2422 = vmatpush1.msra.mxu0 0.0
          %2423 = vmatprep.subr.mxu0 0.0
          %2424 = vmatpush1.msra.mxu0 0.0
          %2425 = vmatprep.subr.mxu0 0.0
          %2426 = vmatpush1.msra.mxu0 0.0
          %2427 = vmatprep.subr.mxu0 0.0
          %2428 = vmatpush1.msra.mxu0 0.0
          %2429 = vmatprep.subr.mxu0 0.0
          %2430 = vmatpush1.msra.mxu0 0.0
          %2431 = vmatprep.subr.mxu0 0.0
          %2432 = vmatpush1.msra.mxu0 0.0
          %2433 = vmatprep.subr.mxu0 0.0
          %2434 = vmatpush1.msra.mxu0 0.0
          %2435 = vmatprep.subr.mxu0 0.0
          %2436 = vmatpush1.msra.mxu0 0.0
          %2437 = vmatprep.subr.mxu0 0.0
          %2438 = vmatpush1.msra.mxu0 0.0
          %2439 = vmatprep.subr.mxu0 0.0
          %2440 = vmatpush1.msra.mxu0 0.0
          %2441 = vmatprep.subr.mxu0 0.0
          %2442 = vmatpush1.msra.mxu0 0.0
          %2443 = vmatprep.subr.mxu0 0.0
          %2444 = vmatpush1.msra.mxu0 0.0
          %2445 = vmatprep.subr.mxu0 0.0
          %2446 = vmatpush1.msra.mxu0 0.0
          %2447 = vmatprep.subr.mxu0 0.0
          %2448 = vmatpush1.msra.mxu0 0.0
          %2449 = vmatprep.subr.mxu0 0.0
          %2450 = vmatpush1.msra.mxu0 0.0
          %2451 = vmatprep.subr.mxu0 0.0
          %2452 = vmatpush1.msra.mxu0 0.0
          %2453 = vmatprep.subr.mxu0 0.0
          %2454 = vmatpush1.msra.mxu0 0.0
          %2455 = vmatprep.subr.mxu0 0.0
          %2456 = vmatpush1.msra.mxu0 0.0
          %2457 = vmatprep.subr.mxu0 0.0
          %2458 = vmatpush1.msra.mxu0 0.0
          %2459 = vmatprep.subr.mxu0 0.0
          %2460 = vmatpush1.msra.mxu0 0.0
          %2461 = vmatprep.subr.mxu0 0.0
          %2462 = vmatpush1.msra.mxu0 0.0
          %2463 = vmatprep.subr.mxu0 0.0
          %2464 = vmatpush1.msra.mxu0 0.0
          %2465 = vmatprep.subr.mxu0 0.0
          %2466 = vmatpush1.msra.mxu0 0.0
          %2467 = vmatprep.mubr.f32.mxu0 0.0
          %2468 = vmatmul.mubr.f32.gmra.mrb[0].mxu0 %v2399
          %v2469 = vpop.f32.mrb[0].mxu0
          %v2470 = vadd.f32 0.0, %v2469
          %v2471 = vpop.f32.mrb[0].mxu0
          %2472 = vmatprep.mubr.f32.mxu0 0.0
          %2473 = vmatmul.mubr.f32.gmra.mrb[0].mxu0 %v2401
          %v2474 = vpop.f32.mrb[0].mxu0
          %v2475 = vadd.f32 0.0, %v2474
          %v2476 = vpop.f32.mrb[0].mxu0
          %2477 = vdwg.mxu0
          %2478 = vmatprep.subr.mxu0 0.0
          %2479 = vmatpush1.msra.mxu0 %v2221
          %2480 = vmatprep.subr.mxu0 0.0
          %2481 = vmatpush1.msra.mxu0 %v2222
          %2482 = vmatprep.subr.mxu0 0.0
          %2483 = vmatpush1.msra.mxu0 %v2223
          %2484 = vmatprep.subr.mxu0 0.0
          %2485 = vmatpush1.msra.mxu0 %v2224
          %2486 = vmatprep.subr.mxu0 0.0
          %2487 = vmatpush1.msra.mxu0 0.0
          %2488 = vmatprep.subr.mxu0 0.0
          %2489 = vmatpush1.msra.mxu0 0.0
          %2490 = vmatprep.subr.mxu0 0.0
          %2491 = vmatpush1.msra.mxu0 0.0
          %2492 = vmatprep.subr.mxu0 0.0
          %2493 = vmatpush1.msra.mxu0 0.0
          %2494 = vmatprep.subr.mxu0 0.0
          %2495 = vmatpush1.msra.mxu0 0.0
          %2496 = vmatprep.subr.mxu0 0.0
          %2497 = vmatpush1.msra.mxu0 0.0
          %2498 = vmatprep.subr.mxu0 0.0
          %2499 = vmatpush1.msra.mxu0 0.0
          %2500 = vmatprep.subr.mxu0 0.0
          %2501 = vmatpush1.msra.mxu0 0.0
          %2502 = vmatprep.subr.mxu0 0.0
          %2503 = vmatpush1.msra.mxu0 0.0
          %2504 = vmatprep.subr.mxu0 0.0
          %2505 = vmatpush1.msra.mxu0 0.0
          %2506 = vmatprep.subr.mxu0 0.0
          %2507 = vmatpush1.msra.mxu0 0.0
          %2508 = vmatprep.subr.mxu0 0.0
          %2509 = vmatpush1.msra.mxu0 0.0
          %2510 = vmatprep.subr.mxu0 0.0
          %2511 = vmatpush1.msra.mxu0 0.0
          %2512 = vmatprep.subr.mxu0 0.0
          %2513 = vmatpush1.msra.mxu0 0.0
          %2514 = vmatprep.subr.mxu0 0.0
          %2515 = vmatpush1.msra.mxu0 0.0
          %2516 = vmatprep.subr.mxu0 0.0
          %2517 = vmatpush1.msra.mxu0 0.0
          %2518 = vmatprep.subr.mxu0 0.0
          %2519 = vmatpush1.msra.mxu0 0.0
          %2520 = vmatprep.subr.mxu0 0.0
          %2521 = vmatpush1.msra.mxu0 0.0
          %2522 = vmatprep.subr.mxu0 0.0
          %2523 = vmatpush1.msra.mxu0 0.0
          %2524 = vmatprep.subr.mxu0 0.0
          %2525 = vmatpush1.msra.mxu0 0.0
          %2526 = vmatprep.subr.mxu0 0.0
          %2527 = vmatpush1.msra.mxu0 0.0
          %2528 = vmatprep.subr.mxu0 0.0
          %2529 = vmatpush1.msra.mxu0 0.0
          %2530 = vmatprep.subr.mxu0 0.0
          %2531 = vmatpush1.msra.mxu0 0.0
          %2532 = vmatprep.subr.mxu0 0.0
          %2533 = vmatpush1.msra.mxu0 0.0
          %2534 = vmatprep.subr.mxu0 0.0
          %2535 = vmatpush1.msra.mxu0 0.0
          %2536 = vmatprep.subr.mxu0 0.0
          %2537 = vmatpush1.msra.mxu0 0.0
          %2538 = vmatprep.subr.mxu0 0.0
          %2539 = vmatpush1.msra.mxu0 0.0
          %2540 = vmatprep.subr.mxu0 0.0
          %2541 = vmatpush1.msra.mxu0 0.0
          %2542 = vmatprep.mubr.f32.mxu0 0.0
          %2543 = vmatmul.mubr.f32.gmra.mrb[0].mxu0 %v2399
          %v2544 = vpop.f32.mrb[0].mxu0
          %v2545 = vadd.f32 0.0, %v2544
          %v2546 = vpop.f32.mrb[0].mxu0
          %2547 = vmatprep.mubr.f32.mxu0 0.0
          %2548 = vmatmul.mubr.f32.gmra.mrb[0].mxu0 %v2401
          %v2549 = vpop.f32.mrb[0].mxu0
          %v2550 = vadd.f32 0.0, %v2549
          %v2551 = vpop.f32.mrb[0].mxu0
          %2552 = vdwg.mxu0
          %v2553 = vmul.f32 %v2470, %v2545
          %v2554 = vmul.f32 %v2475, %v2550
          %v2555 = vadd.f32 %v2393, %v2553
          %v2556 = vadd.f32 %v2394, %v2554
          %2557 = vrot.lane.b32.xlu0 %v2206, 64
          %v2558 = vpop.permute.xlu0 %2557
          %2559 = vrot.lane.b32.xlu0 %v2209, 64
          %v2560 = vpop.permute.xlu0 %2559
          %v2561 = vsel %vm2197, %v2558, 0
          %v2563 = vsel %vm2197, %v2560, 0
          %2565 = vmatprep.subr.mxu0 0.0
          %2566 = vmatpush1.msra.mxu0 %v2216
          %2567 = vmatprep.subr.mxu0 0.0
          %2568 = vmatpush1.msra.mxu0 %v2217
          %2569 = vmatprep.subr.mxu0 0.0
          %2570 = vmatpush1.msra.mxu0 %v2218
          %2571 = vmatprep.subr.mxu0 0.0
          %2572 = vmatpush1.msra.mxu0 %v2219
          %2573 = vmatprep.subr.mxu0 0.0
          %2574 = vmatpush1.msra.mxu0 0.0
          %2575 = vmatprep.subr.mxu0 0.0
          %2576 = vmatpush1.msra.mxu0 0.0
          %2577 = vmatprep.subr.mxu0 0.0
          %2578 = vmatpush1.msra.mxu0 0.0
          %2579 = vmatprep.subr.mxu0 0.0
          %2580 = vmatpush1.msra.mxu0 0.0
          %2581 = vmatprep.subr.mxu0 0.0
          %2582 = vmatpush1.msra.mxu0 0.0
          %2583 = vmatprep.subr.mxu0 0.0
          %2584 = vmatpush1.msra.mxu0 0.0
          %2585 = vmatprep.subr.mxu0 0.0
          %2586 = vmatpush1.msra.mxu0 0.0
          %2587 = vmatprep.subr.mxu0 0.0
          %2588 = vmatpush1.msra.mxu0 0.0
          %2589 = vmatprep.subr.mxu0 0.0
          %2590 = vmatpush1.msra.mxu0 0.0
          %2591 = vmatprep.subr.mxu0 0.0
          %2592 = vmatpush1.msra.mxu0 0.0
          %2593 = vmatprep.subr.mxu0 0.0
          %2594 = vmatpush1.msra.mxu0 0.0
          %2595 = vmatprep.subr.mxu0 0.0
          %2596 = vmatpush1.msra.mxu0 0.0
          %2597 = vmatprep.subr.mxu0 0.0
          %2598 = vmatpush1.msra.mxu0 0.0
          %2599 = vmatprep.subr.mxu0 0.0
          %2600 = vmatpush1.msra.mxu0 0.0
          %2601 = vmatprep.subr.mxu0 0.0
          %2602 = vmatpush1.msra.mxu0 0.0
          %2603 = vmatprep.subr.mxu0 0.0
          %2604 = vmatpush1.msra.mxu0 0.0
          %2605 = vmatprep.subr.mxu0 0.0
          %2606 = vmatpush1.msra.mxu0 0.0
          %2607 = vmatprep.subr.mxu0 0.0
          %2608 = vmatpush1.msra.mxu0 0.0
          %2609 = vmatprep.subr.mxu0 0.0
          %2610 = vmatpush1.msra.mxu0 0.0
          %2611 = vmatprep.subr.mxu0 0.0
          %2612 = vmatpush1.msra.mxu0 0.0
          %2613 = vmatprep.subr.mxu0 0.0
          %2614 = vmatpush1.msra.mxu0 0.0
          %2615 = vmatprep.subr.mxu0 0.0
          %2616 = vmatpush1.msra.mxu0 0.0
          %2617 = vmatprep.subr.mxu0 0.0
          %2618 = vmatpush1.msra.mxu0 0.0
          %2619 = vmatprep.subr.mxu0 0.0
          %2620 = vmatpush1.msra.mxu0 0.0
          %2621 = vmatprep.subr.mxu0 0.0
          %2622 = vmatpush1.msra.mxu0 0.0
          %2623 = vmatprep.subr.mxu0 0.0
          %2624 = vmatpush1.msra.mxu0 0.0
          %2625 = vmatprep.subr.mxu0 0.0
          %2626 = vmatpush1.msra.mxu0 0.0
          %2627 = vmatprep.subr.mxu0 0.0
          %2628 = vmatpush1.msra.mxu0 0.0
          %2629 = vmatprep.mubr.f32.mxu0 0.0
          %2630 = vmatmul.mubr.f32.gmra.mrb[0].mxu0 %v2561
          %v2631 = vpop.f32.mrb[0].mxu0
          %v2632 = vadd.f32 0.0, %v2631
          %v2633 = vpop.f32.mrb[0].mxu0
          %2634 = vmatprep.mubr.f32.mxu0 0.0
          %2635 = vmatmul.mubr.f32.gmra.mrb[0].mxu0 %v2563
          %v2636 = vpop.f32.mrb[0].mxu0
          %v2637 = vadd.f32 0.0, %v2636
          %v2638 = vpop.f32.mrb[0].mxu0
          %2639 = vdwg.mxu0
          %2640 = vmatprep.subr.mxu0 0.0
          %2641 = vmatpush1.msra.mxu0 %v2221
          %2642 = vmatprep.subr.mxu0 0.0
          %2643 = vmatpush1.msra.mxu0 %v2222
          %2644 = vmatprep.subr.mxu0 0.0
          %2645 = vmatpush1.msra.mxu0 %v2223
          %2646 = vmatprep.subr.mxu0 0.0
          %2647 = vmatpush1.msra.mxu0 %v2224
          %2648 = vmatprep.subr.mxu0 0.0
          %2649 = vmatpush1.msra.mxu0 0.0
          %2650 = vmatprep.subr.mxu0 0.0
          %2651 = vmatpush1.msra.mxu0 0.0
          %2652 = vmatprep.subr.mxu0 0.0
          %2653 = vmatpush1.msra.mxu0 0.0
          %2654 = vmatprep.subr.mxu0 0.0
          %2655 = vmatpush1.msra.mxu0 0.0
          %2656 = vmatprep.subr.mxu0 0.0
          %2657 = vmatpush1.msra.mxu0 0.0
          %2658 = vmatprep.subr.mxu0 0.0
          %2659 = vmatpush1.msra.mxu0 0.0
          %2660 = vmatprep.subr.mxu0 0.0
          %2661 = vmatpush1.msra.mxu0 0.0
          %2662 = vmatprep.subr.mxu0 0.0
          %2663 = vmatpush1.msra.mxu0 0.0
          %2664 = vmatprep.subr.mxu0 0.0
          %2665 = vmatpush1.msra.mxu0 0.0
          %2666 = vmatprep.subr.mxu0 0.0
          %2667 = vmatpush1.msra.mxu0 0.0
          %2668 = vmatprep.subr.mxu0 0.0
          %2669 = vmatpush1.msra.mxu0 0.0
          %2670 = vmatprep.subr.mxu0 0.0
          %2671 = vmatpush1.msra.mxu0 0.0
          %2672 = vmatprep.subr.mxu0 0.0
          %2673 = vmatpush1.msra.mxu0 0.0
          %2674 = vmatprep.subr.mxu0 0.0
          %2675 = vmatpush1.msra.mxu0 0.0
          %2676 = vmatprep.subr.mxu0 0.0
          %2677 = vmatpush1.msra.mxu0 0.0
          %2678 = vmatprep.subr.mxu0 0.0
          %2679 = vmatpush1.msra.mxu0 0.0
          %2680 = vmatprep.subr.mxu0 0.0
          %2681 = vmatpush1.msra.mxu0 0.0
          %2682 = vmatprep.subr.mxu0 0.0
          %2683 = vmatpush1.msra.mxu0 0.0
          %2684 = vmatprep.subr.mxu0 0.0
          %2685 = vmatpush1.msra.mxu0 0.0
          %2686 = vmatprep.subr.mxu0 0.0
          %2687 = vmatpush1.msra.mxu0 0.0
          %2688 = vmatprep.subr.mxu0 0.0
          %2689 = vmatpush1.msra.mxu0 0.0
          %2690 = vmatprep.subr.mxu0 0.0
          %2691 = vmatpush1.msra.mxu0 0.0
          %2692 = vmatprep.subr.mxu0 0.0
          %2693 = vmatpush1.msra.mxu0 0.0
          %2694 = vmatprep.subr.mxu0 0.0
          %2695 = vmatpush1.msra.mxu0 0.0
          %2696 = vmatprep.subr.mxu0 0.0
          %2697 = vmatpush1.msra.mxu0 0.0
          %2698 = vmatprep.subr.mxu0 0.0
          %2699 = vmatpush1.msra.mxu0 0.0
          %2700 = vmatprep.subr.mxu0 0.0
          %2701 = vmatpush1.msra.mxu0 0.0
          %2702 = vmatprep.subr.mxu0 0.0
          %2703 = vmatpush1.msra.mxu0 0.0
          %2704 = vmatprep.mubr.f32.mxu0 0.0
          %2705 = vmatmul.mubr.f32.gmra.mrb[0].mxu0 %v2561
          %v2706 = vpop.f32.mrb[0].mxu0
          %v2707 = vadd.f32 0.0, %v2706
          %v2708 = vpop.f32.mrb[0].mxu0
          %2709 = vmatprep.mubr.f32.mxu0 0.0
          %2710 = vmatmul.mubr.f32.gmra.mrb[0].mxu0 %v2563
          %v2711 = vpop.f32.mrb[0].mxu0
          %v2712 = vadd.f32 0.0, %v2711
          %v2713 = vpop.f32.mrb[0].mxu0
          %2714 = vdwg.mxu0
          %v2715 = vmul.f32 %v2632, %v2707
          %v2716 = vmul.f32 %v2637, %v2712
          %v2717 = vadd.f32 %v2555, %v2715
          %v2718 = vadd.f32 %v2556, %v2716
          %2719 = vrot.lane.b32.xlu0 %v2206, 32
          %v2720 = vpop.permute.xlu0 %2719
          %2721 = vrot.lane.b32.xlu0 %v2209, 32
          %v2722 = vpop.permute.xlu0 %2721
          %v2723 = vsel %vm2197, %v2720, 0
          %v2725 = vsel %vm2197, %v2722, 0
          %2727 = vmatprep.subr.mxu0 0.0
          %2728 = vmatpush1.msra.mxu0 %v2226
          %2729 = vmatprep.subr.mxu0 0.0
          %2730 = vmatpush1.msra.mxu0 %v2227
          %2731 = vmatprep.subr.mxu0 0.0
          %2732 = vmatpush1.msra.mxu0 %v2228
          %2733 = vmatprep.subr.mxu0 0.0
          %2734 = vmatpush1.msra.mxu0 %v2229
          %2735 = vmatprep.subr.mxu0 0.0
          %2736 = vmatpush1.msra.mxu0 0.0
          %2737 = vmatprep.subr.mxu0 0.0
          %2738 = vmatpush1.msra.mxu0 0.0
          %2739 = vmatprep.subr.mxu0 0.0
          %2740 = vmatpush1.msra.mxu0 0.0
          %2741 = vmatprep.subr.mxu0 0.0
          %2742 = vmatpush1.msra.mxu0 0.0
          %2743 = vmatprep.subr.mxu0 0.0
          %2744 = vmatpush1.msra.mxu0 0.0
          %2745 = vmatprep.subr.mxu0 0.0
          %2746 = vmatpush1.msra.mxu0 0.0
          %2747 = vmatprep.subr.mxu0 0.0
          %2748 = vmatpush1.msra.mxu0 0.0
          %2749 = vmatprep.subr.mxu0 0.0
          %2750 = vmatpush1.msra.mxu0 0.0
          %2751 = vmatprep.subr.mxu0 0.0
          %2752 = vmatpush1.msra.mxu0 0.0
          %2753 = vmatprep.subr.mxu0 0.0
          %2754 = vmatpush1.msra.mxu0 0.0
          %2755 = vmatprep.subr.mxu0 0.0
          %2756 = vmatpush1.msra.mxu0 0.0
          %2757 = vmatprep.subr.mxu0 0.0
          %2758 = vmatpush1.msra.mxu0 0.0
          %2759 = vmatprep.subr.mxu0 0.0
          %2760 = vmatpush1.msra.mxu0 0.0
          %2761 = vmatprep.subr.mxu0 0.0
          %2762 = vmatpush1.msra.mxu0 0.0
          %2763 = vmatprep.subr.mxu0 0.0
          %2764 = vmatpush1.msra.mxu0 0.0
          %2765 = vmatprep.subr.mxu0 0.0
          %2766 = vmatpush1.msra.mxu0 0.0
          %2767 = vmatprep.subr.mxu0 0.0
          %2768 = vmatpush1.msra.mxu0 0.0
          %2769 = vmatprep.subr.mxu0 0.0
          %2770 = vmatpush1.msra.mxu0 0.0
          %2771 = vmatprep.subr.mxu0 0.0
          %2772 = vmatpush1.msra.mxu0 0.0
          %2773 = vmatprep.subr.mxu0 0.0
          %2774 = vmatpush1.msra.mxu0 0.0
          %2775 = vmatprep.subr.mxu0 0.0
          %2776 = vmatpush1.msra.mxu0 0.0
          %2777 = vmatprep.subr.mxu0 0.0
          %2778 = vmatpush1.msra.mxu0 0.0
          %2779 = vmatprep.subr.mxu0 0.0
          %2780 = vmatpush1.msra.mxu0 0.0
          %2781 = vmatprep.subr.mxu0 0.0
          %2782 = vmatpush1.msra.mxu0 0.0
          %2783 = vmatprep.subr.mxu0 0.0
          %2784 = vmatpush1.msra.mxu0 0.0
          %2785 = vmatprep.subr.mxu0 0.0
          %2786 = vmatpush1.msra.mxu0 0.0
          %2787 = vmatprep.subr.mxu0 0.0
          %2788 = vmatpush1.msra.mxu0 0.0
          %2789 = vmatprep.subr.mxu0 0.0
          %2790 = vmatpush1.msra.mxu0 0.0
          %2791 = vmatprep.mubr.f32.mxu0 0.0
          %2792 = vmatmul.mubr.f32.gmra.mrb[0].mxu0 %v2723
          %v2793 = vpop.f32.mrb[0].mxu0
          %v2794 = vadd.f32 0.0, %v2793
          %v2795 = vpop.f32.mrb[0].mxu0
          %2796 = vmatprep.mubr.f32.mxu0 0.0
          %2797 = vmatmul.mubr.f32.gmra.mrb[0].mxu0 %v2725
          %v2798 = vpop.f32.mrb[0].mxu0
          %v2799 = vadd.f32 0.0, %v2798
          %v2800 = vpop.f32.mrb[0].mxu0
          %2801 = vdwg.mxu0
          %2802 = vmatprep.subr.mxu0 0.0
          %2803 = vmatpush1.msra.mxu0 %v2231
          %2804 = vmatprep.subr.mxu0 0.0
          %2805 = vmatpush1.msra.mxu0 %v2232
          %2806 = vmatprep.subr.mxu0 0.0
          %2807 = vmatpush1.msra.mxu0 %v2233
          %2808 = vmatprep.subr.mxu0 0.0
          %2809 = vmatpush1.msra.mxu0 %v2234
          %2810 = vmatprep.subr.mxu0 0.0
          %2811 = vmatpush1.msra.mxu0 0.0
          %2812 = vmatprep.subr.mxu0 0.0
          %2813 = vmatpush1.msra.mxu0 0.0
          %2814 = vmatprep.subr.mxu0 0.0
          %2815 = vmatpush1.msra.mxu0 0.0
          %2816 = vmatprep.subr.mxu0 0.0
          %2817 = vmatpush1.msra.mxu0 0.0
          %2818 = vmatprep.subr.mxu0 0.0
          %2819 = vmatpush1.msra.mxu0 0.0
          %2820 = vmatprep.subr.mxu0 0.0
          %2821 = vmatpush1.msra.mxu0 0.0
          %2822 = vmatprep.subr.mxu0 0.0
          %2823 = vmatpush1.msra.mxu0 0.0
          %2824 = vmatprep.subr.mxu0 0.0
          %2825 = vmatpush1.msra.mxu0 0.0
          %2826 = vmatprep.subr.mxu0 0.0
          %2827 = vmatpush1.msra.mxu0 0.0
          %2828 = vmatprep.subr.mxu0 0.0
          %2829 = vmatpush1.msra.mxu0 0.0
          %2830 = vmatprep.subr.mxu0 0.0
          %2831 = vmatpush1.msra.mxu0 0.0
          %2832 = vmatprep.subr.mxu0 0.0
          %2833 = vmatpush1.msra.mxu0 0.0
          %2834 = vmatprep.subr.mxu0 0.0
          %2835 = vmatpush1.msra.mxu0 0.0
          %2836 = vmatprep.subr.mxu0 0.0
          %2837 = vmatpush1.msra.mxu0 0.0
          %2838 = vmatprep.subr.mxu0 0.0
          %2839 = vmatpush1.msra.mxu0 0.0
          %2840 = vmatprep.subr.mxu0 0.0
          %2841 = vmatpush1.msra.mxu0 0.0
          %2842 = vmatprep.subr.mxu0 0.0
          %2843 = vmatpush1.msra.mxu0 0.0
          %2844 = vmatprep.subr.mxu0 0.0
          %2845 = vmatpush1.msra.mxu0 0.0
          %2846 = vmatprep.subr.mxu0 0.0
          %2847 = vmatpush1.msra.mxu0 0.0
          %2848 = vmatprep.subr.mxu0 0.0
          %2849 = vmatpush1.msra.mxu0 0.0
          %2850 = vmatprep.subr.mxu0 0.0
          %2851 = vmatpush1.msra.mxu0 0.0
          %2852 = vmatprep.subr.mxu0 0.0
          %2853 = vmatpush1.msra.mxu0 0.0
          %2854 = vmatprep.subr.mxu0 0.0
          %2855 = vmatpush1.msra.mxu0 0.0
          %2856 = vmatprep.subr.mxu0 0.0
          %2857 = vmatpush1.msra.mxu0 0.0
          %2858 = vmatprep.subr.mxu0 0.0
          %2859 = vmatpush1.msra.mxu0 0.0
          %2860 = vmatprep.subr.mxu0 0.0
          %2861 = vmatpush1.msra.mxu0 0.0
          %2862 = vmatprep.subr.mxu0 0.0
          %2863 = vmatpush1.msra.mxu0 0.0
          %2864 = vmatprep.subr.mxu0 0.0
          %2865 = vmatpush1.msra.mxu0 0.0
          %2866 = vmatprep.mubr.f32.mxu0 0.0
          %2867 = vmatmul.mubr.f32.gmra.mrb[0].mxu0 %v2723
          %v2868 = vpop.f32.mrb[0].mxu0
          %v2869 = vadd.f32 0.0, %v2868
          %v2870 = vpop.f32.mrb[0].mxu0
          %2871 = vmatprep.mubr.f32.mxu0 0.0
          %2872 = vmatmul.mubr.f32.gmra.mrb[0].mxu0 %v2725
          %v2873 = vpop.f32.mrb[0].mxu0
          %v2874 = vadd.f32 0.0, %v2873
          %v2875 = vpop.f32.mrb[0].mxu0
          %2876 = vdwg.mxu0
          %v2877 = vmul.f32 %v2794, %v2869
          %v2878 = vmul.f32 %v2799, %v2874
          %v2879 = vadd.f32 %v2717, %v2877
          %v2880 = vadd.f32 %v2718, %v2878
          %v2882 = vsel %vm2197, %v2207, 0
          %v2885 = vsel %vm2197, %v2210, 0
          %2887 = vmatprep.subr.mxu0 0.0
          %2888 = vmatpush1.msra.mxu0 %v2226
          %2889 = vmatprep.subr.mxu0 0.0
          %2890 = vmatpush1.msra.mxu0 %v2227
          %2891 = vmatprep.subr.mxu0 0.0
          %2892 = vmatpush1.msra.mxu0 %v2228
          %2893 = vmatprep.subr.mxu0 0.0
          %2894 = vmatpush1.msra.mxu0 %v2229
          %2895 = vmatprep.subr.mxu0 0.0
          %2896 = vmatpush1.msra.mxu0 0.0
          %2897 = vmatprep.subr.mxu0 0.0
          %2898 = vmatpush1.msra.mxu0 0.0
          %2899 = vmatprep.subr.mxu0 0.0
          %2900 = vmatpush1.msra.mxu0 0.0
          %2901 = vmatprep.subr.mxu0 0.0
          %2902 = vmatpush1.msra.mxu0 0.0
          %2903 = vmatprep.subr.mxu0 0.0
          %2904 = vmatpush1.msra.mxu0 0.0
          %2905 = vmatprep.subr.mxu0 0.0
          %2906 = vmatpush1.msra.mxu0 0.0
          %2907 = vmatprep.subr.mxu0 0.0
          %2908 = vmatpush1.msra.mxu0 0.0
          %2909 = vmatprep.subr.mxu0 0.0
          %2910 = vmatpush1.msra.mxu0 0.0
          %2911 = vmatprep.subr.mxu0 0.0
          %2912 = vmatpush1.msra.mxu0 0.0
          %2913 = vmatprep.subr.mxu0 0.0
          %2914 = vmatpush1.msra.mxu0 0.0
          %2915 = vmatprep.subr.mxu0 0.0
          %2916 = vmatpush1.msra.mxu0 0.0
          %2917 = vmatprep.subr.mxu0 0.0
          %2918 = vmatpush1.msra.mxu0 0.0
          %2919 = vmatprep.subr.mxu0 0.0
          %2920 = vmatpush1.msra.mxu0 0.0
          %2921 = vmatprep.subr.mxu0 0.0
          %2922 = vmatpush1.msra.mxu0 0.0
          %2923 = vmatprep.subr.mxu0 0.0
          %2924 = vmatpush1.msra.mxu0 0.0
          %2925 = vmatprep.subr.mxu0 0.0
          %2926 = vmatpush1.msra.mxu0 0.0
          %2927 = vmatprep.subr.mxu0 0.0
          %2928 = vmatpush1.msra.mxu0 0.0
          %2929 = vmatprep.subr.mxu0 0.0
          %2930 = vmatpush1.msra.mxu0 0.0
          %2931 = vmatprep.subr.mxu0 0.0
          %2932 = vmatpush1.msra.mxu0 0.0
          %2933 = vmatprep.subr.mxu0 0.0
          %2934 = vmatpush1.msra.mxu0 0.0
          %2935 = vmatprep.subr.mxu0 0.0
          %2936 = vmatpush1.msra.mxu0 0.0
          %2937 = vmatprep.subr.mxu0 0.0
          %2938 = vmatpush1.msra.mxu0 0.0
          %2939 = vmatprep.subr.mxu0 0.0
          %2940 = vmatpush1.msra.mxu0 0.0
          %2941 = vmatprep.subr.mxu0 0.0
          %2942 = vmatpush1.msra.mxu0 0.0
          %2943 = vmatprep.subr.mxu0 0.0
          %2944 = vmatpush1.msra.mxu0 0.0
          %2945 = vmatprep.subr.mxu0 0.0
          %2946 = vmatpush1.msra.mxu0 0.0
          %2947 = vmatprep.subr.mxu0 0.0
          %2948 = vmatpush1.msra.mxu0 0.0
          %2949 = vmatprep.subr.mxu0 0.0
          %2950 = vmatpush1.msra.mxu0 0.0
          %2951 = vmatprep.mubr.f32.mxu0 0.0
          %2952 = vmatmul.mubr.f32.gmra.mrb[0].mxu0 %v2882
          %v2953 = vpop.f32.mrb[0].mxu0
          %v2954 = vadd.f32 0.0, %v2953
          %v2955 = vpop.f32.mrb[0].mxu0
          %2956 = vmatprep.mubr.f32.mxu0 0.0
          %2957 = vmatmul.mubr.f32.gmra.mrb[0].mxu0 %v2885
          %v2958 = vpop.f32.mrb[0].mxu0
          %v2959 = vadd.f32 0.0, %v2958
          %v2960 = vpop.f32.mrb[0].mxu0
          %2961 = vdwg.mxu0
          %2962 = vmatprep.subr.mxu0 0.0
          %2963 = vmatpush1.msra.mxu0 %v2231
          %2964 = vmatprep.subr.mxu0 0.0
          %2965 = vmatpush1.msra.mxu0 %v2232
          %2966 = vmatprep.subr.mxu0 0.0
          %2967 = vmatpush1.msra.mxu0 %v2233
          %2968 = vmatprep.subr.mxu0 0.0
          %2969 = vmatpush1.msra.mxu0 %v2234
          %2970 = vmatprep.subr.mxu0 0.0
          %2971 = vmatpush1.msra.mxu0 0.0
          %2972 = vmatprep.subr.mxu0 0.0
          %2973 = vmatpush1.msra.mxu0 0.0
          %2974 = vmatprep.subr.mxu0 0.0
          %2975 = vmatpush1.msra.mxu0 0.0
          %2976 = vmatprep.subr.mxu0 0.0
          %2977 = vmatpush1.msra.mxu0 0.0
          %2978 = vmatprep.subr.mxu0 0.0
          %2979 = vmatpush1.msra.mxu0 0.0
          %2980 = vmatprep.subr.mxu0 0.0
          %2981 = vmatpush1.msra.mxu0 0.0
          %2982 = vmatprep.subr.mxu0 0.0
          %2983 = vmatpush1.msra.mxu0 0.0
          %2984 = vmatprep.subr.mxu0 0.0
          %2985 = vmatpush1.msra.mxu0 0.0
          %2986 = vmatprep.subr.mxu0 0.0
          %2987 = vmatpush1.msra.mxu0 0.0
          %2988 = vmatprep.subr.mxu0 0.0
          %2989 = vmatpush1.msra.mxu0 0.0
          %2990 = vmatprep.subr.mxu0 0.0
          %2991 = vmatpush1.msra.mxu0 0.0
          %2992 = vmatprep.subr.mxu0 0.0
          %2993 = vmatpush1.msra.mxu0 0.0
          %2994 = vmatprep.subr.mxu0 0.0
          %2995 = vmatpush1.msra.mxu0 0.0
          %2996 = vmatprep.subr.mxu0 0.0
          %2997 = vmatpush1.msra.mxu0 0.0
          %2998 = vmatprep.subr.mxu0 0.0
          %2999 = vmatpush1.msra.mxu0 0.0
          %3000 = vmatprep.subr.mxu0 0.0
          %3001 = vmatpush1.msra.mxu0 0.0
          %3002 = vmatprep.subr.mxu0 0.0
          %3003 = vmatpush1.msra.mxu0 0.0
          %3004 = vmatprep.subr.mxu0 0.0
          %3005 = vmatpush1.msra.mxu0 0.0
          %3006 = vmatprep.subr.mxu0 0.0
          %3007 = vmatpush1.msra.mxu0 0.0
          %3008 = vmatprep.subr.mxu0 0.0
          %3009 = vmatpush1.msra.mxu0 0.0
          %3010 = vmatprep.subr.mxu0 0.0
          %3011 = vmatpush1.msra.mxu0 0.0
          %3012 = vmatprep.subr.mxu0 0.0
          %3013 = vmatpush1.msra.mxu0 0.0
          %3014 = vmatprep.subr.mxu0 0.0
          %3015 = vmatpush1.msra.mxu0 0.0
          %3016 = vmatprep.subr.mxu0 0.0
          %3017 = vmatpush1.msra.mxu0 0.0
          %3018 = vmatprep.subr.mxu0 0.0
          %3019 = vmatpush1.msra.mxu0 0.0
          %3020 = vmatprep.subr.mxu0 0.0
          %3021 = vmatpush1.msra.mxu0 0.0
          %3022 = vmatprep.subr.mxu0 0.0
          %3023 = vmatpush1.msra.mxu0 0.0
          %3024 = vmatprep.subr.mxu0 0.0
          %3025 = vmatpush1.msra.mxu0 0.0
          %3026 = vmatprep.mubr.f32.mxu0 0.0
          %3027 = vmatmul.mubr.f32.gmra.mrb[0].mxu0 %v2882
          %v3028 = vpop.f32.mrb[0].mxu0
          %v3029 = vadd.f32 0.0, %v3028
          %v3030 = vpop.f32.mrb[0].mxu0
          %3031 = vmatprep.mubr.f32.mxu0 0.0
          %3032 = vmatmul.mubr.f32.gmra.mrb[0].mxu0 %v2885
          %v3033 = vpop.f32.mrb[0].mxu0
          %v3034 = vadd.f32 0.0, %v3033
          %v3035 = vpop.f32.mrb[0].mxu0
          %3036 = vdwg.mxu0
          %v3037 = vmul.f32 %v2954, %v3029
          %v3038 = vmul.f32 %v2959, %v3034
          %v3039 = vadd.f32 %v2879, %v3037
          %v3040 = vadd.f32 %v2880, %v3038
          %3041 = vrot.lane.b32.xlu0 %v2207, 96
          %v3042 = vpop.permute.xlu0 %3041
          %3043 = vrot.lane.b32.xlu0 %v2210, 96
          %v3044 = vpop.permute.xlu0 %3043
          %v3045 = vsel %vm2197, %v3042, 0
          %v3047 = vsel %vm2197, %v3044, 0
          %3049 = vmatprep.subr.mxu0 0.0
          %3050 = vmatpush1.msra.mxu0 %v2226
          %3051 = vmatprep.subr.mxu0 0.0
          %3052 = vmatpush1.msra.mxu0 %v2227
          %3053 = vmatprep.subr.mxu0 0.0
          %3054 = vmatpush1.msra.mxu0 %v2228
          %3055 = vmatprep.subr.mxu0 0.0
          %3056 = vmatpush1.msra.mxu0 %v2229
          %3057 = vmatprep.subr.mxu0 0.0
          %3058 = vmatpush1.msra.mxu0 0.0
          %3059 = vmatprep.subr.mxu0 0.0
          %3060 = vmatpush1.msra.mxu0 0.0
          %3061 = vmatprep.subr.mxu0 0.0
          %3062 = vmatpush1.msra.mxu0 0.0
          %3063 = vmatprep.subr.mxu0 0.0
          %3064 = vmatpush1.msra.mxu0 0.0
          %3065 = vmatprep.subr.mxu0 0.0
          %3066 = vmatpush1.msra.mxu0 0.0
          %3067 = vmatprep.subr.mxu0 0.0
          %3068 = vmatpush1.msra.mxu0 0.0
          %3069 = vmatprep.subr.mxu0 0.0
          %3070 = vmatpush1.msra.mxu0 0.0
          %3071 = vmatprep.subr.mxu0 0.0
          %3072 = vmatpush1.msra.mxu0 0.0
          %3073 = vmatprep.subr.mxu0 0.0
          %3074 = vmatpush1.msra.mxu0 0.0
          %3075 = vmatprep.subr.mxu0 0.0
          %3076 = vmatpush1.msra.mxu0 0.0
          %3077 = vmatprep.subr.mxu0 0.0
          %3078 = vmatpush1.msra.mxu0 0.0
          %3079 = vmatprep.subr.mxu0 0.0
          %3080 = vmatpush1.msra.mxu0 0.0
          %3081 = vmatprep.subr.mxu0 0.0
          %3082 = vmatpush1.msra.mxu0 0.0
          %3083 = vmatprep.subr.mxu0 0.0
          %3084 = vmatpush1.msra.mxu0 0.0
          %3085 = vmatprep.subr.mxu0 0.0
          %3086 = vmatpush1.msra.mxu0 0.0
          %3087 = vmatprep.subr.mxu0 0.0
          %3088 = vmatpush1.msra.mxu0 0.0
          %3089 = vmatprep.subr.mxu0 0.0
          %3090 = vmatpush1.msra.mxu0 0.0
          %3091 = vmatprep.subr.mxu0 0.0
          %3092 = vmatpush1.msra.mxu0 0.0
          %3093 = vmatprep.subr.mxu0 0.0
          %3094 = vmatpush1.msra.mxu0 0.0
          %3095 = vmatprep.subr.mxu0 0.0
          %3096 = vmatpush1.msra.mxu0 0.0
          %3097 = vmatprep.subr.mxu0 0.0
          %3098 = vmatpush1.msra.mxu0 0.0
          %3099 = vmatprep.subr.mxu0 0.0
          %3100 = vmatpush1.msra.mxu0 0.0
          %3101 = vmatprep.subr.mxu0 0.0
          %3102 = vmatpush1.msra.mxu0 0.0
          %3103 = vmatprep.subr.mxu0 0.0
          %3104 = vmatpush1.msra.mxu0 0.0
          %3105 = vmatprep.subr.mxu0 0.0
          %3106 = vmatpush1.msra.mxu0 0.0
          %3107 = vmatprep.subr.mxu0 0.0
          %3108 = vmatpush1.msra.mxu0 0.0
          %3109 = vmatprep.subr.mxu0 0.0
          %3110 = vmatpush1.msra.mxu0 0.0
          %3111 = vmatprep.subr.mxu0 0.0
          %3112 = vmatpush1.msra.mxu0 0.0
          %3113 = vmatprep.mubr.f32.mxu0 0.0
          %3114 = vmatmul.mubr.f32.gmra.mrb[0].mxu0 %v3045
          %v3115 = vpop.f32.mrb[0].mxu0
          %v3116 = vadd.f32 0.0, %v3115
          %v3117 = vpop.f32.mrb[0].mxu0
          %3118 = vmatprep.mubr.f32.mxu0 0.0
          %3119 = vmatmul.mubr.f32.gmra.mrb[0].mxu0 %v3047
          %v3120 = vpop.f32.mrb[0].mxu0
          %v3121 = vadd.f32 0.0, %v3120
          %v3122 = vpop.f32.mrb[0].mxu0
          %3123 = vdwg.mxu0
          %3124 = vmatprep.subr.mxu0 0.0
          %3125 = vmatpush1.msra.mxu0 %v2231
          %3126 = vmatprep.subr.mxu0 0.0
          %3127 = vmatpush1.msra.mxu0 %v2232
          %3128 = vmatprep.subr.mxu0 0.0
          %3129 = vmatpush1.msra.mxu0 %v2233
          %3130 = vmatprep.subr.mxu0 0.0
          %3131 = vmatpush1.msra.mxu0 %v2234
          %3132 = vmatprep.subr.mxu0 0.0
          %3133 = vmatpush1.msra.mxu0 0.0
          %3134 = vmatprep.subr.mxu0 0.0
          %3135 = vmatpush1.msra.mxu0 0.0
          %3136 = vmatprep.subr.mxu0 0.0
          %3137 = vmatpush1.msra.mxu0 0.0
          %3138 = vmatprep.subr.mxu0 0.0
          %3139 = vmatpush1.msra.mxu0 0.0
          %3140 = vmatprep.subr.mxu0 0.0
          %3141 = vmatpush1.msra.mxu0 0.0
          %3142 = vmatprep.subr.mxu0 0.0
          %3143 = vmatpush1.msra.mxu0 0.0
          %3144 = vmatprep.subr.mxu0 0.0
          %3145 = vmatpush1.msra.mxu0 0.0
          %3146 = vmatprep.subr.mxu0 0.0
          %3147 = vmatpush1.msra.mxu0 0.0
          %3148 = vmatprep.subr.mxu0 0.0
          %3149 = vmatpush1.msra.mxu0 0.0
          %3150 = vmatprep.subr.mxu0 0.0
          %3151 = vmatpush1.msra.mxu0 0.0
          %3152 = vmatprep.subr.mxu0 0.0
          %3153 = vmatpush1.msra.mxu0 0.0
          %3154 = vmatprep.subr.mxu0 0.0
          %3155 = vmatpush1.msra.mxu0 0.0
          %3156 = vmatprep.subr.mxu0 0.0
          %3157 = vmatpush1.msra.mxu0 0.0
          %3158 = vmatprep.subr.mxu0 0.0
          %3159 = vmatpush1.msra.mxu0 0.0
          %3160 = vmatprep.subr.mxu0 0.0
          %3161 = vmatpush1.msra.mxu0 0.0
          %3162 = vmatprep.subr.mxu0 0.0
          %3163 = vmatpush1.msra.mxu0 0.0
          %3164 = vmatprep.subr.mxu0 0.0
          %3165 = vmatpush1.msra.mxu0 0.0
          %3166 = vmatprep.subr.mxu0 0.0
          %3167 = vmatpush1.msra.mxu0 0.0
          %3168 = vmatprep.subr.mxu0 0.0
          %3169 = vmatpush1.msra.mxu0 0.0
          %3170 = vmatprep.subr.mxu0 0.0
          %3171 = vmatpush1.msra.mxu0 0.0
          %3172 = vmatprep.subr.mxu0 0.0
          %3173 = vmatpush1.msra.mxu0 0.0
          %3174 = vmatprep.subr.mxu0 0.0
          %3175 = vmatpush1.msra.mxu0 0.0
          %3176 = vmatprep.subr.mxu0 0.0
          %3177 = vmatpush1.msra.mxu0 0.0
          %3178 = vmatprep.subr.mxu0 0.0
          %3179 = vmatpush1.msra.mxu0 0.0
          %3180 = vmatprep.subr.mxu0 0.0
          %3181 = vmatpush1.msra.mxu0 0.0
          %3182 = vmatprep.subr.mxu0 0.0
          %3183 = vmatpush1.msra.mxu0 0.0
          %3184 = vmatprep.subr.mxu0 0.0
          %3185 = vmatpush1.msra.mxu0 0.0
          %3186 = vmatprep.subr.mxu0 0.0
          %3187 = vmatpush1.msra.mxu0 0.0
          %3188 = vmatprep.mubr.f32.mxu0 0.0
          %3189 = vmatmul.mubr.f32.gmra.mrb[0].mxu0 %v3045
          %v3190 = vpop.f32.mrb[0].mxu0
          %v3191 = vadd.f32 0.0, %v3190
          %v3192 = vpop.f32.mrb[0].mxu0
          %3193 = vmatprep.mubr.f32.mxu0 0.0
          %3194 = vmatmul.mubr.f32.gmra.mrb[0].mxu0 %v3047
          %v3195 = vpop.f32.mrb[0].mxu0
          %v3196 = vadd.f32 0.0, %v3195
          %v3197 = vpop.f32.mrb[0].mxu0
          %3198 = vdwg.mxu0
          %v3199 = vmul.f32 %v3116, %v3191
          %v3200 = vmul.f32 %v3121, %v3196
          %v3201 = vadd.f32 %v3039, %v3199
          %v3202 = vadd.f32 %v3040, %v3200
          %3203 = vrot.lane.b32.xlu0 %v2207, 64
          %v3204 = vpop.permute.xlu0 %3203
          %3205 = vrot.lane.b32.xlu0 %v2210, 64
          %v3206 = vpop.permute.xlu0 %3205
          %v3207 = vsel %vm2197, %v3204, 0
          %v3209 = vsel %vm2197, %v3206, 0
          %3211 = vmatprep.subr.mxu0 0.0
          %3212 = vmatpush1.msra.mxu0 %v2226
          %3213 = vmatprep.subr.mxu0 0.0
          %3214 = vmatpush1.msra.mxu0 %v2227
          %3215 = vmatprep.subr.mxu0 0.0
          %3216 = vmatpush1.msra.mxu0 %v2228
          %3217 = vmatprep.subr.mxu0 0.0
          %3218 = vmatpush1.msra.mxu0 %v2229
          %3219 = vmatprep.subr.mxu0 0.0
          %3220 = vmatpush1.msra.mxu0 0.0
          %3221 = vmatprep.subr.mxu0 0.0
          %3222 = vmatpush1.msra.mxu0 0.0
          %3223 = vmatprep.subr.mxu0 0.0
          %3224 = vmatpush1.msra.mxu0 0.0
          %3225 = vmatprep.subr.mxu0 0.0
          %3226 = vmatpush1.msra.mxu0 0.0
          %3227 = vmatprep.subr.mxu0 0.0
          %3228 = vmatpush1.msra.mxu0 0.0
          %3229 = vmatprep.subr.mxu0 0.0
          %3230 = vmatpush1.msra.mxu0 0.0
          %3231 = vmatprep.subr.mxu0 0.0
          %3232 = vmatpush1.msra.mxu0 0.0
          %3233 = vmatprep.subr.mxu0 0.0
          %3234 = vmatpush1.msra.mxu0 0.0
          %3235 = vmatprep.subr.mxu0 0.0
          %3236 = vmatpush1.msra.mxu0 0.0
          %3237 = vmatprep.subr.mxu0 0.0
          %3238 = vmatpush1.msra.mxu0 0.0
          %3239 = vmatprep.subr.mxu0 0.0
          %3240 = vmatpush1.msra.mxu0 0.0
          %3241 = vmatprep.subr.mxu0 0.0
          %3242 = vmatpush1.msra.mxu0 0.0
          %3243 = vmatprep.subr.mxu0 0.0
          %3244 = vmatpush1.msra.mxu0 0.0
          %3245 = vmatprep.subr.mxu0 0.0
          %3246 = vmatpush1.msra.mxu0 0.0
          %3247 = vmatprep.subr.mxu0 0.0
          %3248 = vmatpush1.msra.mxu0 0.0
          %3249 = vmatprep.subr.mxu0 0.0
          %3250 = vmatpush1.msra.mxu0 0.0
          %3251 = vmatprep.subr.mxu0 0.0
          %3252 = vmatpush1.msra.mxu0 0.0
          %3253 = vmatprep.subr.mxu0 0.0
          %3254 = vmatpush1.msra.mxu0 0.0
          %3255 = vmatprep.subr.mxu0 0.0
          %3256 = vmatpush1.msra.mxu0 0.0
          %3257 = vmatprep.subr.mxu0 0.0
          %3258 = vmatpush1.msra.mxu0 0.0
          %3259 = vmatprep.subr.mxu0 0.0
          %3260 = vmatpush1.msra.mxu0 0.0
          %3261 = vmatprep.subr.mxu0 0.0
          %3262 = vmatpush1.msra.mxu0 0.0
          %3263 = vmatprep.subr.mxu0 0.0
          %3264 = vmatpush1.msra.mxu0 0.0
          %3265 = vmatprep.subr.mxu0 0.0
          %3266 = vmatpush1.msra.mxu0 0.0
          %3267 = vmatprep.subr.mxu0 0.0
          %3268 = vmatpush1.msra.mxu0 0.0
          %3269 = vmatprep.subr.mxu0 0.0
          %3270 = vmatpush1.msra.mxu0 0.0
          %3271 = vmatprep.subr.mxu0 0.0
          %3272 = vmatpush1.msra.mxu0 0.0
          %3273 = vmatprep.subr.mxu0 0.0
          %3274 = vmatpush1.msra.mxu0 0.0
          %3275 = vmatprep.mubr.f32.mxu0 0.0
          %3276 = vmatmul.mubr.f32.gmra.mrb[0].mxu0 %v3207
          %v3277 = vpop.f32.mrb[0].mxu0
          %v3278 = vadd.f32 0.0, %v3277
          %v3279 = vpop.f32.mrb[0].mxu0
          %3280 = vmatprep.mubr.f32.mxu0 0.0
          %3281 = vmatmul.mubr.f32.gmra.mrb[0].mxu0 %v3209
          %v3282 = vpop.f32.mrb[0].mxu0
          %v3283 = vadd.f32 0.0, %v3282
          %v3284 = vpop.f32.mrb[0].mxu0
          %3285 = vdwg.mxu0
          %3286 = vmatprep.subr.mxu0 0.0
          %3287 = vmatpush1.msra.mxu0 %v2231
          %3288 = vmatprep.subr.mxu0 0.0
          %3289 = vmatpush1.msra.mxu0 %v2232
          %3290 = vmatprep.subr.mxu0 0.0
          %3291 = vmatpush1.msra.mxu0 %v2233
          %3292 = vmatprep.subr.mxu0 0.0
          %3293 = vmatpush1.msra.mxu0 %v2234
          %3294 = vmatprep.subr.mxu0 0.0
          %3295 = vmatpush1.msra.mxu0 0.0
          %3296 = vmatprep.subr.mxu0 0.0
          %3297 = vmatpush1.msra.mxu0 0.0
          %3298 = vmatprep.subr.mxu0 0.0
          %3299 = vmatpush1.msra.mxu0 0.0
          %3300 = vmatprep.subr.mxu0 0.0
          %3301 = vmatpush1.msra.mxu0 0.0
          %3302 = vmatprep.subr.mxu0 0.0
          %3303 = vmatpush1.msra.mxu0 0.0
          %3304 = vmatprep.subr.mxu0 0.0
          %3305 = vmatpush1.msra.mxu0 0.0
          %3306 = vmatprep.subr.mxu0 0.0
          %3307 = vmatpush1.msra.mxu0 0.0
          %3308 = vmatprep.subr.mxu0 0.0
          %3309 = vmatpush1.msra.mxu0 0.0
          %3310 = vmatprep.subr.mxu0 0.0
          %3311 = vmatpush1.msra.mxu0 0.0
          %3312 = vmatprep.subr.mxu0 0.0
          %3313 = vmatpush1.msra.mxu0 0.0
          %3314 = vmatprep.subr.mxu0 0.0
          %3315 = vmatpush1.msra.mxu0 0.0
          %3316 = vmatprep.subr.mxu0 0.0
          %3317 = vmatpush1.msra.mxu0 0.0
          %3318 = vmatprep.subr.mxu0 0.0
          %3319 = vmatpush1.msra.mxu0 0.0
          %3320 = vmatprep.subr.mxu0 0.0
          %3321 = vmatpush1.msra.mxu0 0.0
          %3322 = vmatprep.subr.mxu0 0.0
          %3323 = vmatpush1.msra.mxu0 0.0
          %3324 = vmatprep.subr.mxu0 0.0
          %3325 = vmatpush1.msra.mxu0 0.0
          %3326 = vmatprep.subr.mxu0 0.0
          %3327 = vmatpush1.msra.mxu0 0.0
          %3328 = vmatprep.subr.mxu0 0.0
          %3329 = vmatpush1.msra.mxu0 0.0
          %3330 = vmatprep.subr.mxu0 0.0
          %3331 = vmatpush1.msra.mxu0 0.0
          %3332 = vmatprep.subr.mxu0 0.0
          %3333 = vmatpush1.msra.mxu0 0.0
          %3334 = vmatprep.subr.mxu0 0.0
          %3335 = vmatpush1.msra.mxu0 0.0
          %3336 = vmatprep.subr.mxu0 0.0
          %3337 = vmatpush1.msra.mxu0 0.0
          %3338 = vmatprep.subr.mxu0 0.0
          %3339 = vmatpush1.msra.mxu0 0.0
          %3340 = vmatprep.subr.mxu0 0.0
          %3341 = vmatpush1.msra.mxu0 0.0
          %3342 = vmatprep.subr.mxu0 0.0
          %3343 = vmatpush1.msra.mxu0 0.0
          %3344 = vmatprep.subr.mxu0 0.0
          %3345 = vmatpush1.msra.mxu0 0.0
          %3346 = vmatprep.subr.mxu0 0.0
          %3347 = vmatpush1.msra.mxu0 0.0
          %3348 = vmatprep.subr.mxu0 0.0
          %3349 = vmatpush1.msra.mxu0 0.0
          %3350 = vmatprep.mubr.f32.mxu0 0.0
          %3351 = vmatmul.mubr.f32.gmra.mrb[0].mxu0 %v3207
          %v3352 = vpop.f32.mrb[0].mxu0
          %v3353 = vadd.f32 0.0, %v3352
          %v3354 = vpop.f32.mrb[0].mxu0
          %3355 = vmatprep.mubr.f32.mxu0 0.0
          %3356 = vmatmul.mubr.f32.gmra.mrb[0].mxu0 %v3209
          %v3357 = vpop.f32.mrb[0].mxu0
          %v3358 = vadd.f32 0.0, %v3357
          %v3359 = vpop.f32.mrb[0].mxu0
          %3360 = vdwg.mxu0
          %v3361 = vmul.f32 %v3278, %v3353
          %v3362 = vmul.f32 %v3283, %v3358
          %v3363 = vadd.f32 %v3201, %v3361
          %v3364 = vadd.f32 %v3202, %v3362
          %3365 = vrot.lane.b32.xlu0 %v2207, 32
          %v3366 = vpop.permute.xlu0 %3365
          %3367 = vrot.lane.b32.xlu0 %v2210, 32
          %v3368 = vpop.permute.xlu0 %3367
          %v3369 = vsel %vm2197, %v3366, 0
          %v3371 = vsel %vm2197, %v3368, 0
          %3373 = vmatprep.subr.mxu0 0.0
          %3374 = vmatpush1.msra.mxu0 %v2226
          %3375 = vmatprep.subr.mxu0 0.0
          %3376 = vmatpush1.msra.mxu0 %v2227
          %3377 = vmatprep.subr.mxu0 0.0
          %3378 = vmatpush1.msra.mxu0 %v2228
          %3379 = vmatprep.subr.mxu0 0.0
          %3380 = vmatpush1.msra.mxu0 %v2229
          %3381 = vmatprep.subr.mxu0 0.0
          %3382 = vmatpush1.msra.mxu0 0.0
          %3383 = vmatprep.subr.mxu0 0.0
          %3384 = vmatpush1.msra.mxu0 0.0
          %3385 = vmatprep.subr.mxu0 0.0
          %3386 = vmatpush1.msra.mxu0 0.0
          %3387 = vmatprep.subr.mxu0 0.0
          %3388 = vmatpush1.msra.mxu0 0.0
          %3389 = vmatprep.subr.mxu0 0.0
          %3390 = vmatpush1.msra.mxu0 0.0
          %3391 = vmatprep.subr.mxu0 0.0
          %3392 = vmatpush1.msra.mxu0 0.0
          %3393 = vmatprep.subr.mxu0 0.0
          %3394 = vmatpush1.msra.mxu0 0.0
          %3395 = vmatprep.subr.mxu0 0.0
          %3396 = vmatpush1.msra.mxu0 0.0
          %3397 = vmatprep.subr.mxu0 0.0
          %3398 = vmatpush1.msra.mxu0 0.0
          %3399 = vmatprep.subr.mxu0 0.0
          %3400 = vmatpush1.msra.mxu0 0.0
          %3401 = vmatprep.subr.mxu0 0.0
          %3402 = vmatpush1.msra.mxu0 0.0
          %3403 = vmatprep.subr.mxu0 0.0
          %3404 = vmatpush1.msra.mxu0 0.0
          %3405 = vmatprep.subr.mxu0 0.0
          %3406 = vmatpush1.msra.mxu0 0.0
          %3407 = vmatprep.subr.mxu0 0.0
          %3408 = vmatpush1.msra.mxu0 0.0
          %3409 = vmatprep.subr.mxu0 0.0
          %3410 = vmatpush1.msra.mxu0 0.0
          %3411 = vmatprep.subr.mxu0 0.0
          %3412 = vmatpush1.msra.mxu0 0.0
          %3413 = vmatprep.subr.mxu0 0.0
          %3414 = vmatpush1.msra.mxu0 0.0
          %3415 = vmatprep.subr.mxu0 0.0
          %3416 = vmatpush1.msra.mxu0 0.0
          %3417 = vmatprep.subr.mxu0 0.0
          %3418 = vmatpush1.msra.mxu0 0.0
          %3419 = vmatprep.subr.mxu0 0.0
          %3420 = vmatpush1.msra.mxu0 0.0
          %3421 = vmatprep.subr.mxu0 0.0
          %3422 = vmatpush1.msra.mxu0 0.0
          %3423 = vmatprep.subr.mxu0 0.0
          %3424 = vmatpush1.msra.mxu0 0.0
          %3425 = vmatprep.subr.mxu0 0.0
          %3426 = vmatpush1.msra.mxu0 0.0
          %3427 = vmatprep.subr.mxu0 0.0
          %3428 = vmatpush1.msra.mxu0 0.0
          %3429 = vmatprep.subr.mxu0 0.0
          %3430 = vmatpush1.msra.mxu0 0.0
          %3431 = vmatprep.subr.mxu0 0.0
          %3432 = vmatpush1.msra.mxu0 0.0
          %3433 = vmatprep.subr.mxu0 0.0
          %3434 = vmatpush1.msra.mxu0 0.0
          %3435 = vmatprep.subr.mxu0 0.0
          %3436 = vmatpush1.msra.mxu0 0.0
          %3437 = vmatprep.mubr.f32.mxu0 0.0
          %3438 = vmatmul.mubr.f32.gmra.mrb[0].mxu0 %v3369
          %v3439 = vpop.f32.mrb[0].mxu0
          %v3440 = vadd.f32 0.0, %v3439
          %v3441 = vpop.f32.mrb[0].mxu0
          %3442 = vmatprep.mubr.f32.mxu0 0.0
          %3443 = vmatmul.mubr.f32.gmra.mrb[0].mxu0 %v3371
          %v3444 = vpop.f32.mrb[0].mxu0
          %v3445 = vadd.f32 0.0, %v3444
          %v3446 = vpop.f32.mrb[0].mxu0
          %3447 = vdwg.mxu0
          %3448 = vmatprep.subr.mxu0 0.0
          %3449 = vmatpush1.msra.mxu0 %v2231
          %3450 = vmatprep.subr.mxu0 0.0
          %3451 = vmatpush1.msra.mxu0 %v2232
          %3452 = vmatprep.subr.mxu0 0.0
          %3453 = vmatpush1.msra.mxu0 %v2233
          %3454 = vmatprep.subr.mxu0 0.0
          %3455 = vmatpush1.msra.mxu0 %v2234
          %3456 = vmatprep.subr.mxu0 0.0
          %3457 = vmatpush1.msra.mxu0 0.0
          %3458 = vmatprep.subr.mxu0 0.0
          %3459 = vmatpush1.msra.mxu0 0.0
          %3460 = vmatprep.subr.mxu0 0.0
          %3461 = vmatpush1.msra.mxu0 0.0
          %3462 = vmatprep.subr.mxu0 0.0
          %3463 = vmatpush1.msra.mxu0 0.0
          %3464 = vmatprep.subr.mxu0 0.0
          %3465 = vmatpush1.msra.mxu0 0.0
          %3466 = vmatprep.subr.mxu0 0.0
          %3467 = vmatpush1.msra.mxu0 0.0
          %3468 = vmatprep.subr.mxu0 0.0
          %3469 = vmatpush1.msra.mxu0 0.0
          %3470 = vmatprep.subr.mxu0 0.0
          %3471 = vmatpush1.msra.mxu0 0.0
          %3472 = vmatprep.subr.mxu0 0.0
          %3473 = vmatpush1.msra.mxu0 0.0
          %3474 = vmatprep.subr.mxu0 0.0
          %3475 = vmatpush1.msra.mxu0 0.0
          %3476 = vmatprep.subr.mxu0 0.0
          %3477 = vmatpush1.msra.mxu0 0.0
          %3478 = vmatprep.subr.mxu0 0.0
          %3479 = vmatpush1.msra.mxu0 0.0
          %3480 = vmatprep.subr.mxu0 0.0
          %3481 = vmatpush1.msra.mxu0 0.0
          %3482 = vmatprep.subr.mxu0 0.0
          %3483 = vmatpush1.msra.mxu0 0.0
          %3484 = vmatprep.subr.mxu0 0.0
          %3485 = vmatpush1.msra.mxu0 0.0
          %3486 = vmatprep.subr.mxu0 0.0
          %3487 = vmatpush1.msra.mxu0 0.0
          %3488 = vmatprep.subr.mxu0 0.0
          %3489 = vmatpush1.msra.mxu0 0.0
          %3490 = vmatprep.subr.mxu0 0.0
          %3491 = vmatpush1.msra.mxu0 0.0
          %3492 = vmatprep.subr.mxu0 0.0
          %3493 = vmatpush1.msra.mxu0 0.0
          %3494 = vmatprep.subr.mxu0 0.0
          %3495 = vmatpush1.msra.mxu0 0.0
          %3496 = vmatprep.subr.mxu0 0.0
          %3497 = vmatpush1.msra.mxu0 0.0
          %3498 = vmatprep.subr.mxu0 0.0
          %3499 = vmatpush1.msra.mxu0 0.0
          %3500 = vmatprep.subr.mxu0 0.0
          %3501 = vmatpush1.msra.mxu0 0.0
          %3502 = vmatprep.subr.mxu0 0.0
          %3503 = vmatpush1.msra.mxu0 0.0
          %3504 = vmatprep.subr.mxu0 0.0
          %3505 = vmatpush1.msra.mxu0 0.0
          %3506 = vmatprep.subr.mxu0 0.0
          %3507 = vmatpush1.msra.mxu0 0.0
          %3508 = vmatprep.subr.mxu0 0.0
          %3509 = vmatpush1.msra.mxu0 0.0
          %3510 = vmatprep.subr.mxu0 0.0
          %3511 = vmatpush1.msra.mxu0 0.0
          %3512 = vmatprep.mubr.f32.mxu0 0.0
          %3513 = vmatmul.mubr.f32.gmra.mrb[0].mxu0 %v3369
          %v3514 = vpop.f32.mrb[0].mxu0
          %v3515 = vadd.f32 0.0, %v3514
          %v3516 = vpop.f32.mrb[0].mxu0
          %3517 = vmatprep.mubr.f32.mxu0 0.0
          %3518 = vmatmul.mubr.f32.gmra.mrb[0].mxu0 %v3371
          %v3519 = vpop.f32.mrb[0].mxu0
          %v3520 = vadd.f32 0.0, %v3519
          %v3521 = vpop.f32.mrb[0].mxu0
          %3522 = vdwg.mxu0
          %v3523 = vmul.f32 %v3440, %v3515
          %v3524 = vmul.f32 %v3445, %v3520
          %v3525 = vadd.f32 %v3363, %v3523
          %v3526 = vadd.f32 %v3364, %v3524
          %v3527 = vld [vmem:[%s15] sm:$0x1]
          %v3528 = vld [vmem:[%s16] sm:$0x1]
          %v3530 = vlaneseq
          %v3531 = vshrl.u32 %v3530, 7
          %v3532 = vsub.s32 0, %v3531
          %v3533 = vrot.slane %v3528, %v3532
          %v3535 = vmul.f32 %v3533, %v3525
          %v3536 = vmul.f32 %v3533, %v3526
          %v3538 = vlaneseq
          %v3539 = vshrl.u32 %v3538, 7
          %v3540 = vsub.s32 0, %v3539
          %v3541 = vrot.slane %v3527, %v3540
          %v3543 = vmul.f32 %v3541, %v3535
          %v3544 = vmul.f32 %v3541, %v3536
          %v3545 = vsub.f32 0.0, %v3535
          %v3546 = vsub.f32 0.0, %v3536
          %v3547 = vmul.f32 %v3545, 1.442695
          %v3548 = vpow.pop %v3547
          %v3549 = vmul.f32 %v3546, 1.442695
          %v3550 = vpow.pop %v3549
          %v3551 = vadd.f32 %v3548, 1.0
          %v3552 = vadd.f32 %v3550, 1.0
          %v3553 = vrcp.pop %v3551
          %v3554 = vmul.f32 1.0, %v3553
          %v3555 = vrcp.pop %v3552
          %v3556 = vmul.f32 1.0, %v3555
          %v3557 = vmul.f32 %v3543, %v3554
          %v3558 = vmul.f32 %v3544, %v3556
          %v3559 = vld [vmem:[%s13] sm:$0xff]
          %v3560 = vld [vmem:[%s13 + $0x8] sm:$0xff]
          %v3561 = vld [vmem:[%s13 + $0x10] sm:$0xff]
          %v3562 = vld [vmem:[%s13 + $0x18] sm:$0xff]
          %v3563 = vld [vmem:[%s14] sm:$0x1]
          %v3565 = vlaneseq
          %v3566 = vshrl.u32 %v3565, 7
          %v3567 = vsub.s32 0, %v3566
          %v3568 = vrot.slane %v3563, %v3567
          %v3571 = vsel %vm2197, %v3557, 0
          %v3574 = vsel %vm2197, %v3558, 0
          %3576 = vmatprep.subr.mxu0 0.0
          %3577 = vmatpush1.msra.mxu0 %v3559
          %3578 = vmatprep.subr.mxu0 0.0
          %3579 = vmatpush1.msra.mxu0 %v3560
          %3580 = vmatprep.subr.mxu0 0.0
          %3581 = vmatpush1.msra.mxu0 %v3561
          %3582 = vmatprep.subr.mxu0 0.0
          %3583 = vmatpush1.msra.mxu0 %v3562
          %3584 = vmatprep.subr.mxu0 0.0
          %3585 = vmatpush1.msra.mxu0 0.0
          %3586 = vmatprep.subr.mxu0 0.0
          %3587 = vmatpush1.msra.mxu0 0.0
          %3588 = vmatprep.subr.mxu0 0.0
          %3589 = vmatpush1.msra.mxu0 0.0
          %3590 = vmatprep.subr.mxu0 0.0
          %3591 = vmatpush1.msra.mxu0 0.0
          %3592 = vmatprep.subr.mxu0 0.0
          %3593 = vmatpush1.msra.mxu0 0.0
          %3594 = vmatprep.subr.mxu0 0.0
          %3595 = vmatpush1.msra.mxu0 0.0
          %3596 = vmatprep.subr.mxu0 0.0
          %3597 = vmatpush1.msra.mxu0 0.0
          %3598 = vmatprep.subr.mxu0 0.0
          %3599 = vmatpush1.msra.mxu0 0.0
          %3600 = vmatprep.subr.mxu0 0.0
          %3601 = vmatpush1.msra.mxu0 0.0
          %3602 = vmatprep.subr.mxu0 0.0
          %3603 = vmatpush1.msra.mxu0 0.0
          %3604 = vmatprep.subr.mxu0 0.0
          %3605 = vmatpush1.msra.mxu0 0.0
          %3606 = vmatprep.subr.mxu0 0.0
          %3607 = vmatpush1.msra.mxu0 0.0
          %3608 = vmatprep.subr.mxu0 0.0
          %3609 = vmatpush1.msra.mxu0 0.0
          %3610 = vmatprep.subr.mxu0 0.0
          %3611 = vmatpush1.msra.mxu0 0.0
          %3612 = vmatprep.subr.mxu0 0.0
          %3613 = vmatpush1.msra.mxu0 0.0
          %3614 = vmatprep.subr.mxu0 0.0
          %3615 = vmatpush1.msra.mxu0 0.0
          %3616 = vmatprep.subr.mxu0 0.0
          %3617 = vmatpush1.msra.mxu0 0.0
          %3618 = vmatprep.subr.mxu0 0.0
          %3619 = vmatpush1.msra.mxu0 0.0
          %3620 = vmatprep.subr.mxu0 0.0
          %3621 = vmatpush1.msra.mxu0 0.0
          %3622 = vmatprep.subr.mxu0 0.0
          %3623 = vmatpush1.msra.mxu0 0.0
          %3624 = vmatprep.subr.mxu0 0.0
          %3625 = vmatpush1.msra.mxu0 0.0
          %3626 = vmatprep.subr.mxu0 0.0
          %3627 = vmatpush1.msra.mxu0 0.0
          %3628 = vmatprep.subr.mxu0 0.0
          %3629 = vmatpush1.msra.mxu0 0.0
          %3630 = vmatprep.subr.mxu0 0.0
          %3631 = vmatpush1.msra.mxu0 0.0
          %3632 = vmatprep.subr.mxu0 0.0
          %3633 = vmatpush1.msra.mxu0 0.0
          %3634 = vmatprep.subr.mxu0 0.0
          %3635 = vmatpush1.msra.mxu0 0.0
          %3636 = vmatprep.subr.mxu0 0.0
          %3637 = vmatpush1.msra.mxu0 0.0
          %3638 = vmatprep.subr.mxu0 0.0
          %3639 = vmatpush1.msra.mxu0 0.0
          %3640 = vmatprep.mubr.f32.mxu0 0.0
          %3641 = vmatmul.mubr.f32.gmra.mrb[0].mxu0 %v3571
          %v3642 = vpop.f32.mrb[0].mxu0
          %v3643 = vadd.f32 %v3568, %v3642
          %v3644 = vpop.f32.mrb[0].mxu0
          %3645 = vmatprep.mubr.f32.mxu0 0.0
          %3646 = vmatmul.mubr.f32.gmra.mrb[0].mxu0 %v3574
          %v3647 = vpop.f32.mrb[0].mxu0
          %v3648 = vadd.f32 %v3568, %v3647
          %v3649 = vpop.f32.mrb[0].mxu0
          %3650 = vdwg.mxu0
          %s3651 = scalar_lea.vmem %s15, 1
          %v3652 = vld [vmem:[%s3651] sm:$0x1]
          %s3653 = scalar_lea.vmem %s16, 1
          %v3654 = vld [vmem:[%s3653] sm:$0x1]
          %v3656 = vlaneseq
          %v3657 = vshrl.u32 %v3656, 7
          %v3658 = vsub.s32 0, %v3657
          %v3659 = vrot.slane %v3654, %v3658
          %v3661 = vmul.f32 %v3659, %v3643
          %v3662 = vmul.f32 %v3659, %v3648
          %v3664 = vlaneseq
          %v3665 = vshrl.u32 %v3664, 7
          %v3666 = vsub.s32 0, %v3665
          %v3667 = vrot.slane %v3652, %v3666
          %v3669 = vmul.f32 %v3667, %v3661
          %v3670 = vmul.f32 %v3667, %v3662
          %v3671 = vsub.f32 0.0, %v3661
          %v3672 = vsub.f32 0.0, %v3662
          %v3673 = vmul.f32 %v3671, 1.442695
          %v3674 = vpow.pop %v3673
          %v3675 = vmul.f32 %v3672, 1.442695
          %v3676 = vpow.pop %v3675
          %v3677 = vadd.f32 %v3674, 1.0
          %v3678 = vadd.f32 %v3676, 1.0
          %v3679 = vrcp.pop %v3677
          %v3680 = vmul.f32 1.0, %v3679
          %v3681 = vrcp.pop %v3678
          %v3682 = vmul.f32 1.0, %v3681
          %v3683 = vmul.f32 %v3669, %v3680
          %v3684 = vmul.f32 %v3670, %v3682
          %s3685 = scalar_lea.vmem %s13, 32
          %v3686 = vld [vmem:[%s3685] sm:$0xff]
          %v3687 = vld [vmem:[%s3685 + $0x8] sm:$0xff]
          %v3688 = vld [vmem:[%s3685 + $0x10] sm:$0xff]
          %v3689 = vld [vmem:[%s3685 + $0x18] sm:$0xff]
          %s3690 = scalar_lea.vmem %s14, 1
          %v3691 = vld [vmem:[%s3690] sm:$0x1]
          %v3693 = vlaneseq
          %v3694 = vshrl.u32 %v3693, 7
          %v3695 = vsub.s32 0, %v3694
          %v3696 = vrot.slane %v3691, %v3695
          %v3699 = vsel %vm2197, %v3683, 0
          %v3702 = vsel %vm2197, %v3684, 0
          %3704 = vmatprep.subr.mxu0 0.0
          %3705 = vmatpush1.msra.mxu0 %v3686
          %3706 = vmatprep.subr.mxu0 0.0
          %3707 = vmatpush1.msra.mxu0 %v3687
          %3708 = vmatprep.subr.mxu0 0.0
          %3709 = vmatpush1.msra.mxu0 %v3688
          %3710 = vmatprep.subr.mxu0 0.0
          %3711 = vmatpush1.msra.mxu0 %v3689
          %3712 = vmatprep.subr.mxu0 0.0
          %3713 = vmatpush1.msra.mxu0 0.0
          %3714 = vmatprep.subr.mxu0 0.0
          %3715 = vmatpush1.msra.mxu0 0.0
          %3716 = vmatprep.subr.mxu0 0.0
          %3717 = vmatpush1.msra.mxu0 0.0
          %3718 = vmatprep.subr.mxu0 0.0
          %3719 = vmatpush1.msra.mxu0 0.0
          %3720 = vmatprep.subr.mxu0 0.0
          %3721 = vmatpush1.msra.mxu0 0.0
          %3722 = vmatprep.subr.mxu0 0.0
          %3723 = vmatpush1.msra.mxu0 0.0
          %3724 = vmatprep.subr.mxu0 0.0
          %3725 = vmatpush1.msra.mxu0 0.0
          %3726 = vmatprep.subr.mxu0 0.0
          %3727 = vmatpush1.msra.mxu0 0.0
          %3728 = vmatprep.subr.mxu0 0.0
          %3729 = vmatpush1.msra.mxu0 0.0
          %3730 = vmatprep.subr.mxu0 0.0
          %3731 = vmatpush1.msra.mxu0 0.0
          %3732 = vmatprep.subr.mxu0 0.0
          %3733 = vmatpush1.msra.mxu0 0.0
          %3734 = vmatprep.subr.mxu0 0.0
          %3735 = vmatpush1.msra.mxu0 0.0
          %3736 = vmatprep.subr.mxu0 0.0
          %3737 = vmatpush1.msra.mxu0 0.0
          %3738 = vmatprep.subr.mxu0 0.0
          %3739 = vmatpush1.msra.mxu0 0.0
          %3740 = vmatprep.subr.mxu0 0.0
          %3741 = vmatpush1.msra.mxu0 0.0
          %3742 = vmatprep.subr.mxu0 0.0
          %3743 = vmatpush1.msra.mxu0 0.0
          %3744 = vmatprep.subr.mxu0 0.0
          %3745 = vmatpush1.msra.mxu0 0.0
          %3746 = vmatprep.subr.mxu0 0.0
          %3747 = vmatpush1.msra.mxu0 0.0
          %3748 = vmatprep.subr.mxu0 0.0
          %3749 = vmatpush1.msra.mxu0 0.0
          %3750 = vmatprep.subr.mxu0 0.0
          %3751 = vmatpush1.msra.mxu0 0.0
          %3752 = vmatprep.subr.mxu0 0.0
          %3753 = vmatpush1.msra.mxu0 0.0
          %3754 = vmatprep.subr.mxu0 0.0
          %3755 = vmatpush1.msra.mxu0 0.0
          %3756 = vmatprep.subr.mxu0 0.0
          %3757 = vmatpush1.msra.mxu0 0.0
          %3758 = vmatprep.subr.mxu0 0.0
          %3759 = vmatpush1.msra.mxu0 0.0
          %3760 = vmatprep.subr.mxu0 0.0
          %3761 = vmatpush1.msra.mxu0 0.0
          %3762 = vmatprep.subr.mxu0 0.0
          %3763 = vmatpush1.msra.mxu0 0.0
          %3764 = vmatprep.subr.mxu0 0.0
          %3765 = vmatpush1.msra.mxu0 0.0
          %3766 = vmatprep.subr.mxu0 0.0
          %3767 = vmatpush1.msra.mxu0 0.0
          %3768 = vmatprep.mubr.f32.mxu0 0.0
          %3769 = vmatmul.mubr.f32.gmra.mrb[0].mxu0 %v3699
          %v3770 = vpop.f32.mrb[0].mxu0
          %v3771 = vadd.f32 %v3696, %v3770
          %v3772 = vpop.f32.mrb[0].mxu0
          %3773 = vmatprep.mubr.f32.mxu0 0.0
          %3774 = vmatmul.mubr.f32.gmra.mrb[0].mxu0 %v3702
          %v3775 = vpop.f32.mrb[0].mxu0
          %v3776 = vadd.f32 %v3696, %v3775
          %v3777 = vpop.f32.mrb[0].mxu0
          %3778 = vdwg.mxu0
          %v3779 = vadd.f32 %v3525, %v3771
          %v3780 = vadd.f32 %v3526, %v3776
          %s3781 = scalar_lea.vmem %s15, 2
          %v3782 = vld [vmem:[%s3781] sm:$0x1]
          %s3783 = scalar_lea.vmem %s16, 2
          %v3784 = vld [vmem:[%s3783] sm:$0x1]
          %v3786 = vlaneseq
          %v3787 = vshrl.u32 %v3786, 7
          %v3788 = vsub.s32 0, %v3787
          %v3789 = vrot.slane %v3784, %v3788
          %v3791 = vmul.f32 %v3789, %v3779
          %v3792 = vmul.f32 %v3789, %v3780
          %v3794 = vlaneseq
          %v3795 = vshrl.u32 %v3794, 7
          %v3796 = vsub.s32 0, %v3795
          %v3797 = vrot.slane %v3782, %v3796
          %v3799 = vmul.f32 %v3797, %v3791
          %v3800 = vmul.f32 %v3797, %v3792
          %v3801 = vsub.f32 0.0, %v3791
          %v3802 = vsub.f32 0.0, %v3792
          %v3803 = vmul.f32 %v3801, 1.442695
          %v3804 = vpow.pop %v3803
          %v3805 = vmul.f32 %v3802, 1.442695
          %v3806 = vpow.pop %v3805
          %v3807 = vadd.f32 %v3804, 1.0
          %v3808 = vadd.f32 %v3806, 1.0
          %v3809 = vrcp.pop %v3807
          %v3810 = vmul.f32 1.0, %v3809
          %v3811 = vrcp.pop %v3808
          %v3812 = vmul.f32 1.0, %v3811
          %v3813 = vmul.f32 %v3799, %v3810
          %v3814 = vmul.f32 %v3800, %v3812
          %s3815 = scalar_lea.vmem %s13, 64
          %v3816 = vld [vmem:[%s3815] sm:$0xff]
          %v3817 = vld [vmem:[%s3815 + $0x8] sm:$0xff]
          %v3818 = vld [vmem:[%s3815 + $0x10] sm:$0xff]
          %v3819 = vld [vmem:[%s3815 + $0x18] sm:$0xff]
          %s3820 = scalar_lea.vmem %s14, 2
          %v3821 = vld [vmem:[%s3820] sm:$0x1]
          %v3823 = vlaneseq
          %v3824 = vshrl.u32 %v3823, 7
          %v3825 = vsub.s32 0, %v3824
          %v3826 = vrot.slane %v3821, %v3825
          %v3829 = vsel %vm2197, %v3813, 0
          %v3832 = vsel %vm2197, %v3814, 0
          %3834 = vmatprep.subr.mxu0 0.0
          %3835 = vmatpush1.msra.mxu0 %v3816
          %3836 = vmatprep.subr.mxu0 0.0
          %3837 = vmatpush1.msra.mxu0 %v3817
          %3838 = vmatprep.subr.mxu0 0.0
          %3839 = vmatpush1.msra.mxu0 %v3818
          %3840 = vmatprep.subr.mxu0 0.0
          %3841 = vmatpush1.msra.mxu0 %v3819
          %3842 = vmatprep.subr.mxu0 0.0
          %3843 = vmatpush1.msra.mxu0 0.0
          %3844 = vmatprep.subr.mxu0 0.0
          %3845 = vmatpush1.msra.mxu0 0.0
          %3846 = vmatprep.subr.mxu0 0.0
          %3847 = vmatpush1.msra.mxu0 0.0
          %3848 = vmatprep.subr.mxu0 0.0
          %3849 = vmatpush1.msra.mxu0 0.0
          %3850 = vmatprep.subr.mxu0 0.0
          %3851 = vmatpush1.msra.mxu0 0.0
          %3852 = vmatprep.subr.mxu0 0.0
          %3853 = vmatpush1.msra.mxu0 0.0
          %3854 = vmatprep.subr.mxu0 0.0
          %3855 = vmatpush1.msra.mxu0 0.0
          %3856 = vmatprep.subr.mxu0 0.0
          %3857 = vmatpush1.msra.mxu0 0.0
          %3858 = vmatprep.subr.mxu0 0.0
          %3859 = vmatpush1.msra.mxu0 0.0
          %3860 = vmatprep.subr.mxu0 0.0
          %3861 = vmatpush1.msra.mxu0 0.0
          %3862 = vmatprep.subr.mxu0 0.0
          %3863 = vmatpush1.msra.mxu0 0.0
          %3864 = vmatprep.subr.mxu0 0.0
          %3865 = vmatpush1.msra.mxu0 0.0
          %3866 = vmatprep.subr.mxu0 0.0
          %3867 = vmatpush1.msra.mxu0 0.0
          %3868 = vmatprep.subr.mxu0 0.0
          %3869 = vmatpush1.msra.mxu0 0.0
          %3870 = vmatprep.subr.mxu0 0.0
          %3871 = vmatpush1.msra.mxu0 0.0
          %3872 = vmatprep.subr.mxu0 0.0
          %3873 = vmatpush1.msra.mxu0 0.0
          %3874 = vmatprep.subr.mxu0 0.0
          %3875 = vmatpush1.msra.mxu0 0.0
          %3876 = vmatprep.subr.mxu0 0.0
          %3877 = vmatpush1.msra.mxu0 0.0
          %3878 = vmatprep.subr.mxu0 0.0
          %3879 = vmatpush1.msra.mxu0 0.0
          %3880 = vmatprep.subr.mxu0 0.0
          %3881 = vmatpush1.msra.mxu0 0.0
          %3882 = vmatprep.subr.mxu0 0.0
          %3883 = vmatpush1.msra.mxu0 0.0
          %3884 = vmatprep.subr.mxu0 0.0
          %3885 = vmatpush1.msra.mxu0 0.0
          %3886 = vmatprep.subr.mxu0 0.0
          %3887 = vmatpush1.msra.mxu0 0.0
          %3888 = vmatprep.subr.mxu0 0.0
          %3889 = vmatpush1.msra.mxu0 0.0
          %3890 = vmatprep.subr.mxu0 0.0
          %3891 = vmatpush1.msra.mxu0 0.0
          %3892 = vmatprep.subr.mxu0 0.0
          %3893 = vmatpush1.msra.mxu0 0.0
          %3894 = vmatprep.subr.mxu0 0.0
          %3895 = vmatpush1.msra.mxu0 0.0
          %3896 = vmatprep.subr.mxu0 0.0
          %3897 = vmatpush1.msra.mxu0 0.0
          %3898 = vmatprep.mubr.f32.mxu0 0.0
          %3899 = vmatmul.mubr.f32.gmra.mrb[0].mxu0 %v3829
          %v3900 = vpop.f32.mrb[0].mxu0
          %v3901 = vadd.f32 %v3826, %v3900
          %v3902 = vpop.f32.mrb[0].mxu0
          %3903 = vmatprep.mubr.f32.mxu0 0.0
          %3904 = vmatmul.mubr.f32.gmra.mrb[0].mxu0 %v3832
          %v3905 = vpop.f32.mrb[0].mxu0
          %v3906 = vadd.f32 %v3826, %v3905
          %v3907 = vpop.f32.mrb[0].mxu0
          %3908 = vdwg.mxu0
          %3909 = vst.msk [vmem:[#allocation5] sm:$0xff] %vm2197, %v3901
          %3910 = vst.msk [vmem:[#allocation5 + $0x8] sm:$0xff] %vm2197, %v3906
        $region96: #{tpu_custom_call.1} parent=87 // pred_fallthru
          _
        // Predicated region
        $region97: #{tpu_custom_call.1} parent=87 // pred_check
          %p3911 = pneg %p419
        $region98: #{tpu_custom_call.1} parent=87 // pred_check_branch
          %3913 = sbr.rel (%p3911) target = $region100
        $region99: #{tpu_custom_call.1} parent=87 // pred_region
          %s3915 = ssub.s32 256, 256
          %3916 = vsyncadd [#allocation6], %s3915
          %s3917 = sshll.u32 [#allocation5], 4
          %s3918 = int_to_ptr.vmem [resolvable:$true] %s3917
          %3923 = dma.vmem_to_hbm [thread:$0]  %s3918, 256, %s17, [#allocation6], 128, 128, 8
        $region100: #{tpu_custom_call.1} parent=87 // pred_fallthru
          _
        // Predicated region
        $region101: #{tpu_custom_call.1} parent=87 // pred_check
          %p3924 = pneg %p419
        $region102: #{tpu_custom_call.1} parent=87 // pred_check_branch
          %3926 = sbr.rel (%p3924) target = $region104
        $region103: #{tpu_custom_call.1} parent=87 // pred_region
          %3927 = dma.done [#allocation6], 256
        $region104: #{tpu_custom_call.1} parent=87 // pred_fallthru
          _
      $region88: #{tpu_custom_call.1} parent=5 // pred_fallthru
        _
      %p3928 = scmp.le.s32.totalorder 2, %s24
      // Predicated region
      $region105: #{tpu_custom_call.1} parent=5 // pred_check
        %p3929 = pneg %p3928
      $region106: #{tpu_custom_call.1} parent=5 // pred_check_branch
        %3931 = sbr.rel (%p3929) target = $region108
      $region107: #{tpu_custom_call.1} parent=5 // pred_region
        %s3932 = ssub.s32 %s24, 2
      $region108: #{tpu_custom_call.1} parent=5 // pred_fallthru
        _
    $region6: #{tpu_custom_call.1} parent=1 // loop_footer
      %s28 = sadd.s32 1, %s24
    $region7: #{tpu_custom_call.1} parent=1 // loop_footer_branch
      %23 = sbr.rel target = $region3
    $region8: #{tpu_custom_call.1} parent=1 // loop_exit
      _
    %3933 = vsyncpa [#allocation6], 1
    %s3934 = scalar_lea.sflag [#allocation6], 1
    %3935 = vsyncpa %s3934, 1

</llo_original>
